<compile_context>
chip_gen: v5e
topology: v5e:2x2
jax: 0.10.0
libtpu: 0.0.40
codegen_flags: <defaults>
</compile_context>

<pallas_src>
import jax
import jax.numpy as jnp
from jax import lax
from jax.experimental import pallas as pl
from jax.experimental.pallas import tpu as pltpu

# Order in which the prepared (kernel-layout) parameters are passed.
_PARAM_ORDER = ("w1p", "b1p", "w2p", "b2p", "wf1k", "bf1", "wf2", "bf2",
                "wf3", "bf3")


# ---------------------------------------------------------------------------
# The fused kernel: whole Net forward for one batch tile, entirely in VMEM.
# ---------------------------------------------------------------------------
def _net_kernel(xx_ref, w1p_ref, b1p_ref, w2p_ref, b2p_ref,
                wf1k_ref, bf1_ref, wf2_ref, bf2_ref, wf3_ref, bf3_ref,
                o_ref):
    f32 = jnp.float32
    bf16 = jnp.bfloat16
    tb = xx_ref.shape[0]

    # ---- conv1: ONE matmul, K = 90 (5 dy x 6 kx x 3 c), column-pair output --
    # xx_ref: (tb, 28, 16, 90); sublane u: 0..6 even pooled cols, 8..14 odd.
    # output lane = dw*16 + co  (dw = which column of the 2x2-pool pair).
    acc1 = jnp.dot(xx_ref[...].reshape(tb * 28 * 16, 90), w1p_ref[...],
                   preferred_element_type=f32)                  # (tb*448, 32)
    y1 = jnp.maximum(acc1 + b1p_ref[...], 0.0).astype(bf16)
    y1 = y1.reshape(tb, 28, 16, 32)

    # ---- 2x2 max-pool #1: W-pool = lane-half max, H-pool = leading-dim max.
    # (On v5e bf16 VALU maxes are emulated; correct, slightly slower there.)
    yw = jnp.maximum(y1[..., 0:16], y1[..., 16:32])             # (tb, 28, 16, 16)
    yh = yw.reshape(tb, 14, 2, 16, 16)
    p1 = jnp.maximum(yh[:, :, 0], yh[:, :, 1])                  # (tb, 14, 16, 16)
    # p1 sublane u: 0..6 = even pooled cols (0,2,..,12); 8..14 = odd (1,..,13).
    # Zero-pad sublanes 16..23 so the shifted window slices below stay in-bounds
    # (valid outputs never read padding / garbage sublanes -- see weight prep).
    p1x = jnp.concatenate([p1, jnp.zeros((tb, 14, 8, 16), bf16)], axis=2)

    # ---- conv2 window: 6 sublane-shifted views lane-concatenated (K = 96) ---
    pieces = ([p1x[:, :, s:s + 8, :] for s in range(3)]            # even cols
              + [p1x[:, :, 8 + s:16 + s, :] for s in range(3)])    # odd cols
    win = jnp.concatenate(pieces, axis=-1)                      # (tb, 14, 8, 96)

    # ---- conv2: 5 matmuls (one per dy), K=96, column-pair output (64 lanes) -
    acc2 = jnp.dot(win[:, 0:10].reshape(tb * 10 * 8, 96), w2p_ref[0],
                   preferred_element_type=f32)
    for dy in range(1, 5):
        acc2 = acc2 + jnp.dot(win[:, dy:dy + 10].reshape(tb * 10 * 8, 96),
                              w2p_ref[dy], preferred_element_type=f32)
    y2 = jnp.maximum(acc2 + b2p_ref[...], 0.0).astype(bf16)
    y2 = y2.reshape(tb, 10, 8, 64)

    # ---- 2x2 max-pool #2: same extract-free structure as pool #1 -----------
    zw = jnp.maximum(y2[..., 0:32], y2[..., 32:64])             # (tb, 10, 8, 32)
    zh = zw.reshape(tb, 5, 2, 8, 32)
    p2 = jnp.maximum(zh[:, :, 0], zh[:, :, 1])                  # (tb, 5, 8, 32)
    # p2[b, i, j, c]: valid pooled positions i, j in 0..4 (j = 5..7 garbage,
    # never read below).

    # ---- fc1: lane-concat the 25 valid pooled positions -> ONE K=800 matmul -
    flat = jnp.concatenate(
        [p2[:, i, j, :] for i in range(5) for j in range(5)], axis=-1)  # (tb, 800)
    h1 = jnp.dot(flat, wf1k_ref[...], preferred_element_type=f32)
    h1 = jnp.maximum(h1 + bf1_ref[...], 0.0).astype(bf16)       # (tb, 128) dense

    # ---- fc2 + ReLU, fc3 (all 128-lane dense; output sliced in wrapper) ----
    h2 = jnp.dot(h1, wf2_ref[...], preferred_element_type=f32)
    h2 = jnp.maximum(h2 + bf2_ref[...], 0.0).astype(bf16)       # (tb, 128)
    out = jnp.dot(h2, wf3_ref[...], preferred_element_type=f32) + bf3_ref[...]
    o_ref[...] = out.astype(o_ref.dtype)                        # (tb, 128)


# ---------------------------------------------------------------------------
# One-time parameter re-layout (PyTorch layout -> kernel layout)
# ---------------------------------------------------------------------------
def prepare_params(tp):
    """Convert torch-layout params (conv OIHW, fc (out,in), fc1 rows in NCHW
    flatten order) into the kernel's VMEM-resident bf16 layout.  One-time cost."""
    f32, bf16 = jnp.float32, jnp.bfloat16

    # conv1 -> paired, dy-fused layout (90, 32):
    #   row = dy*18 + k*3 + c  (lane holds x[.., oh+dy, 2*jp + k, c])
    #   col = dw*16 + co       (output column 2*jp + dw); tap kw = k - dw.
    w1 = tp["conv1_w"].astype(f32)                  # (co=16, ci=3, kh=5, kw=5)
    w1p = jnp.zeros((5, 6, 3, 2, 16), f32)          # (dy, k, c, dw, co)
    for dw in range(2):
        for kw in range(5):
            w1p = w1p.at[:, kw + dw, :, dw, :].set(
                jnp.transpose(w1[:, :, :, kw], (2, 1, 0)))      # (dy, c, co)
    w1p = w1p.reshape(90, 32).astype(bf16)
    b1p = jnp.concatenate([tp["conv1_b"], tp["conv1_b"]]).astype(f32).reshape(1, 32)

    # conv2 -> per-dy paired layout (5, 96, 64):
    #   row = (3g + s)*16 + ci  (lane holds pooled column 2*jp + (2s + g))
    #   col = dw*32 + co        (output column 2*jp + dw); tap dx = 2s + g - dw.
    w2 = tp["conv2_w"].astype(f32)                  # (co=32, ci=16, kh=5, kw=5)
    w2p = jnp.zeros((5, 2, 3, 16, 2, 32), f32)      # (dy, g, s, ci, dw, co)
    for dw in range(2):
        for m in range(6):
            dx = m - dw
            if 0 <= dx <= 4:
                w2p = w2p.at[:, m % 2, m // 2, :, dw, :].set(
                    jnp.transpose(w2[:, :, :, dx], (2, 1, 0)))  # (dy, ci, co)
    w2p = w2p.reshape(5, 96, 64).astype(bf16)
    b2p = jnp.concatenate([tp["conv2_b"], tp["conv2_b"]]).astype(f32).reshape(1, 64)

    # fc1 rows re-ordered from torch's (c, h, w) flatten to the kernel's
    # (h, w, c) flatten; outputs padded 120 -> 128 lanes (dense vregs).
    wf1 = tp["fc1_w"].astype(f32).reshape(120, 32, 5, 5)        # (n, c, i, j)
    wf1k = jnp.transpose(wf1, (2, 3, 1, 0))                     # (i, j, c, n)
    wf1k = jnp.pad(wf1k, ((0, 0), (0, 0), (0, 0), (0, 8)))      # (5, 5, 32, 128)
    wf1k = wf1k.reshape(800, 128).astype(bf16)
    bf1 = jnp.pad(tp["fc1_b"].astype(f32), (0, 8)).reshape(1, 128)

    # fc2 / fc3 padded to dense 128x128 (zero rows/cols keep math exact).
    wf2 = jnp.pad(jnp.transpose(tp["fc2_w"].astype(f32)),
                  ((0, 8), (0, 44))).astype(bf16)               # (128, 128)
    bf2 = jnp.pad(tp["fc2_b"].astype(f32), (0, 44)).reshape(1, 128)
    wf3 = jnp.pad(jnp.transpose(tp["fc3_w"].astype(f32)),
                  ((0, 44), (0, 118))).astype(bf16)             # (128, 128)
    bf3 = jnp.pad(tp["fc3_b"].astype(f32), (0, 118)).reshape(1, 128)

    return {"w1p": w1p, "b1p": b1p, "w2p": w2p, "b2p": b2p, "wf1k": wf1k,
            "bf1": bf1, "wf2": wf2, "bf2": bf2, "wf3": wf3, "bf3": bf3}


# ---------------------------------------------------------------------------
# Wrapper: layout plumbing + the single pallas_call
# ---------------------------------------------------------------------------
def _auto_tiling():
    """Pick (batch tile, vmem limit) per TPU generation (review sizing)."""
    try:
        cap = pltpu.get_tpu_info().vmem_capacity_bytes
    except Exception:
        cap = 64 * 1024 * 1024
    if cap >= 100 * 1024 * 1024:          # v5e / v6e: 128 MiB physical VMEM
        return 64, 96 * 1024 * 1024
    if cap >= 48 * 1024 * 1024:           # v7x: 64 MiB physical VMEM
        return 32, 48 * 1024 * 1024
    return 8, 24 * 1024 * 1024            # conservative fallback


def _resident_spec(w):
    # Full-array block + constant index map: stays in VMEM for the whole call.
    zeros = (0,) * w.ndim
    return pl.BlockSpec(w.shape, lambda i: zeros)


def _pack_input(x_nchw, bp):
    """NCHW float -> (bp, 28, 16, 90) bf16 packed conv1 windows.
    Sublane u: 0..6 even pooled cols (jp = 2u), 7 pad, 8..14 odd pooled cols
    (jp = 2(u-8)+1), 15 pad.  Lane dy*18 + k*3 + c holds x[b, oh+dy, 2*jp+k, c].
    (Done once by XLA outside the kernel; ~0.2 MB/image -- minor.)"""
    x = jnp.transpose(x_nchw, (0, 2, 3, 1)).astype(jnp.float32)   # (B, 32, 32, 3)
    B = x.shape[0]
    if bp != B:
        x = jnp.pad(x, ((0, bp - B), (0, 0), (0, 0), (0, 0)))
    zcol = jnp.zeros((bp, 28, 1, 3), jnp.float32)
    lanes = []
    for dy in range(5):
        for k in range(6):
            even = x[:, dy:dy + 28, k:k + 25:4, :]        # cols k, k+4, ..., k+24
            odd = x[:, dy:dy + 28, k + 2:k + 27:4, :]     # cols k+2, ..., k+26
            lanes.append(jnp.concatenate([even, zcol, odd, zcol], axis=2))
    return jnp.concatenate(lanes, axis=-1).astype(jnp.bfloat16)   # (bp, 28, 16, 90)


def net_forward(x_nchw, kp, *, block_b=None):
    """Forward pass of Net.  x_nchw: (B, 3, 32, 32) float32 -> (B, 10) float32."""
    B = x_nchw.shape[0]
    auto_tb, vmem_limit = _auto_tiling()
    tb = auto_tb if block_b is None else block_b
    tb = max(1, min(tb, B))
    if tb < B:
        tb = max(8, (tb // 8) * 8)        # multi-step grids use 8-aligned tiles
    bp = ((B + tb - 1) // tb) * tb
    grid = (bp // tb,)
    # NOTE: on v7x a batch >= 2*tb gives >= 2 grid steps so the "parallel"
    # batch axis is sharded across both TensorCores.

    xx = _pack_input(x_nchw, bp)
    weights = [kp[name] for name in _PARAM_ORDER]

    in_specs = [pl.BlockSpec((tb, 28, 16, 90), lambda i: (i, 0, 0, 0))]
    in_specs += [_resident_spec(w) for w in weights]

    out = pl.pallas_call(
        _net_kernel,
        out_shape=jax.ShapeDtypeStruct((bp, 128), jnp.float32),
        grid=grid,
        in_specs=in_specs,
        out_specs=pl.BlockSpec((tb, 128), lambda i: (i, 0)),
        compiler_params=pltpu.CompilerParams(
            dimension_semantics=("parallel",),
            vmem_limit_bytes=vmem_limit),
    )(xx, *weights)
    return out[:B, :10]


# ---------------------------------------------------------------------------
# Deterministic torch-style init and a pure-JAX reference for validation
# ---------------------------------------------------------------------------
def init_params(key):
    def uni(k, shape, fan_in):
        b = 1.0 / jnp.sqrt(jnp.float32(fan_in))
        return jax.random.uniform(k, shape, jnp.float32, -b, b)

    ks = jax.random.split(key, 10)
    return {
        "conv1_w": uni(ks[0], (16, 3, 5, 5), 3 * 5 * 5),
        "conv1_b": uni(ks[1], (16,), 3 * 5 * 5),
        "conv2_w": uni(ks[2], (32, 16, 5, 5), 16 * 5 * 5),
        "conv2_b": uni(ks[3], (32,), 16 * 5 * 5),
        "fc1_w": uni(ks[4], (120, 800), 800), "fc1_b": uni(ks[5], (120,), 800),
        "fc2_w": uni(ks[6], (84, 120), 120), "fc2_b": uni(ks[7], (84,), 120),
        "fc3_w": uni(ks[8], (10, 84), 84), "fc3_b": uni(ks[9], (10,), 84),
    }


def net_forward_ref(x_nchw, tp):
    dn = ("NCHW", "OIHW", "NCHW")
    y = lax.conv_general_dilated(x_nchw, tp["conv1_w"], (1, 1), "VALID",
                                 dimension_numbers=dn)
    y = jnp.maximum(y + tp["conv1_b"].reshape(1, -1, 1, 1), 0.0)
    y = lax.reduce_window(y, -jnp.inf, lax.max, (1, 1, 2, 2), (1, 1, 2, 2), "VALID")
    y = lax.conv_general_dilated(y, tp["conv2_w"], (1, 1), "VALID",
                                 dimension_numbers=dn)
    y = jnp.maximum(y + tp["conv2_b"].reshape(1, -1, 1, 1), 0.0)
    y = lax.reduce_window(y, -jnp.inf, lax.max, (1, 1, 2, 2), (1, 1, 2, 2), "VALID")
    y = y.reshape(y.shape[0], -1)
    y = jnp.maximum(y @ tp["fc1_w"].T + tp["fc1_b"], 0.0)
    y = jnp.maximum(y @ tp["fc2_w"].T + tp["fc2_b"], 0.0)
    return y @ tp["fc3_w"].T + tp["fc3_b"]


if __name__ == "__main__":
    key = jax.random.PRNGKey(0)
    kx, kparam = jax.random.split(key)
    # 32x32 spatial input so the flatten matches 32*5*5 = 800 (CIFAR-10 shape).
    x = jax.random.normal(kx, (2, 3, 32, 32), jnp.float32)
    torch_params = init_params(kparam)
    kernel_params = prepare_params(torch_params)

    fwd = jax.jit(net_forward)
    out = jax.block_until_ready(fwd(x, kernel_params))
    assert out.shape == (2, 10) and out.dtype == jnp.float32

    ref = net_forward_ref(x, torch_params)
    err = float(jnp.max(jnp.abs(out - ref)))
    assert err < 3e-2, f"kernel/reference mismatch: max abs err = {err}"

    # Second check: batch padding + multi-step grid path (grid = 2).
    kx2 = jax.random.fold_in(kx, 1)
    x2 = jax.random.normal(kx2, (9, 3, 32, 32), jnp.float32)
    fwd2 = jax.jit(net_forward, static_argnames=("block_b",))
    out2 = jax.block_until_ready(fwd2(x2, kernel_params, block_b=4))
    err2 = float(jnp.max(jnp.abs(out2 - net_forward_ref(x2, torch_params))))
    assert out2.shape == (9, 10) and err2 < 3e-2, f"grid-path mismatch: {err2}"

    print("KERNEL_OK")
</pallas_src>

<mosaic_0001>
module attributes {stable_mosaic.version = 11 : i64} {
  func.func @_net_kernel(%arg0: i32, %arg1: memref<2x28x16x90xbf16, #tpu.memory_space<vmem>>, %arg2: memref<90x32xbf16, #tpu.memory_space<vmem>>, %arg3: memref<1x32xf32, #tpu.memory_space<vmem>>, %arg4: memref<5x96x64xbf16, #tpu.memory_space<vmem>>, %arg5: memref<1x64xf32, #tpu.memory_space<vmem>>, %arg6: memref<800x128xbf16, #tpu.memory_space<vmem>>, %arg7: memref<1x128xf32, #tpu.memory_space<vmem>>, %arg8: memref<128x128xbf16, #tpu.memory_space<vmem>>, %arg9: memref<1x128xf32, #tpu.memory_space<vmem>>, %arg10: memref<128x128xbf16, #tpu.memory_space<vmem>>, %arg11: memref<1x128xf32, #tpu.memory_space<vmem>>, %arg12: memref<2x128xf32, #tpu.memory_space<vmem>>) attributes {dimension_semantics = [#tpu.dimension_semantics<parallel>], iteration_bounds = array<i64: 1>, scalar_prefetch = 0 : i64, scratch_operands = 0 : i64, tpu.core_type = #tpu.core_type<tc>, window_params = [{transform_indices = @transform_0, window_bounds = array<i64: 2, 28, 16, 90>}, {pipeline_mode = #tpu.pipeline_mode<synchronous>, transform_indices = @transform_1, window_bounds = array<i64: 90, 32>}, {pipeline_mode = #tpu.pipeline_mode<synchronous>, transform_indices = @transform_2, window_bounds = array<i64: 1, 32>}, {pipeline_mode = #tpu.pipeline_mode<synchronous>, transform_indices = @transform_3, window_bounds = array<i64: 5, 96, 64>}, {pipeline_mode = #tpu.pipeline_mode<synchronous>, transform_indices = @transform_4, window_bounds = array<i64: 1, 64>}, {pipeline_mode = #tpu.pipeline_mode<synchronous>, transform_indices = @transform_5, window_bounds = array<i64: 800, 128>}, {pipeline_mode = #tpu.pipeline_mode<synchronous>, transform_indices = @transform_6, window_bounds = array<i64: 1, 128>}, {pipeline_mode = #tpu.pipeline_mode<synchronous>, transform_indices = @transform_7, window_bounds = array<i64: 128, 128>}, {pipeline_mode = #tpu.pipeline_mode<synchronous>, transform_indices = @transform_8, window_bounds = array<i64: 1, 128>}, {pipeline_mode = #tpu.pipeline_mode<synchronous>, transform_indices = @transform_9, window_bounds = array<i64: 128, 128>}, {pipeline_mode = #tpu.pipeline_mode<synchronous>, transform_indices = @transform_10, window_bounds = array<i64: 1, 128>}, {transform_indices = @transform_11, window_bounds = array<i64: 2, 128>}]} {
    %c0 = arith.constant 0 : index
    %c0_0 = arith.constant 0 : index
    %c0_1 = arith.constant 0 : index
    %c0_2 = arith.constant 0 : index
    %0 = vector.load %arg1[%c0, %c0_0, %c0_1, %c0_2] : memref<2x28x16x90xbf16, #tpu.memory_space<vmem>>, vector<2x28x16x90xbf16>
    %1 = vector.shape_cast %0 : vector<2x28x16x90xbf16> to vector<896x90xbf16>
    %c0_3 = arith.constant 0 : index
    %c0_4 = arith.constant 0 : index
    %2 = vector.load %arg2[%c0_3, %c0_4] : memref<90x32xbf16, #tpu.memory_space<vmem>>, vector<90x32xbf16>
    %cst = arith.constant dense<0.000000e+00> : vector<896x32xf32>
    %3 = tpu.matmul %1, %2, %cst {dimension_numbers = #tpu.dot_dimension_numbers<[1], [0], [0], [1], [0, 0, 1, 1], [], []>} : vector<896x90xbf16>, vector<90x32xbf16>, vector<896x32xf32> -> vector<896x32xf32>
    %c0_5 = arith.constant 0 : index
    %c0_6 = arith.constant 0 : index
    %4 = vector.load %arg3[%c0_5, %c0_6] : memref<1x32xf32, #tpu.memory_space<vmem>>, vector<1x32xf32>
    %5 = vector.broadcast %4 : vector<1x32xf32> to vector<896x32xf32>
    %6 = arith.addf %3, %5 : vector<896x32xf32>
    %cst_7 = arith.constant 0.000000e+00 : f32
    %7 = vector.broadcast %cst_7 : f32 to vector<896x32xf32>
    %8 = arith.maximumf %6, %7 : vector<896x32xf32>
    %9 = arith.truncf %8 : vector<896x32xf32> to vector<896x32xbf16>
    %10 = vector.shape_cast %9 : vector<896x32xbf16> to vector<2x28x16x32xbf16>
    %11 = vector.extract_strided_slice %10 {offsets = [0, 0, 0, 0], sizes = [2, 28, 16, 16], strides = [1, 1, 1, 1]} : vector<2x28x16x32xbf16> to vector<2x28x16x16xbf16>
    %12 = vector.extract_strided_slice %10 {offsets = [0, 0, 0, 16], sizes = [2, 28, 16, 16], strides = [1, 1, 1, 1]} : vector<2x28x16x32xbf16> to vector<2x28x16x16xbf16>
    %13 = arith.maximumf %11, %12 : vector<2x28x16x16xbf16>
    %14 = vector.shape_cast %13 : vector<2x28x16x16xbf16> to vector<2x14x2x16x16xbf16>
    %15 = vector.extract_strided_slice %14 {offsets = [0, 0, 0, 0, 0], sizes = [2, 14, 1, 16, 16], strides = [1, 1, 1, 1, 1]} : vector<2x14x2x16x16xbf16> to vector<2x14x1x16x16xbf16>
    %16 = vector.shape_cast %15 : vector<2x14x1x16x16xbf16> to vector<2x14x16x16xbf16>
    %17 = vector.extract_strided_slice %14 {offsets = [0, 0, 1, 0, 0], sizes = [2, 14, 1, 16, 16], strides = [1, 1, 1, 1, 1]} : vector<2x14x2x16x16xbf16> to vector<2x14x1x16x16xbf16>
    %18 = vector.shape_cast %17 : vector<2x14x1x16x16xbf16> to vector<2x14x16x16xbf16>
    %19 = arith.maximumf %16, %18 : vector<2x14x16x16xbf16>
    %cst_8 = arith.constant 0.000000e+00 : bf16
    %20 = vector.broadcast %cst_8 : bf16 to vector<2x14x8x16xbf16>
    %21 = tpu.concatenate %19, %20 in 2 : vector<2x14x16x16xbf16>, vector<2x14x8x16xbf16> -> vector<2x14x24x16xbf16>
    %22 = vector.extract_strided_slice %21 {offsets = [0, 0, 0, 0], sizes = [2, 14, 8, 16], strides = [1, 1, 1, 1]} : vector<2x14x24x16xbf16> to vector<2x14x8x16xbf16>
    %23 = vector.extract_strided_slice %21 {offsets = [0, 0, 1, 0], sizes = [2, 14, 8, 16], strides = [1, 1, 1, 1]} : vector<2x14x24x16xbf16> to vector<2x14x8x16xbf16>
    %24 = vector.extract_strided_slice %21 {offsets = [0, 0, 2, 0], sizes = [2, 14, 8, 16], strides = [1, 1, 1, 1]} : vector<2x14x24x16xbf16> to vector<2x14x8x16xbf16>
    %25 = vector.extract_strided_slice %21 {offsets = [0, 0, 8, 0], sizes = [2, 14, 8, 16], strides = [1, 1, 1, 1]} : vector<2x14x24x16xbf16> to vector<2x14x8x16xbf16>
    %26 = vector.extract_strided_slice %21 {offsets = [0, 0, 9, 0], sizes = [2, 14, 8, 16], strides = [1, 1, 1, 1]} : vector<2x14x24x16xbf16> to vector<2x14x8x16xbf16>
    %27 = vector.extract_strided_slice %21 {offsets = [0, 0, 10, 0], sizes = [2, 14, 8, 16], strides = [1, 1, 1, 1]} : vector<2x14x24x16xbf16> to vector<2x14x8x16xbf16>
    %28 = tpu.concatenate %22, %23, %24, %25, %26, %27 in 3 : vector<2x14x8x16xbf16>, vector<2x14x8x16xbf16>, vector<2x14x8x16xbf16>, vector<2x14x8x16xbf16>, vector<2x14x8x16xbf16>, vector<2x14x8x16xbf16> -> vector<2x14x8x96xbf16>
    %29 = vector.extract_strided_slice %28 {offsets = [0, 0, 0, 0], sizes = [2, 10, 8, 96], strides = [1, 1, 1, 1]} : vector<2x14x8x96xbf16> to vector<2x10x8x96xbf16>
    %30 = vector.shape_cast %29 : vector<2x10x8x96xbf16> to vector<160x96xbf16>
    %c0_9 = arith.constant 0 : index
    %c0_10 = arith.constant 0 : index
    %c0_11 = arith.constant 0 : index
    %31 = vector.load %arg4[%c0_9, %c0_10, %c0_11] : memref<5x96x64xbf16, #tpu.memory_space<vmem>>, vector<1x96x64xbf16>
    %32 = vector.shape_cast %31 : vector<1x96x64xbf16> to vector<96x64xbf16>
    %cst_12 = arith.constant dense<0.000000e+00> : vector<160x64xf32>
    %33 = tpu.matmul %30, %32, %cst_12 {dimension_numbers = #tpu.dot_dimension_numbers<[1], [0], [0], [1], [0, 0, 1, 1], [], []>} : vector<160x96xbf16>, vector<96x64xbf16>, vector<160x64xf32> -> vector<160x64xf32>
    %34 = vector.extract_strided_slice %28 {offsets = [0, 1, 0, 0], sizes = [2, 10, 8, 96], strides = [1, 1, 1, 1]} : vector<2x14x8x96xbf16> to vector<2x10x8x96xbf16>
    %35 = vector.shape_cast %34 : vector<2x10x8x96xbf16> to vector<160x96xbf16>
    %c1 = arith.constant 1 : index
    %c0_13 = arith.constant 0 : index
    %c0_14 = arith.constant 0 : index
    %36 = vector.load %arg4[%c1, %c0_13, %c0_14] : memref<5x96x64xbf16, #tpu.memory_space<vmem>>, vector<1x96x64xbf16>
    %37 = vector.shape_cast %36 : vector<1x96x64xbf16> to vector<96x64xbf16>
    %cst_15 = arith.constant dense<0.000000e+00> : vector<160x64xf32>
    %38 = tpu.matmul %35, %37, %cst_15 {dimension_numbers = #tpu.dot_dimension_numbers<[1], [0], [0], [1], [0, 0, 1, 1], [], []>} : vector<160x96xbf16>, vector<96x64xbf16>, vector<160x64xf32> -> vector<160x64xf32>
    %39 = arith.addf %33, %38 : vector<160x64xf32>
    %40 = vector.extract_strided_slice %28 {offsets = [0, 2, 0, 0], sizes = [2, 10, 8, 96], strides = [1, 1, 1, 1]} : vector<2x14x8x96xbf16> to vector<2x10x8x96xbf16>
    %41 = vector.shape_cast %40 : vector<2x10x8x96xbf16> to vector<160x96xbf16>
    %c2 = arith.constant 2 : index
    %c0_16 = arith.constant 0 : index
    %c0_17 = arith.constant 0 : index
    %42 = vector.load %arg4[%c2, %c0_16, %c0_17] : memref<5x96x64xbf16, #tpu.memory_space<vmem>>, vector<1x96x64xbf16>
    %43 = vector.shape_cast %42 : vector<1x96x64xbf16> to vector<96x64xbf16>
    %cst_18 = arith.constant dense<0.000000e+00> : vector<160x64xf32>
    %44 = tpu.matmul %41, %43, %cst_18 {dimension_numbers = #tpu.dot_dimension_numbers<[1], [0], [0], [1], [0, 0, 1, 1], [], []>} : vector<160x96xbf16>, vector<96x64xbf16>, vector<160x64xf32> -> vector<160x64xf32>
    %45 = arith.addf %39, %44 : vector<160x64xf32>
    %46 = vector.extract_strided_slice %28 {offsets = [0, 3, 0, 0], sizes = [2, 10, 8, 96], strides = [1, 1, 1, 1]} : vector<2x14x8x96xbf16> to vector<2x10x8x96xbf16>
    %47 = vector.shape_cast %46 : vector<2x10x8x96xbf16> to vector<160x96xbf16>
    %c3 = arith.constant 3 : index
    %c0_19 = arith.constant 0 : index
    %c0_20 = arith.constant 0 : index
    %48 = vector.load %arg4[%c3, %c0_19, %c0_20] : memref<5x96x64xbf16, #tpu.memory_space<vmem>>, vector<1x96x64xbf16>
    %49 = vector.shape_cast %48 : vector<1x96x64xbf16> to vector<96x64xbf16>
    %cst_21 = arith.constant dense<0.000000e+00> : vector<160x64xf32>
    %50 = tpu.matmul %47, %49, %cst_21 {dimension_numbers = #tpu.dot_dimension_numbers<[1], [0], [0], [1], [0, 0, 1, 1], [], []>} : vector<160x96xbf16>, vector<96x64xbf16>, vector<160x64xf32> -> vector<160x64xf32>
    %51 = arith.addf %45, %50 : vector<160x64xf32>
    %52 = vector.extract_strided_slice %28 {offsets = [0, 4, 0, 0], sizes = [2, 10, 8, 96], strides = [1, 1, 1, 1]} : vector<2x14x8x96xbf16> to vector<2x10x8x96xbf16>
    %53 = vector.shape_cast %52 : vector<2x10x8x96xbf16> to vector<160x96xbf16>
    %c4 = arith.constant 4 : index
    %c0_22 = arith.constant 0 : index
    %c0_23 = arith.constant 0 : index
    %54 = vector.load %arg4[%c4, %c0_22, %c0_23] : memref<5x96x64xbf16, #tpu.memory_space<vmem>>, vector<1x96x64xbf16>
    %55 = vector.shape_cast %54 : vector<1x96x64xbf16> to vector<96x64xbf16>
    %cst_24 = arith.constant dense<0.000000e+00> : vector<160x64xf32>
    %56 = tpu.matmul %53, %55, %cst_24 {dimension_numbers = #tpu.dot_dimension_numbers<[1], [0], [0], [1], [0, 0, 1, 1], [], []>} : vector<160x96xbf16>, vector<96x64xbf16>, vector<160x64xf32> -> vector<160x64xf32>
    %57 = arith.addf %51, %56 : vector<160x64xf32>
    %c0_25 = arith.constant 0 : index
    %c0_26 = arith.constant 0 : index
    %58 = vector.load %arg5[%c0_25, %c0_26] : memref<1x64xf32, #tpu.memory_space<vmem>>, vector<1x64xf32>
    %59 = vector.broadcast %58 : vector<1x64xf32> to vector<160x64xf32>
    %60 = arith.addf %57, %59 : vector<160x64xf32>
    %cst_27 = arith.constant 0.000000e+00 : f32
    %61 = vector.broadcast %cst_27 : f32 to vector<160x64xf32>
    %62 = arith.maximumf %60, %61 : vector<160x64xf32>
    %63 = arith.truncf %62 : vector<160x64xf32> to vector<160x64xbf16>
    %64 = vector.shape_cast %63 : vector<160x64xbf16> to vector<2x10x8x64xbf16>
    %65 = vector.extract_strided_slice %64 {offsets = [0, 0, 0, 0], sizes = [2, 10, 8, 32], strides = [1, 1, 1, 1]} : vector<2x10x8x64xbf16> to vector<2x10x8x32xbf16>
    %66 = vector.extract_strided_slice %64 {offsets = [0, 0, 0, 32], sizes = [2, 10, 8, 32], strides = [1, 1, 1, 1]} : vector<2x10x8x64xbf16> to vector<2x10x8x32xbf16>
    %67 = arith.maximumf %65, %66 : vector<2x10x8x32xbf16>
    %68 = vector.shape_cast %67 : vector<2x10x8x32xbf16> to vector<2x5x2x8x32xbf16>
    %69 = vector.extract_strided_slice %68 {offsets = [0, 0, 0, 0, 0], sizes = [2, 5, 1, 8, 32], strides = [1, 1, 1, 1, 1]} : vector<2x5x2x8x32xbf16> to vector<2x5x1x8x32xbf16>
    %70 = vector.shape_cast %69 : vector<2x5x1x8x32xbf16> to vector<2x5x8x32xbf16>
    %71 = vector.extract_strided_slice %68 {offsets = [0, 0, 1, 0, 0], sizes = [2, 5, 1, 8, 32], strides = [1, 1, 1, 1, 1]} : vector<2x5x2x8x32xbf16> to vector<2x5x1x8x32xbf16>
    %72 = vector.shape_cast %71 : vector<2x5x1x8x32xbf16> to vector<2x5x8x32xbf16>
    %73 = arith.maximumf %70, %72 : vector<2x5x8x32xbf16>
    %74 = vector.extract_strided_slice %73 {offsets = [0, 0, 0, 0], sizes = [2, 1, 1, 32], strides = [1, 1, 1, 1]} : vector<2x5x8x32xbf16> to vector<2x1x1x32xbf16>
    %75 = vector.shape_cast %74 : vector<2x1x1x32xbf16> to vector<2x32xbf16>
    %76 = vector.extract_strided_slice %73 {offsets = [0, 0, 1, 0], sizes = [2, 1, 1, 32], strides = [1, 1, 1, 1]} : vector<2x5x8x32xbf16> to vector<2x1x1x32xbf16>
    %77 = vector.shape_cast %76 : vector<2x1x1x32xbf16> to vector<2x32xbf16>
    %78 = vector.extract_strided_slice %73 {offsets = [0, 0, 2, 0], sizes = [2, 1, 1, 32], strides = [1, 1, 1, 1]} : vector<2x5x8x32xbf16> to vector<2x1x1x32xbf16>
    %79 = vector.shape_cast %78 : vector<2x1x1x32xbf16> to vector<2x32xbf16>
    %80 = vector.extract_strided_slice %73 {offsets = [0, 0, 3, 0], sizes = [2, 1, 1, 32], strides = [1, 1, 1, 1]} : vector<2x5x8x32xbf16> to vector<2x1x1x32xbf16>
    %81 = vector.shape_cast %80 : vector<2x1x1x32xbf16> to vector<2x32xbf16>
    %82 = vector.extract_strided_slice %73 {offsets = [0, 0, 4, 0], sizes = [2, 1, 1, 32], strides = [1, 1, 1, 1]} : vector<2x5x8x32xbf16> to vector<2x1x1x32xbf16>
    %83 = vector.shape_cast %82 : vector<2x1x1x32xbf16> to vector<2x32xbf16>
    %84 = vector.extract_strided_slice %73 {offsets = [0, 1, 0, 0], sizes = [2, 1, 1, 32], strides = [1, 1, 1, 1]} : vector<2x5x8x32xbf16> to vector<2x1x1x32xbf16>
    %85 = vector.shape_cast %84 : vector<2x1x1x32xbf16> to vector<2x32xbf16>
    %86 = vector.extract_strided_slice %73 {offsets = [0, 1, 1, 0], sizes = [2, 1, 1, 32], strides = [1, 1, 1, 1]} : vector<2x5x8x32xbf16> to vector<2x1x1x32xbf16>
    %87 = vector.shape_cast %86 : vector<2x1x1x32xbf16> to vector<2x32xbf16>
    %88 = vector.extract_strided_slice %73 {offsets = [0, 1, 2, 0], sizes = [2, 1, 1, 32], strides = [1, 1, 1, 1]} : vector<2x5x8x32xbf16> to vector<2x1x1x32xbf16>
    %89 = vector.shape_cast %88 : vector<2x1x1x32xbf16> to vector<2x32xbf16>
    %90 = vector.extract_strided_slice %73 {offsets = [0, 1, 3, 0], sizes = [2, 1, 1, 32], strides = [1, 1, 1, 1]} : vector<2x5x8x32xbf16> to vector<2x1x1x32xbf16>
    %91 = vector.shape_cast %90 : vector<2x1x1x32xbf16> to vector<2x32xbf16>
    %92 = vector.extract_strided_slice %73 {offsets = [0, 1, 4, 0], sizes = [2, 1, 1, 32], strides = [1, 1, 1, 1]} : vector<2x5x8x32xbf16> to vector<2x1x1x32xbf16>
    %93 = vector.shape_cast %92 : vector<2x1x1x32xbf16> to vector<2x32xbf16>
    %94 = vector.extract_strided_slice %73 {offsets = [0, 2, 0, 0], sizes = [2, 1, 1, 32], strides = [1, 1, 1, 1]} : vector<2x5x8x32xbf16> to vector<2x1x1x32xbf16>
    %95 = vector.shape_cast %94 : vector<2x1x1x32xbf16> to vector<2x32xbf16>
    %96 = vector.extract_strided_slice %73 {offsets = [0, 2, 1, 0], sizes = [2, 1, 1, 32], strides = [1, 1, 1, 1]} : vector<2x5x8x32xbf16> to vector<2x1x1x32xbf16>
    %97 = vector.shape_cast %96 : vector<2x1x1x32xbf16> to vector<2x32xbf16>
    %98 = vector.extract_strided_slice %73 {offsets = [0, 2, 2, 0], sizes = [2, 1, 1, 32], strides = [1, 1, 1, 1]} : vector<2x5x8x32xbf16> to vector<2x1x1x32xbf16>
    %99 = vector.shape_cast %98 : vector<2x1x1x32xbf16> to vector<2x32xbf16>
    %100 = vector.extract_strided_slice %73 {offsets = [0, 2, 3, 0], sizes = [2, 1, 1, 32], strides = [1, 1, 1, 1]} : vector<2x5x8x32xbf16> to vector<2x1x1x32xbf16>
    %101 = vector.shape_cast %100 : vector<2x1x1x32xbf16> to vector<2x32xbf16>
    %102 = vector.extract_strided_slice %73 {offsets = [0, 2, 4, 0], sizes = [2, 1, 1, 32], strides = [1, 1, 1, 1]} : vector<2x5x8x32xbf16> to vector<2x1x1x32xbf16>
    %103 = vector.shape_cast %102 : vector<2x1x1x32xbf16> to vector<2x32xbf16>
    %104 = vector.extract_strided_slice %73 {offsets = [0, 3, 0, 0], sizes = [2, 1, 1, 32], strides = [1, 1, 1, 1]} : vector<2x5x8x32xbf16> to vector<2x1x1x32xbf16>
    %105 = vector.shape_cast %104 : vector<2x1x1x32xbf16> to vector<2x32xbf16>
    %106 = vector.extract_strided_slice %73 {offsets = [0, 3, 1, 0], sizes = [2, 1, 1, 32], strides = [1, 1, 1, 1]} : vector<2x5x8x32xbf16> to vector<2x1x1x32xbf16>
    %107 = vector.shape_cast %106 : vector<2x1x1x32xbf16> to vector<2x32xbf16>
    %108 = vector.extract_strided_slice %73 {offsets = [0, 3, 2, 0], sizes = [2, 1, 1, 32], strides = [1, 1, 1, 1]} : vector<2x5x8x32xbf16> to vector<2x1x1x32xbf16>
    %109 = vector.shape_cast %108 : vector<2x1x1x32xbf16> to vector<2x32xbf16>
    %110 = vector.extract_strided_slice %73 {offsets = [0, 3, 3, 0], sizes = [2, 1, 1, 32], strides = [1, 1, 1, 1]} : vector<2x5x8x32xbf16> to vector<2x1x1x32xbf16>
    %111 = vector.shape_cast %110 : vector<2x1x1x32xbf16> to vector<2x32xbf16>
    %112 = vector.extract_strided_slice %73 {offsets = [0, 3, 4, 0], sizes = [2, 1, 1, 32], strides = [1, 1, 1, 1]} : vector<2x5x8x32xbf16> to vector<2x1x1x32xbf16>
    %113 = vector.shape_cast %112 : vector<2x1x1x32xbf16> to vector<2x32xbf16>
    %114 = vector.extract_strided_slice %73 {offsets = [0, 4, 0, 0], sizes = [2, 1, 1, 32], strides = [1, 1, 1, 1]} : vector<2x5x8x32xbf16> to vector<2x1x1x32xbf16>
    %115 = vector.shape_cast %114 : vector<2x1x1x32xbf16> to vector<2x32xbf16>
    %116 = vector.extract_strided_slice %73 {offsets = [0, 4, 1, 0], sizes = [2, 1, 1, 32], strides = [1, 1, 1, 1]} : vector<2x5x8x32xbf16> to vector<2x1x1x32xbf16>
    %117 = vector.shape_cast %116 : vector<2x1x1x32xbf16> to vector<2x32xbf16>
    %118 = vector.extract_strided_slice %73 {offsets = [0, 4, 2, 0], sizes = [2, 1, 1, 32], strides = [1, 1, 1, 1]} : vector<2x5x8x32xbf16> to vector<2x1x1x32xbf16>
    %119 = vector.shape_cast %118 : vector<2x1x1x32xbf16> to vector<2x32xbf16>
    %120 = vector.extract_strided_slice %73 {offsets = [0, 4, 3, 0], sizes = [2, 1, 1, 32], strides = [1, 1, 1, 1]} : vector<2x5x8x32xbf16> to vector<2x1x1x32xbf16>
    %121 = vector.shape_cast %120 : vector<2x1x1x32xbf16> to vector<2x32xbf16>
    %122 = vector.extract_strided_slice %73 {offsets = [0, 4, 4, 0], sizes = [2, 1, 1, 32], strides = [1, 1, 1, 1]} : vector<2x5x8x32xbf16> to vector<2x1x1x32xbf16>
    %123 = vector.shape_cast %122 : vector<2x1x1x32xbf16> to vector<2x32xbf16>
    %124 = tpu.concatenate %75, %77, %79, %81, %83, %85, %87, %89, %91, %93, %95, %97, %99, %101, %103, %105 in 1 : vector<2x32xbf16>, vector<2x32xbf16>, vector<2x32xbf16>, vector<2x32xbf16>, vector<2x32xbf16>, vector<2x32xbf16>, vector<2x32xbf16>, vector<2x32xbf16>, vector<2x32xbf16>, vector<2x32xbf16>, vector<2x32xbf16>, vector<2x32xbf16>, vector<2x32xbf16>, vector<2x32xbf16>, vector<2x32xbf16>, vector<2x32xbf16> -> vector<2x512xbf16>
    %125 = tpu.concatenate %107, %109, %111, %113, %115, %117, %119, %121, %123 in 1 : vector<2x32xbf16>, vector<2x32xbf16>, vector<2x32xbf16>, vector<2x32xbf16>, vector<2x32xbf16>, vector<2x32xbf16>, vector<2x32xbf16>, vector<2x32xbf16>, vector<2x32xbf16> -> vector<2x288xbf16>
    %126 = tpu.concatenate %124, %125 in 1 : vector<2x512xbf16>, vector<2x288xbf16> -> vector<2x800xbf16>
    %c0_28 = arith.constant 0 : index
    %c0_29 = arith.constant 0 : index
    %127 = vector.load %arg6[%c0_28, %c0_29] : memref<800x128xbf16, #tpu.memory_space<vmem>>, vector<800x128xbf16>
    %cst_30 = arith.constant dense<0.000000e+00> : vector<2x128xf32>
    %128 = tpu.matmul %126, %127, %cst_30 {dimension_numbers = #tpu.dot_dimension_numbers<[1], [0], [0], [1], [0, 0, 1, 1], [], []>} : vector<2x800xbf16>, vector<800x128xbf16>, vector<2x128xf32> -> vector<2x128xf32>
    %c0_31 = arith.constant 0 : index
    %c0_32 = arith.constant 0 : index
    %129 = vector.load %arg7[%c0_31, %c0_32] : memref<1x128xf32, #tpu.memory_space<vmem>>, vector<1x128xf32>
    %130 = vector.broadcast %129 : vector<1x128xf32> to vector<2x128xf32>
    %131 = arith.addf %128, %130 : vector<2x128xf32>
    %cst_33 = arith.constant 0.000000e+00 : f32
    %132 = vector.broadcast %cst_33 : f32 to vector<2x128xf32>
    %133 = arith.maximumf %131, %132 : vector<2x128xf32>
    %134 = arith.truncf %133 : vector<2x128xf32> to vector<2x128xbf16>
    %c0_34 = arith.constant 0 : index
    %c0_35 = arith.constant 0 : index
    %135 = vector.load %arg8[%c0_34, %c0_35] : memref<128x128xbf16, #tpu.memory_space<vmem>>, vector<128x128xbf16>
    %cst_36 = arith.constant dense<0.000000e+00> : vector<2x128xf32>
    %136 = tpu.matmul %134, %135, %cst_36 {dimension_numbers = #tpu.dot_dimension_numbers<[1], [0], [0], [1], [0, 0, 1, 1], [], []>} : vector<2x128xbf16>, vector<128x128xbf16>, vector<2x128xf32> -> vector<2x128xf32>
    %c0_37 = arith.constant 0 : index
    %c0_38 = arith.constant 0 : index
    %137 = vector.load %arg9[%c0_37, %c0_38] : memref<1x128xf32, #tpu.memory_space<vmem>>, vector<1x128xf32>
    %138 = vector.broadcast %137 : vector<1x128xf32> to vector<2x128xf32>
    %139 = arith.addf %136, %138 : vector<2x128xf32>
    %cst_39 = arith.constant 0.000000e+00 : f32
    %140 = vector.broadcast %cst_39 : f32 to vector<2x128xf32>
    %141 = arith.maximumf %139, %140 : vector<2x128xf32>
    %142 = arith.truncf %141 : vector<2x128xf32> to vector<2x128xbf16>
    %c0_40 = arith.constant 0 : index
    %c0_41 = arith.constant 0 : index
    %143 = vector.load %arg10[%c0_40, %c0_41] : memref<128x128xbf16, #tpu.memory_space<vmem>>, vector<128x128xbf16>
    %cst_42 = arith.constant dense<0.000000e+00> : vector<2x128xf32>
    %144 = tpu.matmul %142, %143, %cst_42 {dimension_numbers = #tpu.dot_dimension_numbers<[1], [0], [0], [1], [0, 0, 1, 1], [], []>} : vector<2x128xbf16>, vector<128x128xbf16>, vector<2x128xf32> -> vector<2x128xf32>
    %c0_43 = arith.constant 0 : index
    %c0_44 = arith.constant 0 : index
    %145 = vector.load %arg11[%c0_43, %c0_44] : memref<1x128xf32, #tpu.memory_space<vmem>>, vector<1x128xf32>
    %146 = vector.broadcast %145 : vector<1x128xf32> to vector<2x128xf32>
    %147 = arith.addf %144, %146 : vector<2x128xf32>
    %c0_45 = arith.constant 0 : index
    %c0_46 = arith.constant 0 : index
    %148 = vector.load %arg12[%c0_45, %c0_46] : memref<2x128xf32, #tpu.memory_space<vmem>>, vector<2x128xf32>
    tpu.vector_store %arg12[%c0_45, %c0_46], %147 {strides = array<i32>} : memref<2x128xf32, #tpu.memory_space<vmem>>, vector<2x128xf32>,
    return
  }
  func.func @transform_0(%arg0: i32) -> (i32, i32, i32, i32) {
    %c0_i32 = arith.constant 0 : i32
    %c0_i32_0 = arith.constant 0 : i32
    %c0_i32_1 = arith.constant 0 : i32
    %c0_i32_2 = arith.constant 0 : i32
    return %arg0, %c0_i32, %c0_i32_0, %c0_i32_1 : i32, i32, i32, i32
  }
  func.func @transform_1(%arg0: i32) -> (i32, i32) {
    %c0_i32 = arith.constant 0 : i32
    %c0_i32_0 = arith.constant 0 : i32
    %c0_i32_1 = arith.constant 0 : i32
    return %c0_i32, %c0_i32_0 : i32, i32
  }
  func.func @transform_2(%arg0: i32) -> (i32, i32) {
    %c0_i32 = arith.constant 0 : i32
    %c0_i32_0 = arith.constant 0 : i32
    %c0_i32_1 = arith.constant 0 : i32
    return %c0_i32, %c0_i32_0 : i32, i32
  }
  func.func @transform_3(%arg0: i32) -> (i32, i32, i32) {
    %c0_i32 = arith.constant 0 : i32
    %c0_i32_0 = arith.constant 0 : i32
    %c0_i32_1 = arith.constant 0 : i32
    %c0_i32_2 = arith.constant 0 : i32
    return %c0_i32, %c0_i32_0, %c0_i32_1 : i32, i32, i32
  }
  func.func @transform_4(%arg0: i32) -> (i32, i32) {
    %c0_i32 = arith.constant 0 : i32
    %c0_i32_0 = arith.constant 0 : i32
    %c0_i32_1 = arith.constant 0 : i32
    return %c0_i32, %c0_i32_0 : i32, i32
  }
  func.func @transform_5(%arg0: i32) -> (i32, i32) {
    %c0_i32 = arith.constant 0 : i32
    %c0_i32_0 = arith.constant 0 : i32
    %c0_i32_1 = arith.constant 0 : i32
    return %c0_i32, %c0_i32_0 : i32, i32
  }
  func.func @transform_6(%arg0: i32) -> (i32, i32) {
    %c0_i32 = arith.constant 0 : i32
    %c0_i32_0 = arith.constant 0 : i32
    %c0_i32_1 = arith.constant 0 : i32
    return %c0_i32, %c0_i32_0 : i32, i32
  }
  func.func @transform_7(%arg0: i32) -> (i32, i32) {
    %c0_i32 = arith.constant 0 : i32
    %c0_i32_0 = arith.constant 0 : i32
    %c0_i32_1 = arith.constant 0 : i32
    return %c0_i32, %c0_i32_0 : i32, i32
  }
  func.func @transform_8(%arg0: i32) -> (i32, i32) {
    %c0_i32 = arith.constant 0 : i32
    %c0_i32_0 = arith.constant 0 : i32
    %c0_i32_1 = arith.constant 0 : i32
    return %c0_i32, %c0_i32_0 : i32, i32
  }
  func.func @transform_9(%arg0: i32) -> (i32, i32) {
    %c0_i32 = arith.constant 0 : i32
    %c0_i32_0 = arith.constant 0 : i32
    %c0_i32_1 = arith.constant 0 : i32
    return %c0_i32, %c0_i32_0 : i32, i32
  }
  func.func @transform_10(%arg0: i32) -> (i32, i32) {
    %c0_i32 = arith.constant 0 : i32
    %c0_i32_0 = arith.constant 0 : i32
    %c0_i32_1 = arith.constant 0 : i32
    return %c0_i32, %c0_i32_0 : i32, i32
  }
  func.func @transform_11(%arg0: i32) -> (i32, i32) {
    %c0_i32 = arith.constant 0 : i32
    %c0_i32_0 = arith.constant 0 : i32
    return %arg0, %c0_i32 : i32, i32
  }
}

</mosaic_0001>

<llo_original>
// kernel: net_forward.1
$region0: #{net_forward.1}
  #allocation0 [shape = 'u32[]', space=smem, size = 0x4, offset = 0x4, fixed_abs, tag = 'smem constant byte address 0x4 - core index']
  #allocation1 [shape = 'u32[72,128]{1,0:T(1,128)}', space=vmem, size = 0x9000, scoped, tag = 'internal scratch']
  %s0 = inlined_call_operand.vmem [shape: bf16[2,28,16,90], index: 0, kind: input, shape index: {}]
  %s1 = inlined_call_operand.vmem [shape: bf16[90,32], index: 1, kind: input, shape index: {}]
  %s2 = inlined_call_operand.vmem [shape: f32[1,32], index: 2, kind: input, shape index: {}]
  %s3 = inlined_call_operand.vmem [shape: bf16[5,96,64], index: 3, kind: input, shape index: {}]
  %s4 = inlined_call_operand.vmem [shape: f32[1,64], index: 4, kind: input, shape index: {}]
  %s5 = inlined_call_operand.vmem [shape: bf16[800,128], index: 5, kind: input, shape index: {}]
  %s6 = inlined_call_operand.vmem [shape: f32[1,128], index: 6, kind: input, shape index: {}]
  %s7 = inlined_call_operand.vmem [shape: bf16[128,128], index: 7, kind: input, shape index: {}]
  %s8 = inlined_call_operand.vmem [shape: f32[1,128], index: 8, kind: input, shape index: {}]
  %s9 = inlined_call_operand.vmem [shape: bf16[128,128], index: 9, kind: input, shape index: {}]
  %s10 = inlined_call_operand.vmem [shape: f32[1,128], index: 10, kind: input, shape index: {}]
  %s11 = inlined_call_operand.hbm [shape: f32[2,128], index: 11, kind: output, shape index: {}]
  %s12 = sld [smem:[#allocation0]]
  $region54: #{net_forward.1} parent=0
    _
  %s14 = ssub.s32 1, %s12
  %s15 = scalar_select 0, %s14, %s12
  $region1: #{net_forward.1} parent=0
    #allocation2 [shape = 'u8[1024]{0}', space=vmem, size = 0x400, scoped, tag = 'output window, operand 0, single buffered']
    #allocation3 [shape = 's32[1]{0}', space=sflag, size = 0x4, scoped, tag = 'scoped memory for net_forward.1']
    %16 = vsyncpa [#allocation3], 0
    // Predicated region
    $region2: #{net_forward.1} parent=1 // pred_check
      _
    $region3: #{net_forward.1} parent=1 // pred_check_branch
      %18 = sbr.rel (0) target = $region5
    $region4: #{net_forward.1} parent=1 // pred_region
      _
    $region5: #{net_forward.1} parent=1 // pred_fallthru
      _
    // Predicated region
    $region6: #{net_forward.1} parent=1 // pred_check
      _
    $region7: #{net_forward.1} parent=1 // pred_check_branch
      %20 = sbr.rel (0) target = $region9
    $region8: #{net_forward.1} parent=1 // pred_region
      _
    $region9: #{net_forward.1} parent=1 // pred_fallthru
      _
    // Predicated region
    $region10: #{net_forward.1} parent=1 // pred_check
      _
    $region11: #{net_forward.1} parent=1 // pred_check_branch
      %22 = sbr.rel (0) target = $region13
    $region12: #{net_forward.1} parent=1 // pred_region
      _
    $region13: #{net_forward.1} parent=1 // pred_fallthru
      _
    // Predicated region
    $region14: #{net_forward.1} parent=1 // pred_check
      _
    $region15: #{net_forward.1} parent=1 // pred_check_branch
      %24 = sbr.rel (0) target = $region17
    $region16: #{net_forward.1} parent=1 // pred_region
      _
    $region17: #{net_forward.1} parent=1 // pred_fallthru
      _
    // Predicated region
    $region18: #{net_forward.1} parent=1 // pred_check
      _
    $region19: #{net_forward.1} parent=1 // pred_check_branch
      %26 = sbr.rel (0) target = $region21
    $region20: #{net_forward.1} parent=1 // pred_region
      _
    $region21: #{net_forward.1} parent=1 // pred_fallthru
      _
    // Predicated region
    $region22: #{net_forward.1} parent=1 // pred_check
      _
    $region23: #{net_forward.1} parent=1 // pred_check_branch
      %28 = sbr.rel (0) target = $region25
    $region24: #{net_forward.1} parent=1 // pred_region
      _
    $region25: #{net_forward.1} parent=1 // pred_fallthru
      _
    // Predicated region
    $region26: #{net_forward.1} parent=1 // pred_check
      _
    $region27: #{net_forward.1} parent=1 // pred_check_branch
      %30 = sbr.rel (0) target = $region29
    $region28: #{net_forward.1} parent=1 // pred_region
      _
    $region29: #{net_forward.1} parent=1 // pred_fallthru
      _
    // Predicated region
    $region30: #{net_forward.1} parent=1 // pred_check
      _
    $region31: #{net_forward.1} parent=1 // pred_check_branch
      %32 = sbr.rel (0) target = $region33
    $region32: #{net_forward.1} parent=1 // pred_region
      _
    $region33: #{net_forward.1} parent=1 // pred_fallthru
      _
    // Predicated region
    $region34: #{net_forward.1} parent=1 // pred_check
      _
    $region35: #{net_forward.1} parent=1 // pred_check_branch
      %34 = sbr.rel (0) target = $region37
    $region36: #{net_forward.1} parent=1 // pred_region
      _
    $region37: #{net_forward.1} parent=1 // pred_fallthru
      _
    // Predicated region
    $region38: #{net_forward.1} parent=1 // pred_check
      _
    $region39: #{net_forward.1} parent=1 // pred_check_branch
      %36 = sbr.rel (0) target = $region41
    $region40: #{net_forward.1} parent=1 // pred_region
      _
    $region41: #{net_forward.1} parent=1 // pred_fallthru
      _
    // Predicated region
    $region42: #{net_forward.1} parent=1 // pred_check
      _
    $region43: #{net_forward.1} parent=1 // pred_check_branch
      %38 = sbr.rel (0) target = $region45
    $region44: #{net_forward.1} parent=1 // pred_region
      _
    $region45: #{net_forward.1} parent=1 // pred_fallthru
      _
    %v40 = vld [vmem:[%s0] sm:$0xf]
    %v41 = vld [vmem:[%s0 + $0x4] sm:$0xf]
    %v42 = vld [vmem:[%s0 + $0x8] sm:$0xf]
    %v43 = vld [vmem:[%s0 + $0xc] sm:$0xf]
    %v44 = vld [vmem:[%s0 + $0x10] sm:$0xf]
    %v45 = vld [vmem:[%s0 + $0x14] sm:$0xf]
    %v46 = vld [vmem:[%s0 + $0x18] sm:$0xf]
    %v47 = vld [vmem:[%s0 + $0x1c] sm:$0xf]
    %v48 = vld [vmem:[%s0 + $0x20] sm:$0xf]
    %v49 = vld [vmem:[%s0 + $0x24] sm:$0xf]
    %v50 = vld [vmem:[%s0 + $0x28] sm:$0xf]
    %v51 = vld [vmem:[%s0 + $0x2c] sm:$0xf]
    %v52 = vld [vmem:[%s0 + $0x30] sm:$0xf]
    %v53 = vld [vmem:[%s0 + $0x34] sm:$0xf]
    %v54 = vld [vmem:[%s0 + $0x38] sm:$0xf]
    %v55 = vld [vmem:[%s0 + $0x3c] sm:$0xf]
    %v56 = vld [vmem:[%s0 + $0x40] sm:$0xf]
    %v57 = vld [vmem:[%s0 + $0x44] sm:$0xf]
    %v58 = vld [vmem:[%s0 + $0x48] sm:$0xf]
    %v59 = vld [vmem:[%s0 + $0x4c] sm:$0xf]
    %v60 = vld [vmem:[%s0 + $0x50] sm:$0xf]
    %v61 = vld [vmem:[%s0 + $0x54] sm:$0xf]
    %v62 = vld [vmem:[%s0 + $0x58] sm:$0xf]
    %v63 = vld [vmem:[%s0 + $0x5c] sm:$0xf]
    %v64 = vld [vmem:[%s0 + $0x60] sm:$0xf]
    %v65 = vld [vmem:[%s0 + $0x64] sm:$0xf]
    %v66 = vld [vmem:[%s0 + $0x68] sm:$0xf]
    %v67 = vld [vmem:[%s0 + $0x6c] sm:$0xf]
    %v68 = vld [vmem:[%s0 + $0x70] sm:$0xf]
    %v69 = vld [vmem:[%s0 + $0x74] sm:$0xf]
    %v70 = vld [vmem:[%s0 + $0x78] sm:$0xf]
    %v71 = vld [vmem:[%s0 + $0x7c] sm:$0xf]
    %v72 = vld [vmem:[%s0 + $0x80] sm:$0xf]
    %v73 = vld [vmem:[%s0 + $0x84] sm:$0xf]
    %v74 = vld [vmem:[%s0 + $0x88] sm:$0xf]
    %v75 = vld [vmem:[%s0 + $0x8c] sm:$0xf]
    %v76 = vld [vmem:[%s0 + $0x90] sm:$0xf]
    %v77 = vld [vmem:[%s0 + $0x94] sm:$0xf]
    %v78 = vld [vmem:[%s0 + $0x98] sm:$0xf]
    %v79 = vld [vmem:[%s0 + $0x9c] sm:$0xf]
    %v80 = vld [vmem:[%s0 + $0xa0] sm:$0xf]
    %v81 = vld [vmem:[%s0 + $0xa4] sm:$0xf]
    %v82 = vld [vmem:[%s0 + $0xa8] sm:$0xf]
    %v83 = vld [vmem:[%s0 + $0xac] sm:$0xf]
    %v84 = vld [vmem:[%s0 + $0xb0] sm:$0xf]
    %v85 = vld [vmem:[%s0 + $0xb4] sm:$0xf]
    %v86 = vld [vmem:[%s0 + $0xb8] sm:$0xf]
    %v87 = vld [vmem:[%s0 + $0xbc] sm:$0xf]
    %v88 = vld [vmem:[%s0 + $0xc0] sm:$0xf]
    %v89 = vld [vmem:[%s0 + $0xc4] sm:$0xf]
    %v90 = vld [vmem:[%s0 + $0xc8] sm:$0xf]
    %v91 = vld [vmem:[%s0 + $0xcc] sm:$0xf]
    %v92 = vld [vmem:[%s0 + $0xd0] sm:$0xf]
    %v93 = vld [vmem:[%s0 + $0xd4] sm:$0xf]
    %v94 = vld [vmem:[%s0 + $0xd8] sm:$0xf]
    %v95 = vld [vmem:[%s0 + $0xdc] sm:$0xf]
    %v96 = vld [vmem:[%s0 + $0xe0] sm:$0xf]
    %v97 = vld [vmem:[%s0 + $0xe4] sm:$0xf]
    %v98 = vld [vmem:[%s0 + $0xe8] sm:$0xf]
    %v99 = vld [vmem:[%s0 + $0xec] sm:$0xf]
    %v100 = vld [vmem:[%s0 + $0xf0] sm:$0xf]
    %v101 = vld [vmem:[%s0 + $0xf4] sm:$0xf]
    %v102 = vld [vmem:[%s0 + $0xf8] sm:$0xf]
    %v103 = vld [vmem:[%s0 + $0xfc] sm:$0xf]
    %v104 = vld [vmem:[%s0 + $0x100] sm:$0xf]
    %v105 = vld [vmem:[%s0 + $0x104] sm:$0xf]
    %v106 = vld [vmem:[%s0 + $0x108] sm:$0xf]
    %v107 = vld [vmem:[%s0 + $0x10c] sm:$0xf]
    %v108 = vld [vmem:[%s0 + $0x110] sm:$0xf]
    %v109 = vld [vmem:[%s0 + $0x114] sm:$0xf]
    %v110 = vld [vmem:[%s0 + $0x118] sm:$0xf]
    %v111 = vld [vmem:[%s0 + $0x11c] sm:$0xf]
    %v112 = vld [vmem:[%s0 + $0x120] sm:$0xf]
    %v113 = vld [vmem:[%s0 + $0x124] sm:$0xf]
    %v114 = vld [vmem:[%s0 + $0x128] sm:$0xf]
    %v115 = vld [vmem:[%s0 + $0x12c] sm:$0xf]
    %v116 = vld [vmem:[%s0 + $0x130] sm:$0xf]
    %v117 = vld [vmem:[%s0 + $0x134] sm:$0xf]
    %v118 = vld [vmem:[%s0 + $0x138] sm:$0xf]
    %v119 = vld [vmem:[%s0 + $0x13c] sm:$0xf]
    %v120 = vld [vmem:[%s0 + $0x140] sm:$0xf]
    %v121 = vld [vmem:[%s0 + $0x144] sm:$0xf]
    %v122 = vld [vmem:[%s0 + $0x148] sm:$0xf]
    %v123 = vld [vmem:[%s0 + $0x14c] sm:$0xf]
    %v124 = vld [vmem:[%s0 + $0x150] sm:$0xf]
    %v125 = vld [vmem:[%s0 + $0x154] sm:$0xf]
    %v126 = vld [vmem:[%s0 + $0x158] sm:$0xf]
    %v127 = vld [vmem:[%s0 + $0x15c] sm:$0xf]
    %v128 = vld [vmem:[%s0 + $0x160] sm:$0xf]
    %v129 = vld [vmem:[%s0 + $0x164] sm:$0xf]
    %v130 = vld [vmem:[%s0 + $0x168] sm:$0xf]
    %v131 = vld [vmem:[%s0 + $0x16c] sm:$0xf]
    %v132 = vld [vmem:[%s0 + $0x170] sm:$0xf]
    %v133 = vld [vmem:[%s0 + $0x174] sm:$0xf]
    %v134 = vld [vmem:[%s0 + $0x178] sm:$0xf]
    %v135 = vld [vmem:[%s0 + $0x17c] sm:$0xf]
    %v136 = vld [vmem:[%s0 + $0x180] sm:$0xf]
    %v137 = vld [vmem:[%s0 + $0x184] sm:$0xf]
    %v138 = vld [vmem:[%s0 + $0x188] sm:$0xf]
    %v139 = vld [vmem:[%s0 + $0x18c] sm:$0xf]
    %v140 = vld [vmem:[%s0 + $0x190] sm:$0xf]
    %v141 = vld [vmem:[%s0 + $0x194] sm:$0xf]
    %v142 = vld [vmem:[%s0 + $0x198] sm:$0xf]
    %v143 = vld [vmem:[%s0 + $0x19c] sm:$0xf]
    %v144 = vld [vmem:[%s0 + $0x1a0] sm:$0xf]
    %v145 = vld [vmem:[%s0 + $0x1a4] sm:$0xf]
    %v146 = vld [vmem:[%s0 + $0x1a8] sm:$0xf]
    %v147 = vld [vmem:[%s0 + $0x1ac] sm:$0xf]
    %v148 = vld [vmem:[%s0 + $0x1b0] sm:$0xf]
    %v149 = vld [vmem:[%s0 + $0x1b4] sm:$0xf]
    %v150 = vld [vmem:[%s0 + $0x1b8] sm:$0xf]
    %v151 = vld [vmem:[%s0 + $0x1bc] sm:$0xf]
    %v152 = vld [vmem:[%s1] sm:$0xf]
    %v153 = vld [vmem:[%s1 + $0x4] sm:$0xf]
    %v154 = vld [vmem:[%s1 + $0x8] sm:$0xf]
    %v155 = vld [vmem:[%s1 + $0xc] sm:$0xf]
    %v156 = vld [vmem:[%s1 + $0x10] sm:$0xf]
    %v157 = vld [vmem:[%s1 + $0x14] sm:$0xf]
    %v158 = vld [vmem:[%s1 + $0x18] sm:$0xf]
    %v159 = vld [vmem:[%s1 + $0x1c] sm:$0xf]
    %v160 = vld [vmem:[%s1 + $0x20] sm:$0xf]
    %v161 = vld [vmem:[%s1 + $0x24] sm:$0xf]
    %v162 = vld [vmem:[%s1 + $0x28] sm:$0xf]
    %v163 = vld [vmem:[%s1 + $0x2c] sm:$0x1]
    %v164 = vld [vmem:[%s2] sm:$0x1]
    %v166 = vperm.slane %v164, 0
    %v280 = vunpack.c.l.b16 %v40
    %v281 = vunpack.c.l.b16 %v41
    %v282 = vunpack.c.l.b16 %v42
    %v283 = vunpack.c.l.b16 %v43
    %v284 = vunpack.c.l.b16 %v44
    %v285 = vunpack.c.l.b16 %v45
    %v286 = vunpack.c.l.b16 %v46
    %v287 = vunpack.c.l.b16 %v47
    %v288 = vunpack.c.l.b16 %v48
    %v289 = vunpack.c.l.b16 %v49
    %v290 = vunpack.c.l.b16 %v50
    %v291 = vunpack.c.l.b16 %v51
    %v292 = vunpack.c.l.b16 %v52
    %v293 = vunpack.c.l.b16 %v53
    %v294 = vunpack.c.l.b16 %v54
    %v295 = vunpack.c.l.b16 %v55
    %v296 = vunpack.c.l.b16 %v56
    %v297 = vunpack.c.l.b16 %v57
    %v298 = vunpack.c.l.b16 %v58
    %v299 = vunpack.c.l.b16 %v59
    %v300 = vunpack.c.l.b16 %v60
    %v301 = vunpack.c.l.b16 %v61
    %v302 = vunpack.c.l.b16 %v62
    %v303 = vunpack.c.l.b16 %v63
    %v304 = vunpack.c.l.b16 %v64
    %v305 = vunpack.c.l.b16 %v65
    %v306 = vunpack.c.l.b16 %v66
    %v307 = vunpack.c.l.b16 %v67
    %v308 = vunpack.c.l.b16 %v68
    %v309 = vunpack.c.l.b16 %v69
    %v310 = vunpack.c.l.b16 %v70
    %v311 = vunpack.c.l.b16 %v71
    %v312 = vunpack.c.l.b16 %v72
    %v313 = vunpack.c.l.b16 %v73
    %v314 = vunpack.c.l.b16 %v74
    %v315 = vunpack.c.l.b16 %v75
    %v316 = vunpack.c.l.b16 %v76
    %v317 = vunpack.c.l.b16 %v77
    %v318 = vunpack.c.l.b16 %v78
    %v319 = vunpack.c.l.b16 %v79
    %v320 = vunpack.c.l.b16 %v80
    %v321 = vunpack.c.l.b16 %v81
    %v322 = vunpack.c.l.b16 %v82
    %v323 = vunpack.c.l.b16 %v83
    %v324 = vunpack.c.l.b16 %v84
    %v325 = vunpack.c.l.b16 %v85
    %v326 = vunpack.c.l.b16 %v86
    %v327 = vunpack.c.l.b16 %v87
    %v328 = vunpack.c.l.b16 %v88
    %v329 = vunpack.c.l.b16 %v89
    %v330 = vunpack.c.l.b16 %v90
    %v331 = vunpack.c.l.b16 %v91
    %v332 = vunpack.c.l.b16 %v92
    %v333 = vunpack.c.l.b16 %v93
    %v334 = vunpack.c.l.b16 %v94
    %v335 = vunpack.c.l.b16 %v95
    %v336 = vunpack.c.l.b16 %v96
    %v337 = vunpack.c.l.b16 %v97
    %v338 = vunpack.c.l.b16 %v98
    %v339 = vunpack.c.l.b16 %v99
    %v340 = vunpack.c.l.b16 %v100
    %v341 = vunpack.c.l.b16 %v101
    %v342 = vunpack.c.l.b16 %v102
    %v343 = vunpack.c.l.b16 %v103
    %v344 = vunpack.c.l.b16 %v104
    %v345 = vunpack.c.l.b16 %v105
    %v346 = vunpack.c.l.b16 %v106
    %v347 = vunpack.c.l.b16 %v107
    %v348 = vunpack.c.l.b16 %v108
    %v349 = vunpack.c.l.b16 %v109
    %v350 = vunpack.c.l.b16 %v110
    %v351 = vunpack.c.l.b16 %v111
    %v352 = vunpack.c.l.b16 %v112
    %v353 = vunpack.c.l.b16 %v113
    %v354 = vunpack.c.l.b16 %v114
    %v355 = vunpack.c.l.b16 %v115
    %v356 = vunpack.c.l.b16 %v116
    %v357 = vunpack.c.l.b16 %v117
    %v358 = vunpack.c.l.b16 %v118
    %v359 = vunpack.c.l.b16 %v119
    %v360 = vunpack.c.l.b16 %v120
    %v361 = vunpack.c.l.b16 %v121
    %v362 = vunpack.c.l.b16 %v122
    %v363 = vunpack.c.l.b16 %v123
    %v364 = vunpack.c.l.b16 %v124
    %v365 = vunpack.c.l.b16 %v125
    %v366 = vunpack.c.l.b16 %v126
    %v367 = vunpack.c.l.b16 %v127
    %v368 = vunpack.c.l.b16 %v128
    %v369 = vunpack.c.l.b16 %v129
    %v370 = vunpack.c.l.b16 %v130
    %v371 = vunpack.c.l.b16 %v131
    %v372 = vunpack.c.l.b16 %v132
    %v373 = vunpack.c.l.b16 %v133
    %v374 = vunpack.c.l.b16 %v134
    %v375 = vunpack.c.l.b16 %v135
    %v376 = vunpack.c.l.b16 %v136
    %v377 = vunpack.c.l.b16 %v137
    %v378 = vunpack.c.l.b16 %v138
    %v379 = vunpack.c.l.b16 %v139
    %v380 = vunpack.c.l.b16 %v140
    %v381 = vunpack.c.l.b16 %v141
    %v382 = vunpack.c.l.b16 %v142
    %v383 = vunpack.c.l.b16 %v143
    %v384 = vunpack.c.l.b16 %v144
    %v385 = vunpack.c.l.b16 %v145
    %v386 = vunpack.c.l.b16 %v146
    %v387 = vunpack.c.l.b16 %v147
    %v388 = vunpack.c.l.b16 %v148
    %v389 = vunpack.c.l.b16 %v149
    %v390 = vunpack.c.l.b16 %v150
    %v391 = vunpack.c.l.b16 %v151
    %v392 = vpack.c.b16 %v281, %v280
    %v393 = vpack.c.b16 %v283, %v282
    %v394 = vpack.c.b16 %v285, %v284
    %v395 = vpack.c.b16 %v287, %v286
    %v396 = vpack.c.b16 %v289, %v288
    %v397 = vpack.c.b16 %v291, %v290
    %v398 = vpack.c.b16 %v293, %v292
    %v399 = vpack.c.b16 %v295, %v294
    %v400 = vpack.c.b16 %v297, %v296
    %v401 = vpack.c.b16 %v299, %v298
    %v402 = vpack.c.b16 %v301, %v300
    %v403 = vpack.c.b16 %v303, %v302
    %v404 = vpack.c.b16 %v305, %v304
    %v405 = vpack.c.b16 %v307, %v306
    %v406 = vpack.c.b16 %v309, %v308
    %v407 = vpack.c.b16 %v311, %v310
    %v408 = vpack.c.b16 %v313, %v312
    %v409 = vpack.c.b16 %v315, %v314
    %v410 = vpack.c.b16 %v317, %v316
    %v411 = vpack.c.b16 %v319, %v318
    %v412 = vpack.c.b16 %v321, %v320
    %v413 = vpack.c.b16 %v323, %v322
    %v414 = vpack.c.b16 %v325, %v324
    %v415 = vpack.c.b16 %v327, %v326
    %v416 = vpack.c.b16 %v329, %v328
    %v417 = vpack.c.b16 %v331, %v330
    %v418 = vpack.c.b16 %v333, %v332
    %v419 = vpack.c.b16 %v335, %v334
    %v420 = vpack.c.b16 %v337, %v336
    %v421 = vpack.c.b16 %v339, %v338
    %v422 = vpack.c.b16 %v341, %v340
    %v423 = vpack.c.b16 %v343, %v342
    %v424 = vpack.c.b16 %v345, %v344
    %v425 = vpack.c.b16 %v347, %v346
    %v426 = vpack.c.b16 %v349, %v348
    %v427 = vpack.c.b16 %v351, %v350
    %v428 = vpack.c.b16 %v353, %v352
    %v429 = vpack.c.b16 %v355, %v354
    %v430 = vpack.c.b16 %v357, %v356
    %v431 = vpack.c.b16 %v359, %v358
    %v432 = vpack.c.b16 %v361, %v360
    %v433 = vpack.c.b16 %v363, %v362
    %v434 = vpack.c.b16 %v365, %v364
    %v435 = vpack.c.b16 %v367, %v366
    %v436 = vpack.c.b16 %v369, %v368
    %v437 = vpack.c.b16 %v371, %v370
    %v438 = vpack.c.b16 %v373, %v372
    %v439 = vpack.c.b16 %v375, %v374
    %v440 = vpack.c.b16 %v377, %v376
    %v441 = vpack.c.b16 %v379, %v378
    %v442 = vpack.c.b16 %v381, %v380
    %v443 = vpack.c.b16 %v383, %v382
    %v444 = vpack.c.b16 %v385, %v384
    %v445 = vpack.c.b16 %v387, %v386
    %v446 = vpack.c.b16 %v389, %v388
    %v447 = vpack.c.b16 %v391, %v390
    %v460 = vunpack.c.l.b16 %v152
    %v461 = vunpack.c.l.b16 %v153
    %v462 = vunpack.c.l.b16 %v154
    %v463 = vunpack.c.l.b16 %v155
    %v464 = vunpack.c.l.b16 %v156
    %v465 = vunpack.c.l.b16 %v157
    %v466 = vunpack.c.l.b16 %v158
    %v467 = vunpack.c.l.b16 %v159
    %v468 = vunpack.c.l.b16 %v160
    %v469 = vunpack.c.l.b16 %v161
    %v470 = vunpack.c.l.b16 %v162
    %v471 = vunpack.c.l.b16 %v163
    %v472 = vpack.c.b16 %v461, %v460
    %v473 = vpack.c.b16 %v463, %v462
    %v474 = vpack.c.b16 %v465, %v464
    %v475 = vpack.c.b16 %v467, %v466
    %v476 = vpack.c.b16 %v469, %v468
    %v477 = vpack.c.b16 %v471, %v470
    %vm483 = vcmask 736256
    %v485 = vsel %vm483, %v392, 0
    %v488 = vsel %vm483, %v393, 0
    %v491 = vsel %vm483, %v394, 0
    %v494 = vsel %vm483, %v395, 0
    %v497 = vsel %vm483, %v396, 0
    %v500 = vsel %vm483, %v397, 0
    %v503 = vsel %vm483, %v398, 0
    %v506 = vsel %vm483, %v399, 0
    %v509 = vsel %vm483, %v400, 0
    %v512 = vsel %vm483, %v401, 0
    %v515 = vsel %vm483, %v402, 0
    %v518 = vsel %vm483, %v403, 0
    %v521 = vsel %vm483, %v404, 0
    %v524 = vsel %vm483, %v405, 0
    %v527 = vsel %vm483, %v406, 0
    %v530 = vsel %vm483, %v407, 0
    %v533 = vsel %vm483, %v408, 0
    %v536 = vsel %vm483, %v409, 0
    %v539 = vsel %vm483, %v410, 0
    %v542 = vsel %vm483, %v411, 0
    %v545 = vsel %vm483, %v412, 0
    %v548 = vsel %vm483, %v413, 0
    %v551 = vsel %vm483, %v414, 0
    %v554 = vsel %vm483, %v415, 0
    %v557 = vsel %vm483, %v416, 0
    %v560 = vsel %vm483, %v417, 0
    %v563 = vsel %vm483, %v418, 0
    %v566 = vsel %vm483, %v419, 0
    %v569 = vsel %vm483, %v420, 0
    %v572 = vsel %vm483, %v421, 0
    %v575 = vsel %vm483, %v422, 0
    %v578 = vsel %vm483, %v423, 0
    %v581 = vsel %vm483, %v424, 0
    %v584 = vsel %vm483, %v425, 0
    %v587 = vsel %vm483, %v426, 0
    %v590 = vsel %vm483, %v427, 0
    %v593 = vsel %vm483, %v428, 0
    %v596 = vsel %vm483, %v429, 0
    %v599 = vsel %vm483, %v430, 0
    %v602 = vsel %vm483, %v431, 0
    %v605 = vsel %vm483, %v432, 0
    %v608 = vsel %vm483, %v433, 0
    %v611 = vsel %vm483, %v434, 0
    %v614 = vsel %vm483, %v435, 0
    %v617 = vsel %vm483, %v436, 0
    %v620 = vsel %vm483, %v437, 0
    %v623 = vsel %vm483, %v438, 0
    %v626 = vsel %vm483, %v439, 0
    %v629 = vsel %vm483, %v440, 0
    %v632 = vsel %vm483, %v441, 0
    %v635 = vsel %vm483, %v442, 0
    %v638 = vsel %vm483, %v443, 0
    %v641 = vsel %vm483, %v444, 0
    %v644 = vsel %vm483, %v445, 0
    %v647 = vsel %vm483, %v446, 0
    %v650 = vsel %vm483, %v447, 0
    %vm652 = vcmask 1044480
    %v654 = vsel %vm652, %v477, 0
    %656 = vmatpush.bf16.msra.mxu0 0
    %657 = vmatpush.bf16.msra.mxu0 0
    %658 = vmatpush.bf16.msra.mxu0 %v654
    %659 = vmatpush.bf16.msra.mxu0 %v476
    %660 = vmatpush.bf16.msra.mxu0 %v475
    %661 = vmatpush.bf16.msra.mxu0 %v474
    %662 = vmatpush.bf16.msra.mxu0 %v473
    %663 = vmatpush.bf16.msra.mxu0 %v472
    %664 = vmatmul.bf16.gmra.mxu0 %v485
    %v665 = vpop.f32.mrf.mxu0
    %v666 = vadd.f32 %v166, %v665
    %v667 = vpop.f32.mrf.mxu0
    %v668 = vadd.f32 %v166, %v667
    %669 = vmatmul.bf16.gmra.mxu0 %v488
    %v670 = vpop.f32.mrf.mxu0
    %v671 = vadd.f32 %v166, %v670
    %v672 = vpop.f32.mrf.mxu0
    %v673 = vadd.f32 %v166, %v672
    %674 = vmatmul.bf16.gmra.mxu0 %v491
    %v675 = vpop.f32.mrf.mxu0
    %v676 = vadd.f32 %v166, %v675
    %v677 = vpop.f32.mrf.mxu0
    %v678 = vadd.f32 %v166, %v677
    %679 = vmatmul.bf16.gmra.mxu0 %v494
    %v680 = vpop.f32.mrf.mxu0
    %v681 = vadd.f32 %v166, %v680
    %v682 = vpop.f32.mrf.mxu0
    %v683 = vadd.f32 %v166, %v682
    %684 = vmatmul.bf16.gmra.mxu0 %v497
    %v685 = vpop.f32.mrf.mxu0
    %v686 = vadd.f32 %v166, %v685
    %v687 = vpop.f32.mrf.mxu0
    %v688 = vadd.f32 %v166, %v687
    %689 = vmatmul.bf16.gmra.mxu0 %v500
    %v690 = vpop.f32.mrf.mxu0
    %v691 = vadd.f32 %v166, %v690
    %v692 = vpop.f32.mrf.mxu0
    %v693 = vadd.f32 %v166, %v692
    %694 = vmatmul.bf16.gmra.mxu0 %v503
    %v695 = vpop.f32.mrf.mxu0
    %v696 = vadd.f32 %v166, %v695
    %v697 = vpop.f32.mrf.mxu0
    %v698 = vadd.f32 %v166, %v697
    %699 = vmatmul.bf16.gmra.mxu0 %v506
    %v700 = vpop.f32.mrf.mxu0
    %v701 = vadd.f32 %v166, %v700
    %v702 = vpop.f32.mrf.mxu0
    %v703 = vadd.f32 %v166, %v702
    %704 = vmatmul.bf16.gmra.mxu0 %v509
    %v705 = vpop.f32.mrf.mxu0
    %v706 = vadd.f32 %v166, %v705
    %v707 = vpop.f32.mrf.mxu0
    %v708 = vadd.f32 %v166, %v707
    %709 = vmatmul.bf16.gmra.mxu0 %v512
    %v710 = vpop.f32.mrf.mxu0
    %v711 = vadd.f32 %v166, %v710
    %v712 = vpop.f32.mrf.mxu0
    %v713 = vadd.f32 %v166, %v712
    %714 = vmatmul.bf16.gmra.mxu0 %v515
    %v715 = vpop.f32.mrf.mxu0
    %v716 = vadd.f32 %v166, %v715
    %v717 = vpop.f32.mrf.mxu0
    %v718 = vadd.f32 %v166, %v717
    %719 = vmatmul.bf16.gmra.mxu0 %v518
    %v720 = vpop.f32.mrf.mxu0
    %v721 = vadd.f32 %v166, %v720
    %v722 = vpop.f32.mrf.mxu0
    %v723 = vadd.f32 %v166, %v722
    %724 = vmatmul.bf16.gmra.mxu0 %v521
    %v725 = vpop.f32.mrf.mxu0
    %v726 = vadd.f32 %v166, %v725
    %v727 = vpop.f32.mrf.mxu0
    %v728 = vadd.f32 %v166, %v727
    %729 = vmatmul.bf16.gmra.mxu0 %v524
    %v730 = vpop.f32.mrf.mxu0
    %v731 = vadd.f32 %v166, %v730
    %v732 = vpop.f32.mrf.mxu0
    %v733 = vadd.f32 %v166, %v732
    %734 = vmatmul.bf16.gmra.mxu0 %v527
    %v735 = vpop.f32.mrf.mxu0
    %v736 = vadd.f32 %v166, %v735
    %v737 = vpop.f32.mrf.mxu0
    %v738 = vadd.f32 %v166, %v737
    %739 = vmatmul.bf16.gmra.mxu0 %v530
    %v740 = vpop.f32.mrf.mxu0
    %v741 = vadd.f32 %v166, %v740
    %v742 = vpop.f32.mrf.mxu0
    %v743 = vadd.f32 %v166, %v742
    %744 = vmatmul.bf16.gmra.mxu0 %v533
    %v745 = vpop.f32.mrf.mxu0
    %v746 = vadd.f32 %v166, %v745
    %v747 = vpop.f32.mrf.mxu0
    %v748 = vadd.f32 %v166, %v747
    %749 = vmatmul.bf16.gmra.mxu0 %v536
    %v750 = vpop.f32.mrf.mxu0
    %v751 = vadd.f32 %v166, %v750
    %v752 = vpop.f32.mrf.mxu0
    %v753 = vadd.f32 %v166, %v752
    %754 = vmatmul.bf16.gmra.mxu0 %v539
    %v755 = vpop.f32.mrf.mxu0
    %v756 = vadd.f32 %v166, %v755
    %v757 = vpop.f32.mrf.mxu0
    %v758 = vadd.f32 %v166, %v757
    %759 = vmatmul.bf16.gmra.mxu0 %v542
    %v760 = vpop.f32.mrf.mxu0
    %v761 = vadd.f32 %v166, %v760
    %v762 = vpop.f32.mrf.mxu0
    %v763 = vadd.f32 %v166, %v762
    %764 = vmatmul.bf16.gmra.mxu0 %v545
    %v765 = vpop.f32.mrf.mxu0
    %v766 = vadd.f32 %v166, %v765
    %v767 = vpop.f32.mrf.mxu0
    %v768 = vadd.f32 %v166, %v767
    %769 = vmatmul.bf16.gmra.mxu0 %v548
    %v770 = vpop.f32.mrf.mxu0
    %v771 = vadd.f32 %v166, %v770
    %v772 = vpop.f32.mrf.mxu0
    %v773 = vadd.f32 %v166, %v772
    %774 = vmatmul.bf16.gmra.mxu0 %v551
    %v775 = vpop.f32.mrf.mxu0
    %v776 = vadd.f32 %v166, %v775
    %v777 = vpop.f32.mrf.mxu0
    %v778 = vadd.f32 %v166, %v777
    %779 = vmatmul.bf16.gmra.mxu0 %v554
    %v780 = vpop.f32.mrf.mxu0
    %v781 = vadd.f32 %v166, %v780
    %v782 = vpop.f32.mrf.mxu0
    %v783 = vadd.f32 %v166, %v782
    %784 = vmatmul.bf16.gmra.mxu0 %v557
    %v785 = vpop.f32.mrf.mxu0
    %v786 = vadd.f32 %v166, %v785
    %v787 = vpop.f32.mrf.mxu0
    %v788 = vadd.f32 %v166, %v787
    %789 = vmatmul.bf16.gmra.mxu0 %v560
    %v790 = vpop.f32.mrf.mxu0
    %v791 = vadd.f32 %v166, %v790
    %v792 = vpop.f32.mrf.mxu0
    %v793 = vadd.f32 %v166, %v792
    %794 = vmatmul.bf16.gmra.mxu0 %v563
    %v795 = vpop.f32.mrf.mxu0
    %v796 = vadd.f32 %v166, %v795
    %v797 = vpop.f32.mrf.mxu0
    %v798 = vadd.f32 %v166, %v797
    %799 = vmatmul.bf16.gmra.mxu0 %v566
    %v800 = vpop.f32.mrf.mxu0
    %v801 = vadd.f32 %v166, %v800
    %v802 = vpop.f32.mrf.mxu0
    %v803 = vadd.f32 %v166, %v802
    %804 = vmatmul.bf16.gmra.mxu0 %v569
    %v805 = vpop.f32.mrf.mxu0
    %v806 = vadd.f32 %v166, %v805
    %v807 = vpop.f32.mrf.mxu0
    %v808 = vadd.f32 %v166, %v807
    %809 = vmatmul.bf16.gmra.mxu0 %v572
    %v810 = vpop.f32.mrf.mxu0
    %v811 = vadd.f32 %v166, %v810
    %v812 = vpop.f32.mrf.mxu0
    %v813 = vadd.f32 %v166, %v812
    %814 = vmatmul.bf16.gmra.mxu0 %v575
    %v815 = vpop.f32.mrf.mxu0
    %v816 = vadd.f32 %v166, %v815
    %v817 = vpop.f32.mrf.mxu0
    %v818 = vadd.f32 %v166, %v817
    %819 = vmatmul.bf16.gmra.mxu0 %v578
    %v820 = vpop.f32.mrf.mxu0
    %v821 = vadd.f32 %v166, %v820
    %v822 = vpop.f32.mrf.mxu0
    %v823 = vadd.f32 %v166, %v822
    %824 = vmatmul.bf16.gmra.mxu0 %v581
    %v825 = vpop.f32.mrf.mxu0
    %v826 = vadd.f32 %v166, %v825
    %v827 = vpop.f32.mrf.mxu0
    %v828 = vadd.f32 %v166, %v827
    %829 = vmatmul.bf16.gmra.mxu0 %v584
    %v830 = vpop.f32.mrf.mxu0
    %v831 = vadd.f32 %v166, %v830
    %v832 = vpop.f32.mrf.mxu0
    %v833 = vadd.f32 %v166, %v832
    %834 = vmatmul.bf16.gmra.mxu0 %v587
    %v835 = vpop.f32.mrf.mxu0
    %v836 = vadd.f32 %v166, %v835
    %v837 = vpop.f32.mrf.mxu0
    %v838 = vadd.f32 %v166, %v837
    %839 = vmatmul.bf16.gmra.mxu0 %v590
    %v840 = vpop.f32.mrf.mxu0
    %v841 = vadd.f32 %v166, %v840
    %v842 = vpop.f32.mrf.mxu0
    %v843 = vadd.f32 %v166, %v842
    %844 = vmatmul.bf16.gmra.mxu0 %v593
    %v845 = vpop.f32.mrf.mxu0
    %v846 = vadd.f32 %v166, %v845
    %v847 = vpop.f32.mrf.mxu0
    %v848 = vadd.f32 %v166, %v847
    %849 = vmatmul.bf16.gmra.mxu0 %v596
    %v850 = vpop.f32.mrf.mxu0
    %v851 = vadd.f32 %v166, %v850
    %v852 = vpop.f32.mrf.mxu0
    %v853 = vadd.f32 %v166, %v852
    %854 = vmatmul.bf16.gmra.mxu0 %v599
    %v855 = vpop.f32.mrf.mxu0
    %v856 = vadd.f32 %v166, %v855
    %v857 = vpop.f32.mrf.mxu0
    %v858 = vadd.f32 %v166, %v857
    %859 = vmatmul.bf16.gmra.mxu0 %v602
    %v860 = vpop.f32.mrf.mxu0
    %v861 = vadd.f32 %v166, %v860
    %v862 = vpop.f32.mrf.mxu0
    %v863 = vadd.f32 %v166, %v862
    %864 = vmatmul.bf16.gmra.mxu0 %v605
    %v865 = vpop.f32.mrf.mxu0
    %v866 = vadd.f32 %v166, %v865
    %v867 = vpop.f32.mrf.mxu0
    %v868 = vadd.f32 %v166, %v867
    %869 = vmatmul.bf16.gmra.mxu0 %v608
    %v870 = vpop.f32.mrf.mxu0
    %v871 = vadd.f32 %v166, %v870
    %v872 = vpop.f32.mrf.mxu0
    %v873 = vadd.f32 %v166, %v872
    %874 = vmatmul.bf16.gmra.mxu0 %v611
    %v875 = vpop.f32.mrf.mxu0
    %v876 = vadd.f32 %v166, %v875
    %v877 = vpop.f32.mrf.mxu0
    %v878 = vadd.f32 %v166, %v877
    %879 = vmatmul.bf16.gmra.mxu0 %v614
    %v880 = vpop.f32.mrf.mxu0
    %v881 = vadd.f32 %v166, %v880
    %v882 = vpop.f32.mrf.mxu0
    %v883 = vadd.f32 %v166, %v882
    %884 = vmatmul.bf16.gmra.mxu0 %v617
    %v885 = vpop.f32.mrf.mxu0
    %v886 = vadd.f32 %v166, %v885
    %v887 = vpop.f32.mrf.mxu0
    %v888 = vadd.f32 %v166, %v887
    %889 = vmatmul.bf16.gmra.mxu0 %v620
    %v890 = vpop.f32.mrf.mxu0
    %v891 = vadd.f32 %v166, %v890
    %v892 = vpop.f32.mrf.mxu0
    %v893 = vadd.f32 %v166, %v892
    %894 = vmatmul.bf16.gmra.mxu0 %v623
    %v895 = vpop.f32.mrf.mxu0
    %v896 = vadd.f32 %v166, %v895
    %v897 = vpop.f32.mrf.mxu0
    %v898 = vadd.f32 %v166, %v897
    %899 = vmatmul.bf16.gmra.mxu0 %v626
    %v900 = vpop.f32.mrf.mxu0
    %v901 = vadd.f32 %v166, %v900
    %v902 = vpop.f32.mrf.mxu0
    %v903 = vadd.f32 %v166, %v902
    %904 = vmatmul.bf16.gmra.mxu0 %v629
    %v905 = vpop.f32.mrf.mxu0
    %v906 = vadd.f32 %v166, %v905
    %v907 = vpop.f32.mrf.mxu0
    %v908 = vadd.f32 %v166, %v907
    %909 = vmatmul.bf16.gmra.mxu0 %v632
    %v910 = vpop.f32.mrf.mxu0
    %v911 = vadd.f32 %v166, %v910
    %v912 = vpop.f32.mrf.mxu0
    %v913 = vadd.f32 %v166, %v912
    %914 = vmatmul.bf16.gmra.mxu0 %v635
    %v915 = vpop.f32.mrf.mxu0
    %v916 = vadd.f32 %v166, %v915
    %v917 = vpop.f32.mrf.mxu0
    %v918 = vadd.f32 %v166, %v917
    %919 = vmatmul.bf16.gmra.mxu0 %v638
    %v920 = vpop.f32.mrf.mxu0
    %v921 = vadd.f32 %v166, %v920
    %v922 = vpop.f32.mrf.mxu0
    %v923 = vadd.f32 %v166, %v922
    %924 = vmatmul.bf16.gmra.mxu0 %v641
    %v925 = vpop.f32.mrf.mxu0
    %v926 = vadd.f32 %v166, %v925
    %v927 = vpop.f32.mrf.mxu0
    %v928 = vadd.f32 %v166, %v927
    %929 = vmatmul.bf16.gmra.mxu0 %v644
    %v930 = vpop.f32.mrf.mxu0
    %v931 = vadd.f32 %v166, %v930
    %v932 = vpop.f32.mrf.mxu0
    %v933 = vadd.f32 %v166, %v932
    %934 = vmatmul.bf16.gmra.mxu0 %v647
    %v935 = vpop.f32.mrf.mxu0
    %v936 = vadd.f32 %v166, %v935
    %v937 = vpop.f32.mrf.mxu0
    %v938 = vadd.f32 %v166, %v937
    %939 = vmatmul.bf16.gmra.mxu0 %v650
    %v940 = vpop.f32.mrf.mxu0
    %v941 = vadd.f32 %v166, %v940
    %v942 = vpop.f32.mrf.mxu0
    %v943 = vadd.f32 %v166, %v942
    %944 = vdwg.mxu0
    %v945 = vmax.f32 %v666, 0.0
    %v946 = vmax.f32 %v668, 0.0
    %v947 = vmax.f32 %v671, 0.0
    %v948 = vmax.f32 %v673, 0.0
    %v949 = vmax.f32 %v676, 0.0
    %v950 = vmax.f32 %v678, 0.0
    %v951 = vmax.f32 %v681, 0.0
    %v952 = vmax.f32 %v683, 0.0
    %v953 = vmax.f32 %v686, 0.0
    %v954 = vmax.f32 %v688, 0.0
    %v955 = vmax.f32 %v691, 0.0
    %v956 = vmax.f32 %v693, 0.0
    %v957 = vmax.f32 %v696, 0.0
    %v958 = vmax.f32 %v698, 0.0
    %v959 = vmax.f32 %v701, 0.0
    %v960 = vmax.f32 %v703, 0.0
    %v961 = vmax.f32 %v706, 0.0
    %v962 = vmax.f32 %v708, 0.0
    %v963 = vmax.f32 %v711, 0.0
    %v964 = vmax.f32 %v713, 0.0
    %v965 = vmax.f32 %v716, 0.0
    %v966 = vmax.f32 %v718, 0.0
    %v967 = vmax.f32 %v721, 0.0
    %v968 = vmax.f32 %v723, 0.0
    %v969 = vmax.f32 %v726, 0.0
    %v970 = vmax.f32 %v728, 0.0
    %v971 = vmax.f32 %v731, 0.0
    %v972 = vmax.f32 %v733, 0.0
    %v973 = vmax.f32 %v736, 0.0
    %v974 = vmax.f32 %v738, 0.0
    %v975 = vmax.f32 %v741, 0.0
    %v976 = vmax.f32 %v743, 0.0
    %v977 = vmax.f32 %v746, 0.0
    %v978 = vmax.f32 %v748, 0.0
    %v979 = vmax.f32 %v751, 0.0
    %v980 = vmax.f32 %v753, 0.0
    %v981 = vmax.f32 %v756, 0.0
    %v982 = vmax.f32 %v758, 0.0
    %v983 = vmax.f32 %v761, 0.0
    %v984 = vmax.f32 %v763, 0.0
    %v985 = vmax.f32 %v766, 0.0
    %v986 = vmax.f32 %v768, 0.0
    %v987 = vmax.f32 %v771, 0.0
    %v988 = vmax.f32 %v773, 0.0
    %v989 = vmax.f32 %v776, 0.0
    %v990 = vmax.f32 %v778, 0.0
    %v991 = vmax.f32 %v781, 0.0
    %v992 = vmax.f32 %v783, 0.0
    %v993 = vmax.f32 %v786, 0.0
    %v994 = vmax.f32 %v788, 0.0
    %v995 = vmax.f32 %v791, 0.0
    %v996 = vmax.f32 %v793, 0.0
    %v997 = vmax.f32 %v796, 0.0
    %v998 = vmax.f32 %v798, 0.0
    %v999 = vmax.f32 %v801, 0.0
    %v1000 = vmax.f32 %v803, 0.0
    %v1001 = vmax.f32 %v806, 0.0
    %v1002 = vmax.f32 %v808, 0.0
    %v1003 = vmax.f32 %v811, 0.0
    %v1004 = vmax.f32 %v813, 0.0
    %v1005 = vmax.f32 %v816, 0.0
    %v1006 = vmax.f32 %v818, 0.0
    %v1007 = vmax.f32 %v821, 0.0
    %v1008 = vmax.f32 %v823, 0.0
    %v1009 = vmax.f32 %v826, 0.0
    %v1010 = vmax.f32 %v828, 0.0
    %v1011 = vmax.f32 %v831, 0.0
    %v1012 = vmax.f32 %v833, 0.0
    %v1013 = vmax.f32 %v836, 0.0
    %v1014 = vmax.f32 %v838, 0.0
    %v1015 = vmax.f32 %v841, 0.0
    %v1016 = vmax.f32 %v843, 0.0
    %v1017 = vmax.f32 %v846, 0.0
    %v1018 = vmax.f32 %v848, 0.0
    %v1019 = vmax.f32 %v851, 0.0
    %v1020 = vmax.f32 %v853, 0.0
    %v1021 = vmax.f32 %v856, 0.0
    %v1022 = vmax.f32 %v858, 0.0
    %v1023 = vmax.f32 %v861, 0.0
    %v1024 = vmax.f32 %v863, 0.0
    %v1025 = vmax.f32 %v866, 0.0
    %v1026 = vmax.f32 %v868, 0.0
    %v1027 = vmax.f32 %v871, 0.0
    %v1028 = vmax.f32 %v873, 0.0
    %v1029 = vmax.f32 %v876, 0.0
    %v1030 = vmax.f32 %v878, 0.0
    %v1031 = vmax.f32 %v881, 0.0
    %v1032 = vmax.f32 %v883, 0.0
    %v1033 = vmax.f32 %v886, 0.0
    %v1034 = vmax.f32 %v888, 0.0
    %v1035 = vmax.f32 %v891, 0.0
    %v1036 = vmax.f32 %v893, 0.0
    %v1037 = vmax.f32 %v896, 0.0
    %v1038 = vmax.f32 %v898, 0.0
    %v1039 = vmax.f32 %v901, 0.0
    %v1040 = vmax.f32 %v903, 0.0
    %v1041 = vmax.f32 %v906, 0.0
    %v1042 = vmax.f32 %v908, 0.0
    %v1043 = vmax.f32 %v911, 0.0
    %v1044 = vmax.f32 %v913, 0.0
    %v1045 = vmax.f32 %v916, 0.0
    %v1046 = vmax.f32 %v918, 0.0
    %v1047 = vmax.f32 %v921, 0.0
    %v1048 = vmax.f32 %v923, 0.0
    %v1049 = vmax.f32 %v926, 0.0
    %v1050 = vmax.f32 %v928, 0.0
    %v1051 = vmax.f32 %v931, 0.0
    %v1052 = vmax.f32 %v933, 0.0
    %v1053 = vmax.f32 %v936, 0.0
    %v1054 = vmax.f32 %v938, 0.0
    %v1055 = vmax.f32 %v941, 0.0
    %v1056 = vmax.f32 %v943, 0.0
    %v1057 = vpack.c.bf16 %v945, %v945
    %v1058 = vpack.c.bf16 %v946, %v946
    %v1059 = vpack.c.bf16 %v947, %v947
    %v1060 = vpack.c.bf16 %v948, %v948
    %v1061 = vpack.c.bf16 %v949, %v949
    %v1062 = vpack.c.bf16 %v950, %v950
    %v1063 = vpack.c.bf16 %v951, %v951
    %v1064 = vpack.c.bf16 %v952, %v952
    %v1065 = vpack.c.bf16 %v953, %v953
    %v1066 = vpack.c.bf16 %v954, %v954
    %v1067 = vpack.c.bf16 %v955, %v955
    %v1068 = vpack.c.bf16 %v956, %v956
    %v1069 = vpack.c.bf16 %v957, %v957
    %v1070 = vpack.c.bf16 %v958, %v958
    %v1071 = vpack.c.bf16 %v959, %v959
    %v1072 = vpack.c.bf16 %v960, %v960
    %v1073 = vpack.c.bf16 %v961, %v961
    %v1074 = vpack.c.bf16 %v962, %v962
    %v1075 = vpack.c.bf16 %v963, %v963
    %v1076 = vpack.c.bf16 %v964, %v964
    %v1077 = vpack.c.bf16 %v965, %v965
    %v1078 = vpack.c.bf16 %v966, %v966
    %v1079 = vpack.c.bf16 %v967, %v967
    %v1080 = vpack.c.bf16 %v968, %v968
    %v1081 = vpack.c.bf16 %v969, %v969
    %v1082 = vpack.c.bf16 %v970, %v970
    %v1083 = vpack.c.bf16 %v971, %v971
    %v1084 = vpack.c.bf16 %v972, %v972
    %v1085 = vpack.c.bf16 %v973, %v973
    %v1086 = vpack.c.bf16 %v974, %v974
    %v1087 = vpack.c.bf16 %v975, %v975
    %v1088 = vpack.c.bf16 %v976, %v976
    %v1089 = vpack.c.bf16 %v977, %v977
    %v1090 = vpack.c.bf16 %v978, %v978
    %v1091 = vpack.c.bf16 %v979, %v979
    %v1092 = vpack.c.bf16 %v980, %v980
    %v1093 = vpack.c.bf16 %v981, %v981
    %v1094 = vpack.c.bf16 %v982, %v982
    %v1095 = vpack.c.bf16 %v983, %v983
    %v1096 = vpack.c.bf16 %v984, %v984
    %v1097 = vpack.c.bf16 %v985, %v985
    %v1098 = vpack.c.bf16 %v986, %v986
    %v1099 = vpack.c.bf16 %v987, %v987
    %v1100 = vpack.c.bf16 %v988, %v988
    %v1101 = vpack.c.bf16 %v989, %v989
    %v1102 = vpack.c.bf16 %v990, %v990
    %v1103 = vpack.c.bf16 %v991, %v991
    %v1104 = vpack.c.bf16 %v992, %v992
    %v1105 = vpack.c.bf16 %v993, %v993
    %v1106 = vpack.c.bf16 %v994, %v994
    %v1107 = vpack.c.bf16 %v995, %v995
    %v1108 = vpack.c.bf16 %v996, %v996
    %v1109 = vpack.c.bf16 %v997, %v997
    %v1110 = vpack.c.bf16 %v998, %v998
    %v1111 = vpack.c.bf16 %v999, %v999
    %v1112 = vpack.c.bf16 %v1000, %v1000
    %v1113 = vpack.c.bf16 %v1001, %v1001
    %v1114 = vpack.c.bf16 %v1002, %v1002
    %v1115 = vpack.c.bf16 %v1003, %v1003
    %v1116 = vpack.c.bf16 %v1004, %v1004
    %v1117 = vpack.c.bf16 %v1005, %v1005
    %v1118 = vpack.c.bf16 %v1006, %v1006
    %v1119 = vpack.c.bf16 %v1007, %v1007
    %v1120 = vpack.c.bf16 %v1008, %v1008
    %v1121 = vpack.c.bf16 %v1009, %v1009
    %v1122 = vpack.c.bf16 %v1010, %v1010
    %v1123 = vpack.c.bf16 %v1011, %v1011
    %v1124 = vpack.c.bf16 %v1012, %v1012
    %v1125 = vpack.c.bf16 %v1013, %v1013
    %v1126 = vpack.c.bf16 %v1014, %v1014
    %v1127 = vpack.c.bf16 %v1015, %v1015
    %v1128 = vpack.c.bf16 %v1016, %v1016
    %v1129 = vpack.c.bf16 %v1017, %v1017
    %v1130 = vpack.c.bf16 %v1018, %v1018
    %v1131 = vpack.c.bf16 %v1019, %v1019
    %v1132 = vpack.c.bf16 %v1020, %v1020
    %v1133 = vpack.c.bf16 %v1021, %v1021
    %v1134 = vpack.c.bf16 %v1022, %v1022
    %v1135 = vpack.c.bf16 %v1023, %v1023
    %v1136 = vpack.c.bf16 %v1024, %v1024
    %v1137 = vpack.c.bf16 %v1025, %v1025
    %v1138 = vpack.c.bf16 %v1026, %v1026
    %v1139 = vpack.c.bf16 %v1027, %v1027
    %v1140 = vpack.c.bf16 %v1028, %v1028
    %v1141 = vpack.c.bf16 %v1029, %v1029
    %v1142 = vpack.c.bf16 %v1030, %v1030
    %v1143 = vpack.c.bf16 %v1031, %v1031
    %v1144 = vpack.c.bf16 %v1032, %v1032
    %v1145 = vpack.c.bf16 %v1033, %v1033
    %v1146 = vpack.c.bf16 %v1034, %v1034
    %v1147 = vpack.c.bf16 %v1035, %v1035
    %v1148 = vpack.c.bf16 %v1036, %v1036
    %v1149 = vpack.c.bf16 %v1037, %v1037
    %v1150 = vpack.c.bf16 %v1038, %v1038
    %v1151 = vpack.c.bf16 %v1039, %v1039
    %v1152 = vpack.c.bf16 %v1040, %v1040
    %v1153 = vpack.c.bf16 %v1041, %v1041
    %v1154 = vpack.c.bf16 %v1042, %v1042
    %v1155 = vpack.c.bf16 %v1043, %v1043
    %v1156 = vpack.c.bf16 %v1044, %v1044
    %v1157 = vpack.c.bf16 %v1045, %v1045
    %v1158 = vpack.c.bf16 %v1046, %v1046
    %v1159 = vpack.c.bf16 %v1047, %v1047
    %v1160 = vpack.c.bf16 %v1048, %v1048
    %v1161 = vpack.c.bf16 %v1049, %v1049
    %v1162 = vpack.c.bf16 %v1050, %v1050
    %v1163 = vpack.c.bf16 %v1051, %v1051
    %v1164 = vpack.c.bf16 %v1052, %v1052
    %v1165 = vpack.c.bf16 %v1053, %v1053
    %v1166 = vpack.c.bf16 %v1054, %v1054
    %v1167 = vpack.c.bf16 %v1055, %v1055
    %v1168 = vpack.c.bf16 %v1056, %v1056
    %v1169 = vunpack.c.l.bf16 %v1057
    %v1170 = vunpack.c.l.bf16 %v1058
    %v1171 = vunpack.c.l.bf16 %v1059
    %v1172 = vunpack.c.l.bf16 %v1060
    %v1173 = vunpack.c.l.bf16 %v1061
    %v1174 = vunpack.c.l.bf16 %v1062
    %v1175 = vunpack.c.l.bf16 %v1063
    %v1176 = vunpack.c.l.bf16 %v1064
    %v1177 = vunpack.c.l.bf16 %v1065
    %v1178 = vunpack.c.l.bf16 %v1066
    %v1179 = vunpack.c.l.bf16 %v1067
    %v1180 = vunpack.c.l.bf16 %v1068
    %v1181 = vunpack.c.l.bf16 %v1069
    %v1182 = vunpack.c.l.bf16 %v1070
    %v1183 = vunpack.c.l.bf16 %v1071
    %v1184 = vunpack.c.l.bf16 %v1072
    %v1185 = vunpack.c.l.bf16 %v1073
    %v1186 = vunpack.c.l.bf16 %v1074
    %v1187 = vunpack.c.l.bf16 %v1075
    %v1188 = vunpack.c.l.bf16 %v1076
    %v1189 = vunpack.c.l.bf16 %v1077
    %v1190 = vunpack.c.l.bf16 %v1078
    %v1191 = vunpack.c.l.bf16 %v1079
    %v1192 = vunpack.c.l.bf16 %v1080
    %v1193 = vunpack.c.l.bf16 %v1081
    %v1194 = vunpack.c.l.bf16 %v1082
    %v1195 = vunpack.c.l.bf16 %v1083
    %v1196 = vunpack.c.l.bf16 %v1084
    %v1197 = vunpack.c.l.bf16 %v1085
    %v1198 = vunpack.c.l.bf16 %v1086
    %v1199 = vunpack.c.l.bf16 %v1087
    %v1200 = vunpack.c.l.bf16 %v1088
    %v1201 = vunpack.c.l.bf16 %v1089
    %v1202 = vunpack.c.l.bf16 %v1090
    %v1203 = vunpack.c.l.bf16 %v1091
    %v1204 = vunpack.c.l.bf16 %v1092
    %v1205 = vunpack.c.l.bf16 %v1093
    %v1206 = vunpack.c.l.bf16 %v1094
    %v1207 = vunpack.c.l.bf16 %v1095
    %v1208 = vunpack.c.l.bf16 %v1096
    %v1209 = vunpack.c.l.bf16 %v1097
    %v1210 = vunpack.c.l.bf16 %v1098
    %v1211 = vunpack.c.l.bf16 %v1099
    %v1212 = vunpack.c.l.bf16 %v1100
    %v1213 = vunpack.c.l.bf16 %v1101
    %v1214 = vunpack.c.l.bf16 %v1102
    %v1215 = vunpack.c.l.bf16 %v1103
    %v1216 = vunpack.c.l.bf16 %v1104
    %v1217 = vunpack.c.l.bf16 %v1105
    %v1218 = vunpack.c.l.bf16 %v1106
    %v1219 = vunpack.c.l.bf16 %v1107
    %v1220 = vunpack.c.l.bf16 %v1108
    %v1221 = vunpack.c.l.bf16 %v1109
    %v1222 = vunpack.c.l.bf16 %v1110
    %v1223 = vunpack.c.l.bf16 %v1111
    %v1224 = vunpack.c.l.bf16 %v1112
    %v1225 = vunpack.c.l.bf16 %v1113
    %v1226 = vunpack.c.l.bf16 %v1114
    %v1227 = vunpack.c.l.bf16 %v1115
    %v1228 = vunpack.c.l.bf16 %v1116
    %v1229 = vunpack.c.l.bf16 %v1117
    %v1230 = vunpack.c.l.bf16 %v1118
    %v1231 = vunpack.c.l.bf16 %v1119
    %v1232 = vunpack.c.l.bf16 %v1120
    %v1233 = vunpack.c.l.bf16 %v1121
    %v1234 = vunpack.c.l.bf16 %v1122
    %v1235 = vunpack.c.l.bf16 %v1123
    %v1236 = vunpack.c.l.bf16 %v1124
    %v1237 = vunpack.c.l.bf16 %v1125
    %v1238 = vunpack.c.l.bf16 %v1126
    %v1239 = vunpack.c.l.bf16 %v1127
    %v1240 = vunpack.c.l.bf16 %v1128
    %v1241 = vunpack.c.l.bf16 %v1129
    %v1242 = vunpack.c.l.bf16 %v1130
    %v1243 = vunpack.c.l.bf16 %v1131
    %v1244 = vunpack.c.l.bf16 %v1132
    %v1245 = vunpack.c.l.bf16 %v1133
    %v1246 = vunpack.c.l.bf16 %v1134
    %v1247 = vunpack.c.l.bf16 %v1135
    %v1248 = vunpack.c.l.bf16 %v1136
    %v1249 = vunpack.c.l.bf16 %v1137
    %v1250 = vunpack.c.l.bf16 %v1138
    %v1251 = vunpack.c.l.bf16 %v1139
    %v1252 = vunpack.c.l.bf16 %v1140
    %v1253 = vunpack.c.l.bf16 %v1141
    %v1254 = vunpack.c.l.bf16 %v1142
    %v1255 = vunpack.c.l.bf16 %v1143
    %v1256 = vunpack.c.l.bf16 %v1144
    %v1257 = vunpack.c.l.bf16 %v1145
    %v1258 = vunpack.c.l.bf16 %v1146
    %v1259 = vunpack.c.l.bf16 %v1147
    %v1260 = vunpack.c.l.bf16 %v1148
    %v1261 = vunpack.c.l.bf16 %v1149
    %v1262 = vunpack.c.l.bf16 %v1150
    %v1263 = vunpack.c.l.bf16 %v1151
    %v1264 = vunpack.c.l.bf16 %v1152
    %v1265 = vunpack.c.l.bf16 %v1153
    %v1266 = vunpack.c.l.bf16 %v1154
    %v1267 = vunpack.c.l.bf16 %v1155
    %v1268 = vunpack.c.l.bf16 %v1156
    %v1269 = vunpack.c.l.bf16 %v1157
    %v1270 = vunpack.c.l.bf16 %v1158
    %v1271 = vunpack.c.l.bf16 %v1159
    %v1272 = vunpack.c.l.bf16 %v1160
    %v1273 = vunpack.c.l.bf16 %v1161
    %v1274 = vunpack.c.l.bf16 %v1162
    %v1275 = vunpack.c.l.bf16 %v1163
    %v1276 = vunpack.c.l.bf16 %v1164
    %v1277 = vunpack.c.l.bf16 %v1165
    %v1278 = vunpack.c.l.bf16 %v1166
    %v1279 = vunpack.c.l.bf16 %v1167
    %v1280 = vunpack.c.l.bf16 %v1168
    %1393 = vrot.lane.b32.xlu0 %v1169, 112
    %v1394 = vpop.permute.xlu0 %1393
    %1395 = vrot.lane.b32.xlu0 %v1170, 112
    %v1396 = vpop.permute.xlu0 %1395
    %1397 = vrot.lane.b32.xlu0 %v1171, 112
    %v1398 = vpop.permute.xlu0 %1397
    %1399 = vrot.lane.b32.xlu0 %v1172, 112
    %v1400 = vpop.permute.xlu0 %1399
    %1401 = vrot.lane.b32.xlu0 %v1173, 112
    %v1402 = vpop.permute.xlu0 %1401
    %1403 = vrot.lane.b32.xlu0 %v1174, 112
    %v1404 = vpop.permute.xlu0 %1403
    %1405 = vrot.lane.b32.xlu0 %v1175, 112
    %v1406 = vpop.permute.xlu0 %1405
    %1407 = vrot.lane.b32.xlu0 %v1176, 112
    %v1408 = vpop.permute.xlu0 %1407
    %1409 = vrot.lane.b32.xlu0 %v1177, 112
    %v1410 = vpop.permute.xlu0 %1409
    %1411 = vrot.lane.b32.xlu0 %v1178, 112
    %v1412 = vpop.permute.xlu0 %1411
    %1413 = vrot.lane.b32.xlu0 %v1179, 112
    %v1414 = vpop.permute.xlu0 %1413
    %1415 = vrot.lane.b32.xlu0 %v1180, 112
    %v1416 = vpop.permute.xlu0 %1415
    %1417 = vrot.lane.b32.xlu0 %v1181, 112
    %v1418 = vpop.permute.xlu0 %1417
    %1419 = vrot.lane.b32.xlu0 %v1182, 112
    %v1420 = vpop.permute.xlu0 %1419
    %1421 = vrot.lane.b32.xlu0 %v1183, 112
    %v1422 = vpop.permute.xlu0 %1421
    %1423 = vrot.lane.b32.xlu0 %v1184, 112
    %v1424 = vpop.permute.xlu0 %1423
    %1425 = vrot.lane.b32.xlu0 %v1185, 112
    %v1426 = vpop.permute.xlu0 %1425
    %1427 = vrot.lane.b32.xlu0 %v1186, 112
    %v1428 = vpop.permute.xlu0 %1427
    %1429 = vrot.lane.b32.xlu0 %v1187, 112
    %v1430 = vpop.permute.xlu0 %1429
    %1431 = vrot.lane.b32.xlu0 %v1188, 112
    %v1432 = vpop.permute.xlu0 %1431
    %1433 = vrot.lane.b32.xlu0 %v1189, 112
    %v1434 = vpop.permute.xlu0 %1433
    %1435 = vrot.lane.b32.xlu0 %v1190, 112
    %v1436 = vpop.permute.xlu0 %1435
    %1437 = vrot.lane.b32.xlu0 %v1191, 112
    %v1438 = vpop.permute.xlu0 %1437
    %1439 = vrot.lane.b32.xlu0 %v1192, 112
    %v1440 = vpop.permute.xlu0 %1439
    %1441 = vrot.lane.b32.xlu0 %v1193, 112
    %v1442 = vpop.permute.xlu0 %1441
    %1443 = vrot.lane.b32.xlu0 %v1194, 112
    %v1444 = vpop.permute.xlu0 %1443
    %1445 = vrot.lane.b32.xlu0 %v1195, 112
    %v1446 = vpop.permute.xlu0 %1445
    %1447 = vrot.lane.b32.xlu0 %v1196, 112
    %v1448 = vpop.permute.xlu0 %1447
    %1449 = vrot.lane.b32.xlu0 %v1197, 112
    %v1450 = vpop.permute.xlu0 %1449
    %1451 = vrot.lane.b32.xlu0 %v1198, 112
    %v1452 = vpop.permute.xlu0 %1451
    %1453 = vrot.lane.b32.xlu0 %v1199, 112
    %v1454 = vpop.permute.xlu0 %1453
    %1455 = vrot.lane.b32.xlu0 %v1200, 112
    %v1456 = vpop.permute.xlu0 %1455
    %1457 = vrot.lane.b32.xlu0 %v1201, 112
    %v1458 = vpop.permute.xlu0 %1457
    %1459 = vrot.lane.b32.xlu0 %v1202, 112
    %v1460 = vpop.permute.xlu0 %1459
    %1461 = vrot.lane.b32.xlu0 %v1203, 112
    %v1462 = vpop.permute.xlu0 %1461
    %1463 = vrot.lane.b32.xlu0 %v1204, 112
    %v1464 = vpop.permute.xlu0 %1463
    %1465 = vrot.lane.b32.xlu0 %v1205, 112
    %v1466 = vpop.permute.xlu0 %1465
    %1467 = vrot.lane.b32.xlu0 %v1206, 112
    %v1468 = vpop.permute.xlu0 %1467
    %1469 = vrot.lane.b32.xlu0 %v1207, 112
    %v1470 = vpop.permute.xlu0 %1469
    %1471 = vrot.lane.b32.xlu0 %v1208, 112
    %v1472 = vpop.permute.xlu0 %1471
    %1473 = vrot.lane.b32.xlu0 %v1209, 112
    %v1474 = vpop.permute.xlu0 %1473
    %1475 = vrot.lane.b32.xlu0 %v1210, 112
    %v1476 = vpop.permute.xlu0 %1475
    %1477 = vrot.lane.b32.xlu0 %v1211, 112
    %v1478 = vpop.permute.xlu0 %1477
    %1479 = vrot.lane.b32.xlu0 %v1212, 112
    %v1480 = vpop.permute.xlu0 %1479
    %1481 = vrot.lane.b32.xlu0 %v1213, 112
    %v1482 = vpop.permute.xlu0 %1481
    %1483 = vrot.lane.b32.xlu0 %v1214, 112
    %v1484 = vpop.permute.xlu0 %1483
    %1485 = vrot.lane.b32.xlu0 %v1215, 112
    %v1486 = vpop.permute.xlu0 %1485
    %1487 = vrot.lane.b32.xlu0 %v1216, 112
    %v1488 = vpop.permute.xlu0 %1487
    %1489 = vrot.lane.b32.xlu0 %v1217, 112
    %v1490 = vpop.permute.xlu0 %1489
    %1491 = vrot.lane.b32.xlu0 %v1218, 112
    %v1492 = vpop.permute.xlu0 %1491
    %1493 = vrot.lane.b32.xlu0 %v1219, 112
    %v1494 = vpop.permute.xlu0 %1493
    %1495 = vrot.lane.b32.xlu0 %v1220, 112
    %v1496 = vpop.permute.xlu0 %1495
    %1497 = vrot.lane.b32.xlu0 %v1221, 112
    %v1498 = vpop.permute.xlu0 %1497
    %1499 = vrot.lane.b32.xlu0 %v1222, 112
    %v1500 = vpop.permute.xlu0 %1499
    %1501 = vrot.lane.b32.xlu0 %v1223, 112
    %v1502 = vpop.permute.xlu0 %1501
    %1503 = vrot.lane.b32.xlu0 %v1224, 112
    %v1504 = vpop.permute.xlu0 %1503
    %1505 = vrot.lane.b32.xlu0 %v1225, 112
    %v1506 = vpop.permute.xlu0 %1505
    %1507 = vrot.lane.b32.xlu0 %v1226, 112
    %v1508 = vpop.permute.xlu0 %1507
    %1509 = vrot.lane.b32.xlu0 %v1227, 112
    %v1510 = vpop.permute.xlu0 %1509
    %1511 = vrot.lane.b32.xlu0 %v1228, 112
    %v1512 = vpop.permute.xlu0 %1511
    %1513 = vrot.lane.b32.xlu0 %v1229, 112
    %v1514 = vpop.permute.xlu0 %1513
    %1515 = vrot.lane.b32.xlu0 %v1230, 112
    %v1516 = vpop.permute.xlu0 %1515
    %1517 = vrot.lane.b32.xlu0 %v1231, 112
    %v1518 = vpop.permute.xlu0 %1517
    %1519 = vrot.lane.b32.xlu0 %v1232, 112
    %v1520 = vpop.permute.xlu0 %1519
    %1521 = vrot.lane.b32.xlu0 %v1233, 112
    %v1522 = vpop.permute.xlu0 %1521
    %1523 = vrot.lane.b32.xlu0 %v1234, 112
    %v1524 = vpop.permute.xlu0 %1523
    %1525 = vrot.lane.b32.xlu0 %v1235, 112
    %v1526 = vpop.permute.xlu0 %1525
    %1527 = vrot.lane.b32.xlu0 %v1236, 112
    %v1528 = vpop.permute.xlu0 %1527
    %1529 = vrot.lane.b32.xlu0 %v1237, 112
    %v1530 = vpop.permute.xlu0 %1529
    %1531 = vrot.lane.b32.xlu0 %v1238, 112
    %v1532 = vpop.permute.xlu0 %1531
    %1533 = vrot.lane.b32.xlu0 %v1239, 112
    %v1534 = vpop.permute.xlu0 %1533
    %1535 = vrot.lane.b32.xlu0 %v1240, 112
    %v1536 = vpop.permute.xlu0 %1535
    %1537 = vrot.lane.b32.xlu0 %v1241, 112
    %v1538 = vpop.permute.xlu0 %1537
    %1539 = vrot.lane.b32.xlu0 %v1242, 112
    %v1540 = vpop.permute.xlu0 %1539
    %1541 = vrot.lane.b32.xlu0 %v1243, 112
    %v1542 = vpop.permute.xlu0 %1541
    %1543 = vrot.lane.b32.xlu0 %v1244, 112
    %v1544 = vpop.permute.xlu0 %1543
    %1545 = vrot.lane.b32.xlu0 %v1245, 112
    %v1546 = vpop.permute.xlu0 %1545
    %1547 = vrot.lane.b32.xlu0 %v1246, 112
    %v1548 = vpop.permute.xlu0 %1547
    %1549 = vrot.lane.b32.xlu0 %v1247, 112
    %v1550 = vpop.permute.xlu0 %1549
    %1551 = vrot.lane.b32.xlu0 %v1248, 112
    %v1552 = vpop.permute.xlu0 %1551
    %1553 = vrot.lane.b32.xlu0 %v1249, 112
    %v1554 = vpop.permute.xlu0 %1553
    %1555 = vrot.lane.b32.xlu0 %v1250, 112
    %v1556 = vpop.permute.xlu0 %1555
    %1557 = vrot.lane.b32.xlu0 %v1251, 112
    %v1558 = vpop.permute.xlu0 %1557
    %1559 = vrot.lane.b32.xlu0 %v1252, 112
    %v1560 = vpop.permute.xlu0 %1559
    %1561 = vrot.lane.b32.xlu0 %v1253, 112
    %v1562 = vpop.permute.xlu0 %1561
    %1563 = vrot.lane.b32.xlu0 %v1254, 112
    %v1564 = vpop.permute.xlu0 %1563
    %1565 = vrot.lane.b32.xlu0 %v1255, 112
    %v1566 = vpop.permute.xlu0 %1565
    %1567 = vrot.lane.b32.xlu0 %v1256, 112
    %v1568 = vpop.permute.xlu0 %1567
    %1569 = vrot.lane.b32.xlu0 %v1257, 112
    %v1570 = vpop.permute.xlu0 %1569
    %1571 = vrot.lane.b32.xlu0 %v1258, 112
    %v1572 = vpop.permute.xlu0 %1571
    %1573 = vrot.lane.b32.xlu0 %v1259, 112
    %v1574 = vpop.permute.xlu0 %1573
    %1575 = vrot.lane.b32.xlu0 %v1260, 112
    %v1576 = vpop.permute.xlu0 %1575
    %1577 = vrot.lane.b32.xlu0 %v1261, 112
    %v1578 = vpop.permute.xlu0 %1577
    %1579 = vrot.lane.b32.xlu0 %v1262, 112
    %v1580 = vpop.permute.xlu0 %1579
    %1581 = vrot.lane.b32.xlu0 %v1263, 112
    %v1582 = vpop.permute.xlu0 %1581
    %1583 = vrot.lane.b32.xlu0 %v1264, 112
    %v1584 = vpop.permute.xlu0 %1583
    %1585 = vrot.lane.b32.xlu0 %v1265, 112
    %v1586 = vpop.permute.xlu0 %1585
    %1587 = vrot.lane.b32.xlu0 %v1266, 112
    %v1588 = vpop.permute.xlu0 %1587
    %1589 = vrot.lane.b32.xlu0 %v1267, 112
    %v1590 = vpop.permute.xlu0 %1589
    %1591 = vrot.lane.b32.xlu0 %v1268, 112
    %v1592 = vpop.permute.xlu0 %1591
    %1593 = vrot.lane.b32.xlu0 %v1269, 112
    %v1594 = vpop.permute.xlu0 %1593
    %1595 = vrot.lane.b32.xlu0 %v1270, 112
    %v1596 = vpop.permute.xlu0 %1595
    %1597 = vrot.lane.b32.xlu0 %v1271, 112
    %v1598 = vpop.permute.xlu0 %1597
    %1599 = vrot.lane.b32.xlu0 %v1272, 112
    %v1600 = vpop.permute.xlu0 %1599
    %1601 = vrot.lane.b32.xlu0 %v1273, 112
    %v1602 = vpop.permute.xlu0 %1601
    %1603 = vrot.lane.b32.xlu0 %v1274, 112
    %v1604 = vpop.permute.xlu0 %1603
    %1605 = vrot.lane.b32.xlu0 %v1275, 112
    %v1606 = vpop.permute.xlu0 %1605
    %1607 = vrot.lane.b32.xlu0 %v1276, 112
    %v1608 = vpop.permute.xlu0 %1607
    %1609 = vrot.lane.b32.xlu0 %v1277, 112
    %v1610 = vpop.permute.xlu0 %1609
    %1611 = vrot.lane.b32.xlu0 %v1278, 112
    %v1612 = vpop.permute.xlu0 %1611
    %1613 = vrot.lane.b32.xlu0 %v1279, 112
    %v1614 = vpop.permute.xlu0 %1613
    %1615 = vrot.lane.b32.xlu0 %v1280, 112
    %v1616 = vpop.permute.xlu0 %1615
    %v1729 = vmax.f32 %v1169, %v1394
    %v1730 = vmax.f32 %v1170, %v1396
    %v1731 = vmax.f32 %v1171, %v1398
    %v1732 = vmax.f32 %v1172, %v1400
    %v1733 = vmax.f32 %v1173, %v1402
    %v1734 = vmax.f32 %v1174, %v1404
    %v1735 = vmax.f32 %v1175, %v1406
    %v1736 = vmax.f32 %v1176, %v1408
    %v1737 = vmax.f32 %v1177, %v1410
    %v1738 = vmax.f32 %v1178, %v1412
    %v1739 = vmax.f32 %v1179, %v1414
    %v1740 = vmax.f32 %v1180, %v1416
    %v1741 = vmax.f32 %v1181, %v1418
    %v1742 = vmax.f32 %v1182, %v1420
    %v1743 = vmax.f32 %v1183, %v1422
    %v1744 = vmax.f32 %v1184, %v1424
    %v1745 = vmax.f32 %v1185, %v1426
    %v1746 = vmax.f32 %v1186, %v1428
    %v1747 = vmax.f32 %v1187, %v1430
    %v1748 = vmax.f32 %v1188, %v1432
    %v1749 = vmax.f32 %v1189, %v1434
    %v1750 = vmax.f32 %v1190, %v1436
    %v1751 = vmax.f32 %v1191, %v1438
    %v1752 = vmax.f32 %v1192, %v1440
    %v1753 = vmax.f32 %v1193, %v1442
    %v1754 = vmax.f32 %v1194, %v1444
    %v1755 = vmax.f32 %v1195, %v1446
    %v1756 = vmax.f32 %v1196, %v1448
    %v1757 = vmax.f32 %v1197, %v1450
    %v1758 = vmax.f32 %v1198, %v1452
    %v1759 = vmax.f32 %v1199, %v1454
    %v1760 = vmax.f32 %v1200, %v1456
    %v1761 = vmax.f32 %v1201, %v1458
    %v1762 = vmax.f32 %v1202, %v1460
    %v1763 = vmax.f32 %v1203, %v1462
    %v1764 = vmax.f32 %v1204, %v1464
    %v1765 = vmax.f32 %v1205, %v1466
    %v1766 = vmax.f32 %v1206, %v1468
    %v1767 = vmax.f32 %v1207, %v1470
    %v1768 = vmax.f32 %v1208, %v1472
    %v1769 = vmax.f32 %v1209, %v1474
    %v1770 = vmax.f32 %v1210, %v1476
    %v1771 = vmax.f32 %v1211, %v1478
    %v1772 = vmax.f32 %v1212, %v1480
    %v1773 = vmax.f32 %v1213, %v1482
    %v1774 = vmax.f32 %v1214, %v1484
    %v1775 = vmax.f32 %v1215, %v1486
    %v1776 = vmax.f32 %v1216, %v1488
    %v1777 = vmax.f32 %v1217, %v1490
    %v1778 = vmax.f32 %v1218, %v1492
    %v1779 = vmax.f32 %v1219, %v1494
    %v1780 = vmax.f32 %v1220, %v1496
    %v1781 = vmax.f32 %v1221, %v1498
    %v1782 = vmax.f32 %v1222, %v1500
    %v1783 = vmax.f32 %v1223, %v1502
    %v1784 = vmax.f32 %v1224, %v1504
    %v1785 = vmax.f32 %v1225, %v1506
    %v1786 = vmax.f32 %v1226, %v1508
    %v1787 = vmax.f32 %v1227, %v1510
    %v1788 = vmax.f32 %v1228, %v1512
    %v1789 = vmax.f32 %v1229, %v1514
    %v1790 = vmax.f32 %v1230, %v1516
    %v1791 = vmax.f32 %v1231, %v1518
    %v1792 = vmax.f32 %v1232, %v1520
    %v1793 = vmax.f32 %v1233, %v1522
    %v1794 = vmax.f32 %v1234, %v1524
    %v1795 = vmax.f32 %v1235, %v1526
    %v1796 = vmax.f32 %v1236, %v1528
    %v1797 = vmax.f32 %v1237, %v1530
    %v1798 = vmax.f32 %v1238, %v1532
    %v1799 = vmax.f32 %v1239, %v1534
    %v1800 = vmax.f32 %v1240, %v1536
    %v1801 = vmax.f32 %v1241, %v1538
    %v1802 = vmax.f32 %v1242, %v1540
    %v1803 = vmax.f32 %v1243, %v1542
    %v1804 = vmax.f32 %v1244, %v1544
    %v1805 = vmax.f32 %v1245, %v1546
    %v1806 = vmax.f32 %v1246, %v1548
    %v1807 = vmax.f32 %v1247, %v1550
    %v1808 = vmax.f32 %v1248, %v1552
    %v1809 = vmax.f32 %v1249, %v1554
    %v1810 = vmax.f32 %v1250, %v1556
    %v1811 = vmax.f32 %v1251, %v1558
    %v1812 = vmax.f32 %v1252, %v1560
    %v1813 = vmax.f32 %v1253, %v1562
    %v1814 = vmax.f32 %v1254, %v1564
    %v1815 = vmax.f32 %v1255, %v1566
    %v1816 = vmax.f32 %v1256, %v1568
    %v1817 = vmax.f32 %v1257, %v1570
    %v1818 = vmax.f32 %v1258, %v1572
    %v1819 = vmax.f32 %v1259, %v1574
    %v1820 = vmax.f32 %v1260, %v1576
    %v1821 = vmax.f32 %v1261, %v1578
    %v1822 = vmax.f32 %v1262, %v1580
    %v1823 = vmax.f32 %v1263, %v1582
    %v1824 = vmax.f32 %v1264, %v1584
    %v1825 = vmax.f32 %v1265, %v1586
    %v1826 = vmax.f32 %v1266, %v1588
    %v1827 = vmax.f32 %v1267, %v1590
    %v1828 = vmax.f32 %v1268, %v1592
    %v1829 = vmax.f32 %v1269, %v1594
    %v1830 = vmax.f32 %v1270, %v1596
    %v1831 = vmax.f32 %v1271, %v1598
    %v1832 = vmax.f32 %v1272, %v1600
    %v1833 = vmax.f32 %v1273, %v1602
    %v1834 = vmax.f32 %v1274, %v1604
    %v1835 = vmax.f32 %v1275, %v1606
    %v1836 = vmax.f32 %v1276, %v1608
    %v1837 = vmax.f32 %v1277, %v1610
    %v1838 = vmax.f32 %v1278, %v1612
    %v1839 = vmax.f32 %v1279, %v1614
    %v1840 = vmax.f32 %v1280, %v1616
    %v1841 = vpack.c.bf16 %v1729, %v1729
    %v1842 = vpack.c.bf16 %v1730, %v1730
    %v1843 = vpack.c.bf16 %v1731, %v1731
    %v1844 = vpack.c.bf16 %v1732, %v1732
    %v1845 = vpack.c.bf16 %v1733, %v1733
    %v1846 = vpack.c.bf16 %v1734, %v1734
    %v1847 = vpack.c.bf16 %v1735, %v1735
    %v1848 = vpack.c.bf16 %v1736, %v1736
    %v1849 = vpack.c.bf16 %v1737, %v1737
    %v1850 = vpack.c.bf16 %v1738, %v1738
    %v1851 = vpack.c.bf16 %v1739, %v1739
    %v1852 = vpack.c.bf16 %v1740, %v1740
    %v1853 = vpack.c.bf16 %v1741, %v1741
    %v1854 = vpack.c.bf16 %v1742, %v1742
    %v1855 = vpack.c.bf16 %v1743, %v1743
    %v1856 = vpack.c.bf16 %v1744, %v1744
    %v1857 = vpack.c.bf16 %v1745, %v1745
    %v1858 = vpack.c.bf16 %v1746, %v1746
    %v1859 = vpack.c.bf16 %v1747, %v1747
    %v1860 = vpack.c.bf16 %v1748, %v1748
    %v1861 = vpack.c.bf16 %v1749, %v1749
    %v1862 = vpack.c.bf16 %v1750, %v1750
    %v1863 = vpack.c.bf16 %v1751, %v1751
    %v1864 = vpack.c.bf16 %v1752, %v1752
    %v1865 = vpack.c.bf16 %v1753, %v1753
    %v1866 = vpack.c.bf16 %v1754, %v1754
    %v1867 = vpack.c.bf16 %v1755, %v1755
    %v1868 = vpack.c.bf16 %v1756, %v1756
    %v1869 = vpack.c.bf16 %v1757, %v1757
    %v1870 = vpack.c.bf16 %v1758, %v1758
    %v1871 = vpack.c.bf16 %v1759, %v1759
    %v1872 = vpack.c.bf16 %v1760, %v1760
    %v1873 = vpack.c.bf16 %v1761, %v1761
    %v1874 = vpack.c.bf16 %v1762, %v1762
    %v1875 = vpack.c.bf16 %v1763, %v1763
    %v1876 = vpack.c.bf16 %v1764, %v1764
    %v1877 = vpack.c.bf16 %v1765, %v1765
    %v1878 = vpack.c.bf16 %v1766, %v1766
    %v1879 = vpack.c.bf16 %v1767, %v1767
    %v1880 = vpack.c.bf16 %v1768, %v1768
    %v1881 = vpack.c.bf16 %v1769, %v1769
    %v1882 = vpack.c.bf16 %v1770, %v1770
    %v1883 = vpack.c.bf16 %v1771, %v1771
    %v1884 = vpack.c.bf16 %v1772, %v1772
    %v1885 = vpack.c.bf16 %v1773, %v1773
    %v1886 = vpack.c.bf16 %v1774, %v1774
    %v1887 = vpack.c.bf16 %v1775, %v1775
    %v1888 = vpack.c.bf16 %v1776, %v1776
    %v1889 = vpack.c.bf16 %v1777, %v1777
    %v1890 = vpack.c.bf16 %v1778, %v1778
    %v1891 = vpack.c.bf16 %v1779, %v1779
    %v1892 = vpack.c.bf16 %v1780, %v1780
    %v1893 = vpack.c.bf16 %v1781, %v1781
    %v1894 = vpack.c.bf16 %v1782, %v1782
    %v1895 = vpack.c.bf16 %v1783, %v1783
    %v1896 = vpack.c.bf16 %v1784, %v1784
    %v1897 = vpack.c.bf16 %v1785, %v1785
    %v1898 = vpack.c.bf16 %v1786, %v1786
    %v1899 = vpack.c.bf16 %v1787, %v1787
    %v1900 = vpack.c.bf16 %v1788, %v1788
    %v1901 = vpack.c.bf16 %v1789, %v1789
    %v1902 = vpack.c.bf16 %v1790, %v1790
    %v1903 = vpack.c.bf16 %v1791, %v1791
    %v1904 = vpack.c.bf16 %v1792, %v1792
    %v1905 = vpack.c.bf16 %v1793, %v1793
    %v1906 = vpack.c.bf16 %v1794, %v1794
    %v1907 = vpack.c.bf16 %v1795, %v1795
    %v1908 = vpack.c.bf16 %v1796, %v1796
    %v1909 = vpack.c.bf16 %v1797, %v1797
    %v1910 = vpack.c.bf16 %v1798, %v1798
    %v1911 = vpack.c.bf16 %v1799, %v1799
    %v1912 = vpack.c.bf16 %v1800, %v1800
    %v1913 = vpack.c.bf16 %v1801, %v1801
    %v1914 = vpack.c.bf16 %v1802, %v1802
    %v1915 = vpack.c.bf16 %v1803, %v1803
    %v1916 = vpack.c.bf16 %v1804, %v1804
    %v1917 = vpack.c.bf16 %v1805, %v1805
    %v1918 = vpack.c.bf16 %v1806, %v1806
    %v1919 = vpack.c.bf16 %v1807, %v1807
    %v1920 = vpack.c.bf16 %v1808, %v1808
    %v1921 = vpack.c.bf16 %v1809, %v1809
    %v1922 = vpack.c.bf16 %v1810, %v1810
    %v1923 = vpack.c.bf16 %v1811, %v1811
    %v1924 = vpack.c.bf16 %v1812, %v1812
    %v1925 = vpack.c.bf16 %v1813, %v1813
    %v1926 = vpack.c.bf16 %v1814, %v1814
    %v1927 = vpack.c.bf16 %v1815, %v1815
    %v1928 = vpack.c.bf16 %v1816, %v1816
    %v1929 = vpack.c.bf16 %v1817, %v1817
    %v1930 = vpack.c.bf16 %v1818, %v1818
    %v1931 = vpack.c.bf16 %v1819, %v1819
    %v1932 = vpack.c.bf16 %v1820, %v1820
    %v1933 = vpack.c.bf16 %v1821, %v1821
    %v1934 = vpack.c.bf16 %v1822, %v1822
    %v1935 = vpack.c.bf16 %v1823, %v1823
    %v1936 = vpack.c.bf16 %v1824, %v1824
    %v1937 = vpack.c.bf16 %v1825, %v1825
    %v1938 = vpack.c.bf16 %v1826, %v1826
    %v1939 = vpack.c.bf16 %v1827, %v1827
    %v1940 = vpack.c.bf16 %v1828, %v1828
    %v1941 = vpack.c.bf16 %v1829, %v1829
    %v1942 = vpack.c.bf16 %v1830, %v1830
    %v1943 = vpack.c.bf16 %v1831, %v1831
    %v1944 = vpack.c.bf16 %v1832, %v1832
    %v1945 = vpack.c.bf16 %v1833, %v1833
    %v1946 = vpack.c.bf16 %v1834, %v1834
    %v1947 = vpack.c.bf16 %v1835, %v1835
    %v1948 = vpack.c.bf16 %v1836, %v1836
    %v1949 = vpack.c.bf16 %v1837, %v1837
    %v1950 = vpack.c.bf16 %v1838, %v1838
    %v1951 = vpack.c.bf16 %v1839, %v1839
    %v1952 = vpack.c.bf16 %v1840, %v1840
    %v1953 = vunpack.c.l.bf16 %v1841
    %v1954 = vunpack.c.l.bf16 %v1842
    %v1955 = vunpack.c.l.bf16 %v1845
    %v1956 = vunpack.c.l.bf16 %v1846
    %v1957 = vunpack.c.l.bf16 %v1849
    %v1958 = vunpack.c.l.bf16 %v1850
    %v1959 = vunpack.c.l.bf16 %v1853
    %v1960 = vunpack.c.l.bf16 %v1854
    %v1961 = vunpack.c.l.bf16 %v1857
    %v1962 = vunpack.c.l.bf16 %v1858
    %v1963 = vunpack.c.l.bf16 %v1861
    %v1964 = vunpack.c.l.bf16 %v1862
    %v1965 = vunpack.c.l.bf16 %v1865
    %v1966 = vunpack.c.l.bf16 %v1866
    %v1967 = vunpack.c.l.bf16 %v1869
    %v1968 = vunpack.c.l.bf16 %v1870
    %v1969 = vunpack.c.l.bf16 %v1873
    %v1970 = vunpack.c.l.bf16 %v1874
    %v1971 = vunpack.c.l.bf16 %v1877
    %v1972 = vunpack.c.l.bf16 %v1878
    %v1973 = vunpack.c.l.bf16 %v1881
    %v1974 = vunpack.c.l.bf16 %v1882
    %v1975 = vunpack.c.l.bf16 %v1885
    %v1976 = vunpack.c.l.bf16 %v1886
    %v1977 = vunpack.c.l.bf16 %v1889
    %v1978 = vunpack.c.l.bf16 %v1890
    %v1979 = vunpack.c.l.bf16 %v1893
    %v1980 = vunpack.c.l.bf16 %v1894
    %v1981 = vunpack.c.l.bf16 %v1897
    %v1982 = vunpack.c.l.bf16 %v1898
    %v1983 = vunpack.c.l.bf16 %v1901
    %v1984 = vunpack.c.l.bf16 %v1902
    %v1985 = vunpack.c.l.bf16 %v1905
    %v1986 = vunpack.c.l.bf16 %v1906
    %v1987 = vunpack.c.l.bf16 %v1909
    %v1988 = vunpack.c.l.bf16 %v1910
    %v1989 = vunpack.c.l.bf16 %v1913
    %v1990 = vunpack.c.l.bf16 %v1914
    %v1991 = vunpack.c.l.bf16 %v1917
    %v1992 = vunpack.c.l.bf16 %v1918
    %v1993 = vunpack.c.l.bf16 %v1921
    %v1994 = vunpack.c.l.bf16 %v1922
    %v1995 = vunpack.c.l.bf16 %v1925
    %v1996 = vunpack.c.l.bf16 %v1926
    %v1997 = vunpack.c.l.bf16 %v1929
    %v1998 = vunpack.c.l.bf16 %v1930
    %v1999 = vunpack.c.l.bf16 %v1933
    %v2000 = vunpack.c.l.bf16 %v1934
    %v2001 = vunpack.c.l.bf16 %v1937
    %v2002 = vunpack.c.l.bf16 %v1938
    %v2003 = vunpack.c.l.bf16 %v1941
    %v2004 = vunpack.c.l.bf16 %v1942
    %v2005 = vunpack.c.l.bf16 %v1945
    %v2006 = vunpack.c.l.bf16 %v1946
    %v2007 = vunpack.c.l.bf16 %v1949
    %v2008 = vunpack.c.l.bf16 %v1950
    %v2009 = vunpack.c.l.bf16 %v1843
    %v2010 = vunpack.c.l.bf16 %v1844
    %v2011 = vunpack.c.l.bf16 %v1847
    %v2012 = vunpack.c.l.bf16 %v1848
    %v2013 = vunpack.c.l.bf16 %v1851
    %v2014 = vunpack.c.l.bf16 %v1852
    %v2015 = vunpack.c.l.bf16 %v1855
    %v2016 = vunpack.c.l.bf16 %v1856
    %v2017 = vunpack.c.l.bf16 %v1859
    %v2018 = vunpack.c.l.bf16 %v1860
    %v2019 = vunpack.c.l.bf16 %v1863
    %v2020 = vunpack.c.l.bf16 %v1864
    %v2021 = vunpack.c.l.bf16 %v1867
    %v2022 = vunpack.c.l.bf16 %v1868
    %v2023 = vunpack.c.l.bf16 %v1871
    %v2024 = vunpack.c.l.bf16 %v1872
    %v2025 = vunpack.c.l.bf16 %v1875
    %v2026 = vunpack.c.l.bf16 %v1876
    %v2027 = vunpack.c.l.bf16 %v1879
    %v2028 = vunpack.c.l.bf16 %v1880
    %v2029 = vunpack.c.l.bf16 %v1883
    %v2030 = vunpack.c.l.bf16 %v1884
    %v2031 = vunpack.c.l.bf16 %v1887
    %v2032 = vunpack.c.l.bf16 %v1888
    %v2033 = vunpack.c.l.bf16 %v1891
    %v2034 = vunpack.c.l.bf16 %v1892
    %v2035 = vunpack.c.l.bf16 %v1895
    %v2036 = vunpack.c.l.bf16 %v1896
    %v2037 = vunpack.c.l.bf16 %v1899
    %v2038 = vunpack.c.l.bf16 %v1900
    %v2039 = vunpack.c.l.bf16 %v1903
    %v2040 = vunpack.c.l.bf16 %v1904
    %v2041 = vunpack.c.l.bf16 %v1907
    %v2042 = vunpack.c.l.bf16 %v1908
    %v2043 = vunpack.c.l.bf16 %v1911
    %v2044 = vunpack.c.l.bf16 %v1912
    %v2045 = vunpack.c.l.bf16 %v1915
    %v2046 = vunpack.c.l.bf16 %v1916
    %v2047 = vunpack.c.l.bf16 %v1919
    %v2048 = vunpack.c.l.bf16 %v1920
    %v2049 = vunpack.c.l.bf16 %v1923
    %v2050 = vunpack.c.l.bf16 %v1924
    %v2051 = vunpack.c.l.bf16 %v1927
    %v2052 = vunpack.c.l.bf16 %v1928
    %v2053 = vunpack.c.l.bf16 %v1931
    %v2054 = vunpack.c.l.bf16 %v1932
    %v2055 = vunpack.c.l.bf16 %v1935
    %v2056 = vunpack.c.l.bf16 %v1936
    %v2057 = vunpack.c.l.bf16 %v1939
    %v2058 = vunpack.c.l.bf16 %v1940
    %v2059 = vunpack.c.l.bf16 %v1943
    %v2060 = vunpack.c.l.bf16 %v1944
    %v2061 = vunpack.c.l.bf16 %v1947
    %v2062 = vunpack.c.l.bf16 %v1948
    %v2063 = vunpack.c.l.bf16 %v1951
    %v2064 = vunpack.c.l.bf16 %v1952
    %v2065 = vmax.f32 %v1953, %v2009
    %v2066 = vmax.f32 %v1954, %v2010
    %v2067 = vmax.f32 %v1955, %v2011
    %v2068 = vmax.f32 %v1956, %v2012
    %v2069 = vmax.f32 %v1957, %v2013
    %v2070 = vmax.f32 %v1958, %v2014
    %v2071 = vmax.f32 %v1959, %v2015
    %v2072 = vmax.f32 %v1960, %v2016
    %v2073 = vmax.f32 %v1961, %v2017
    %v2074 = vmax.f32 %v1962, %v2018
    %v2075 = vmax.f32 %v1963, %v2019
    %v2076 = vmax.f32 %v1964, %v2020
    %v2077 = vmax.f32 %v1965, %v2021
    %v2078 = vmax.f32 %v1966, %v2022
    %v2079 = vmax.f32 %v1967, %v2023
    %v2080 = vmax.f32 %v1968, %v2024
    %v2081 = vmax.f32 %v1969, %v2025
    %v2082 = vmax.f32 %v1970, %v2026
    %v2083 = vmax.f32 %v1971, %v2027
    %v2084 = vmax.f32 %v1972, %v2028
    %v2085 = vmax.f32 %v1973, %v2029
    %v2086 = vmax.f32 %v1974, %v2030
    %v2087 = vmax.f32 %v1975, %v2031
    %v2088 = vmax.f32 %v1976, %v2032
    %v2089 = vmax.f32 %v1977, %v2033
    %v2090 = vmax.f32 %v1978, %v2034
    %v2091 = vmax.f32 %v1979, %v2035
    %v2092 = vmax.f32 %v1980, %v2036
    %v2093 = vmax.f32 %v1981, %v2037
    %v2094 = vmax.f32 %v1982, %v2038
    %v2095 = vmax.f32 %v1983, %v2039
    %v2096 = vmax.f32 %v1984, %v2040
    %v2097 = vmax.f32 %v1985, %v2041
    %v2098 = vmax.f32 %v1986, %v2042
    %v2099 = vmax.f32 %v1987, %v2043
    %v2100 = vmax.f32 %v1988, %v2044
    %v2101 = vmax.f32 %v1989, %v2045
    %v2102 = vmax.f32 %v1990, %v2046
    %v2103 = vmax.f32 %v1991, %v2047
    %v2104 = vmax.f32 %v1992, %v2048
    %v2105 = vmax.f32 %v1993, %v2049
    %v2106 = vmax.f32 %v1994, %v2050
    %v2107 = vmax.f32 %v1995, %v2051
    %v2108 = vmax.f32 %v1996, %v2052
    %v2109 = vmax.f32 %v1997, %v2053
    %v2110 = vmax.f32 %v1998, %v2054
    %v2111 = vmax.f32 %v1999, %v2055
    %v2112 = vmax.f32 %v2000, %v2056
    %v2113 = vmax.f32 %v2001, %v2057
    %v2114 = vmax.f32 %v2002, %v2058
    %v2115 = vmax.f32 %v2003, %v2059
    %v2116 = vmax.f32 %v2004, %v2060
    %v2117 = vmax.f32 %v2005, %v2061
    %v2118 = vmax.f32 %v2006, %v2062
    %v2119 = vmax.f32 %v2007, %v2063
    %v2120 = vmax.f32 %v2008, %v2064
    %v2121 = vpack.c.bf16 %v2065, %v2065
    %v2122 = vpack.c.bf16 %v2066, %v2066
    %v2123 = vpack.c.bf16 %v2067, %v2067
    %v2124 = vpack.c.bf16 %v2068, %v2068
    %v2125 = vpack.c.bf16 %v2069, %v2069
    %v2126 = vpack.c.bf16 %v2070, %v2070
    %v2127 = vpack.c.bf16 %v2071, %v2071
    %v2128 = vpack.c.bf16 %v2072, %v2072
    %v2129 = vpack.c.bf16 %v2073, %v2073
    %v2130 = vpack.c.bf16 %v2074, %v2074
    %v2131 = vpack.c.bf16 %v2075, %v2075
    %v2132 = vpack.c.bf16 %v2076, %v2076
    %v2133 = vpack.c.bf16 %v2077, %v2077
    %v2134 = vpack.c.bf16 %v2078, %v2078
    %v2135 = vpack.c.bf16 %v2079, %v2079
    %v2136 = vpack.c.bf16 %v2080, %v2080
    %v2137 = vpack.c.bf16 %v2081, %v2081
    %v2138 = vpack.c.bf16 %v2082, %v2082
    %v2139 = vpack.c.bf16 %v2083, %v2083
    %v2140 = vpack.c.bf16 %v2084, %v2084
    %v2141 = vpack.c.bf16 %v2085, %v2085
    %v2142 = vpack.c.bf16 %v2086, %v2086
    %v2143 = vpack.c.bf16 %v2087, %v2087
    %v2144 = vpack.c.bf16 %v2088, %v2088
    %v2145 = vpack.c.bf16 %v2089, %v2089
    %v2146 = vpack.c.bf16 %v2090, %v2090
    %v2147 = vpack.c.bf16 %v2091, %v2091
    %v2148 = vpack.c.bf16 %v2092, %v2092
    %v2149 = vpack.c.bf16 %v2093, %v2093
    %v2150 = vpack.c.bf16 %v2094, %v2094
    %v2151 = vpack.c.bf16 %v2095, %v2095
    %v2152 = vpack.c.bf16 %v2096, %v2096
    %v2153 = vpack.c.bf16 %v2097, %v2097
    %v2154 = vpack.c.bf16 %v2098, %v2098
    %v2155 = vpack.c.bf16 %v2099, %v2099
    %v2156 = vpack.c.bf16 %v2100, %v2100
    %v2157 = vpack.c.bf16 %v2101, %v2101
    %v2158 = vpack.c.bf16 %v2102, %v2102
    %v2159 = vpack.c.bf16 %v2103, %v2103
    %v2160 = vpack.c.bf16 %v2104, %v2104
    %v2161 = vpack.c.bf16 %v2105, %v2105
    %v2162 = vpack.c.bf16 %v2106, %v2106
    %v2163 = vpack.c.bf16 %v2107, %v2107
    %v2164 = vpack.c.bf16 %v2108, %v2108
    %v2165 = vpack.c.bf16 %v2109, %v2109
    %v2166 = vpack.c.bf16 %v2110, %v2110
    %v2167 = vpack.c.bf16 %v2111, %v2111
    %v2168 = vpack.c.bf16 %v2112, %v2112
    %v2169 = vpack.c.bf16 %v2113, %v2113
    %v2170 = vpack.c.bf16 %v2114, %v2114
    %v2171 = vpack.c.bf16 %v2115, %v2115
    %v2172 = vpack.c.bf16 %v2116, %v2116
    %v2173 = vpack.c.bf16 %v2117, %v2117
    %v2174 = vpack.c.bf16 %v2118, %v2118
    %v2175 = vpack.c.bf16 %v2119, %v2119
    %v2176 = vpack.c.bf16 %v2120, %v2120
    %v2233 = vunpack.c.l.b16 %v2121
    %v2234 = vunpack.c.l.b16 %v2122
    %v2235 = vunpack.c.l.b16 %v2123
    %v2236 = vunpack.c.l.b16 %v2124
    %v2237 = vunpack.c.l.b16 %v2125
    %v2238 = vunpack.c.l.b16 %v2126
    %v2239 = vunpack.c.l.b16 %v2127
    %v2240 = vunpack.c.l.b16 %v2128
    %v2241 = vunpack.c.l.b16 %v2129
    %v2242 = vunpack.c.l.b16 %v2130
    %v2243 = vunpack.c.l.b16 %v2131
    %v2244 = vunpack.c.l.b16 %v2132
    %v2245 = vunpack.c.l.b16 %v2133
    %v2246 = vunpack.c.l.b16 %v2134
    %v2247 = vunpack.c.l.b16 %v2135
    %v2248 = vunpack.c.l.b16 %v2136
    %v2249 = vunpack.c.l.b16 %v2137
    %v2250 = vunpack.c.l.b16 %v2138
    %v2251 = vunpack.c.l.b16 %v2139
    %v2252 = vunpack.c.l.b16 %v2140
    %v2253 = vunpack.c.l.b16 %v2141
    %v2254 = vunpack.c.l.b16 %v2142
    %v2255 = vunpack.c.l.b16 %v2143
    %v2256 = vunpack.c.l.b16 %v2144
    %v2257 = vunpack.c.l.b16 %v2145
    %v2258 = vunpack.c.l.b16 %v2146
    %v2259 = vunpack.c.l.b16 %v2147
    %v2260 = vunpack.c.l.b16 %v2148
    %v2261 = vunpack.c.l.b16 %v2149
    %v2262 = vunpack.c.l.b16 %v2150
    %v2263 = vunpack.c.l.b16 %v2151
    %v2264 = vunpack.c.l.b16 %v2152
    %v2265 = vunpack.c.l.b16 %v2153
    %v2266 = vunpack.c.l.b16 %v2154
    %v2267 = vunpack.c.l.b16 %v2155
    %v2268 = vunpack.c.l.b16 %v2156
    %v2269 = vunpack.c.l.b16 %v2157
    %v2270 = vunpack.c.l.b16 %v2158
    %v2271 = vunpack.c.l.b16 %v2159
    %v2272 = vunpack.c.l.b16 %v2160
    %v2273 = vunpack.c.l.b16 %v2161
    %v2274 = vunpack.c.l.b16 %v2162
    %v2275 = vunpack.c.l.b16 %v2163
    %v2276 = vunpack.c.l.b16 %v2164
    %v2277 = vunpack.c.l.b16 %v2165
    %v2278 = vunpack.c.l.b16 %v2166
    %v2279 = vunpack.c.l.b16 %v2167
    %v2280 = vunpack.c.l.b16 %v2168
    %v2281 = vunpack.c.l.b16 %v2169
    %v2282 = vunpack.c.l.b16 %v2170
    %v2283 = vunpack.c.l.b16 %v2171
    %v2284 = vunpack.c.l.b16 %v2172
    %v2285 = vunpack.c.l.b16 %v2173
    %v2286 = vunpack.c.l.b16 %v2174
    %v2287 = vunpack.c.l.b16 %v2175
    %v2288 = vunpack.c.l.b16 %v2176
    %v2289 = vpack.c.b16 %v2234, %v2233
    %v2290 = vpack.c.b16 %v2236, %v2235
    %v2291 = vpack.c.b16 %v2238, %v2237
    %v2292 = vpack.c.b16 %v2240, %v2239
    %v2293 = vpack.c.b16 %v2242, %v2241
    %v2294 = vpack.c.b16 %v2244, %v2243
    %v2295 = vpack.c.b16 %v2246, %v2245
    %v2296 = vpack.c.b16 %v2248, %v2247
    %v2297 = vpack.c.b16 %v2250, %v2249
    %v2298 = vpack.c.b16 %v2252, %v2251
    %v2299 = vpack.c.b16 %v2254, %v2253
    %v2300 = vpack.c.b16 %v2256, %v2255
    %v2301 = vpack.c.b16 %v2258, %v2257
    %v2302 = vpack.c.b16 %v2260, %v2259
    %v2303 = vpack.c.b16 %v2262, %v2261
    %v2304 = vpack.c.b16 %v2264, %v2263
    %v2305 = vpack.c.b16 %v2266, %v2265
    %v2306 = vpack.c.b16 %v2268, %v2267
    %v2307 = vpack.c.b16 %v2270, %v2269
    %v2308 = vpack.c.b16 %v2272, %v2271
    %v2309 = vpack.c.b16 %v2274, %v2273
    %v2310 = vpack.c.b16 %v2276, %v2275
    %v2311 = vpack.c.b16 %v2278, %v2277
    %v2312 = vpack.c.b16 %v2280, %v2279
    %v2313 = vpack.c.b16 %v2282, %v2281
    %v2314 = vpack.c.b16 %v2284, %v2283
    %v2315 = vpack.c.b16 %v2286, %v2285
    %v2316 = vpack.c.b16 %v2288, %v2287
    %v2318 = vshrl.u32 %v2289, 16
    %v2320 = vshll.u32 %v2289, 16
    %v2322 = vrot.slane %v2320, 1
    %v2323 = vor.u32 %v2318, %v2322
    %v2325 = vshrl.u32 %v2290, 16
    %v2327 = vshll.u32 %v2290, 16
    %v2329 = vrot.slane %v2327, 1
    %v2330 = vor.u32 %v2325, %v2329
    %v2332 = vshrl.u32 %v2291, 16
    %v2334 = vshll.u32 %v2291, 16
    %v2336 = vrot.slane %v2334, 1
    %v2337 = vor.u32 %v2332, %v2336
    %v2339 = vshrl.u32 %v2292, 16
    %v2341 = vshll.u32 %v2292, 16
    %v2343 = vrot.slane %v2341, 1
    %v2344 = vor.u32 %v2339, %v2343
    %v2346 = vshrl.u32 %v2293, 16
    %v2348 = vshll.u32 %v2293, 16
    %v2350 = vrot.slane %v2348, 1
    %v2351 = vor.u32 %v2346, %v2350
    %v2353 = vshrl.u32 %v2294, 16
    %v2355 = vshll.u32 %v2294, 16
    %v2357 = vrot.slane %v2355, 1
    %v2358 = vor.u32 %v2353, %v2357
    %v2360 = vshrl.u32 %v2295, 16
    %v2362 = vshll.u32 %v2295, 16
    %v2364 = vrot.slane %v2362, 1
    %v2365 = vor.u32 %v2360, %v2364
    %v2367 = vshrl.u32 %v2296, 16
    %v2369 = vshll.u32 %v2296, 16
    %v2371 = vrot.slane %v2369, 1
    %v2372 = vor.u32 %v2367, %v2371
    %v2374 = vshrl.u32 %v2297, 16
    %v2376 = vshll.u32 %v2297, 16
    %v2378 = vrot.slane %v2376, 1
    %v2379 = vor.u32 %v2374, %v2378
    %v2381 = vshrl.u32 %v2298, 16
    %v2383 = vshll.u32 %v2298, 16
    %v2385 = vrot.slane %v2383, 1
    %v2386 = vor.u32 %v2381, %v2385
    %v2388 = vshrl.u32 %v2299, 16
    %v2390 = vshll.u32 %v2299, 16
    %v2392 = vrot.slane %v2390, 1
    %v2393 = vor.u32 %v2388, %v2392
    %v2395 = vshrl.u32 %v2300, 16
    %v2397 = vshll.u32 %v2300, 16
    %v2399 = vrot.slane %v2397, 1
    %v2400 = vor.u32 %v2395, %v2399
    %v2402 = vshrl.u32 %v2301, 16
    %v2404 = vshll.u32 %v2301, 16
    %v2406 = vrot.slane %v2404, 1
    %v2407 = vor.u32 %v2402, %v2406
    %v2409 = vshrl.u32 %v2302, 16
    %v2411 = vshll.u32 %v2302, 16
    %v2413 = vrot.slane %v2411, 1
    %v2414 = vor.u32 %v2409, %v2413
    %v2416 = vshrl.u32 %v2303, 16
    %v2418 = vshll.u32 %v2303, 16
    %v2420 = vrot.slane %v2418, 1
    %v2421 = vor.u32 %v2416, %v2420
    %v2423 = vshrl.u32 %v2304, 16
    %v2425 = vshll.u32 %v2304, 16
    %v2427 = vrot.slane %v2425, 1
    %v2428 = vor.u32 %v2423, %v2427
    %v2430 = vshrl.u32 %v2305, 16
    %v2432 = vshll.u32 %v2305, 16
    %v2434 = vrot.slane %v2432, 1
    %v2435 = vor.u32 %v2430, %v2434
    %v2437 = vshrl.u32 %v2306, 16
    %v2439 = vshll.u32 %v2306, 16
    %v2441 = vrot.slane %v2439, 1
    %v2442 = vor.u32 %v2437, %v2441
    %v2444 = vshrl.u32 %v2307, 16
    %v2446 = vshll.u32 %v2307, 16
    %v2448 = vrot.slane %v2446, 1
    %v2449 = vor.u32 %v2444, %v2448
    %v2451 = vshrl.u32 %v2308, 16
    %v2453 = vshll.u32 %v2308, 16
    %v2455 = vrot.slane %v2453, 1
    %v2456 = vor.u32 %v2451, %v2455
    %v2458 = vshrl.u32 %v2309, 16
    %v2460 = vshll.u32 %v2309, 16
    %v2462 = vrot.slane %v2460, 1
    %v2463 = vor.u32 %v2458, %v2462
    %v2465 = vshrl.u32 %v2310, 16
    %v2467 = vshll.u32 %v2310, 16
    %v2469 = vrot.slane %v2467, 1
    %v2470 = vor.u32 %v2465, %v2469
    %v2472 = vshrl.u32 %v2311, 16
    %v2474 = vshll.u32 %v2311, 16
    %v2476 = vrot.slane %v2474, 1
    %v2477 = vor.u32 %v2472, %v2476
    %v2479 = vshrl.u32 %v2312, 16
    %v2481 = vshll.u32 %v2312, 16
    %v2483 = vrot.slane %v2481, 1
    %v2484 = vor.u32 %v2479, %v2483
    %v2486 = vshrl.u32 %v2313, 16
    %v2488 = vshll.u32 %v2313, 16
    %v2490 = vrot.slane %v2488, 1
    %v2491 = vor.u32 %v2486, %v2490
    %v2493 = vshrl.u32 %v2314, 16
    %v2495 = vshll.u32 %v2314, 16
    %v2497 = vrot.slane %v2495, 1
    %v2498 = vor.u32 %v2493, %v2497
    %v2500 = vshrl.u32 %v2315, 16
    %v2502 = vshll.u32 %v2315, 16
    %v2504 = vrot.slane %v2502, 1
    %v2505 = vor.u32 %v2500, %v2504
    %v2507 = vshrl.u32 %v2316, 16
    %v2509 = vshll.u32 %v2316, 16
    %v2511 = vrot.slane %v2509, 1
    %v2512 = vor.u32 %v2507, %v2511
    %2513 = vrot.lane.b32.xlu0 %v2323, 16
    %v2514 = vpop.permute.xlu0 %2513
    %2515 = vrot.lane.b32.xlu0 %v2330, 16
    %v2516 = vpop.permute.xlu0 %2515
    %2517 = vrot.lane.b32.xlu0 %v2337, 16
    %v2518 = vpop.permute.xlu0 %2517
    %2519 = vrot.lane.b32.xlu0 %v2344, 16
    %v2520 = vpop.permute.xlu0 %2519
    %2521 = vrot.lane.b32.xlu0 %v2351, 16
    %v2522 = vpop.permute.xlu0 %2521
    %2523 = vrot.lane.b32.xlu0 %v2358, 16
    %v2524 = vpop.permute.xlu0 %2523
    %2525 = vrot.lane.b32.xlu0 %v2365, 16
    %v2526 = vpop.permute.xlu0 %2525
    %2527 = vrot.lane.b32.xlu0 %v2372, 16
    %v2528 = vpop.permute.xlu0 %2527
    %2529 = vrot.lane.b32.xlu0 %v2379, 16
    %v2530 = vpop.permute.xlu0 %2529
    %2531 = vrot.lane.b32.xlu0 %v2386, 16
    %v2532 = vpop.permute.xlu0 %2531
    %2533 = vrot.lane.b32.xlu0 %v2393, 16
    %v2534 = vpop.permute.xlu0 %2533
    %2535 = vrot.lane.b32.xlu0 %v2400, 16
    %v2536 = vpop.permute.xlu0 %2535
    %2537 = vrot.lane.b32.xlu0 %v2407, 16
    %v2538 = vpop.permute.xlu0 %2537
    %2539 = vrot.lane.b32.xlu0 %v2414, 16
    %v2540 = vpop.permute.xlu0 %2539
    %2541 = vrot.lane.b32.xlu0 %v2421, 16
    %v2542 = vpop.permute.xlu0 %2541
    %2543 = vrot.lane.b32.xlu0 %v2428, 16
    %v2544 = vpop.permute.xlu0 %2543
    %2545 = vrot.lane.b32.xlu0 %v2435, 16
    %v2546 = vpop.permute.xlu0 %2545
    %2547 = vrot.lane.b32.xlu0 %v2442, 16
    %v2548 = vpop.permute.xlu0 %2547
    %2549 = vrot.lane.b32.xlu0 %v2449, 16
    %v2550 = vpop.permute.xlu0 %2549
    %2551 = vrot.lane.b32.xlu0 %v2456, 16
    %v2552 = vpop.permute.xlu0 %2551
    %2553 = vrot.lane.b32.xlu0 %v2463, 16
    %v2554 = vpop.permute.xlu0 %2553
    %2555 = vrot.lane.b32.xlu0 %v2470, 16
    %v2556 = vpop.permute.xlu0 %2555
    %2557 = vrot.lane.b32.xlu0 %v2477, 16
    %v2558 = vpop.permute.xlu0 %2557
    %2559 = vrot.lane.b32.xlu0 %v2484, 16
    %v2560 = vpop.permute.xlu0 %2559
    %2561 = vrot.lane.b32.xlu0 %v2491, 16
    %v2562 = vpop.permute.xlu0 %2561
    %2563 = vrot.lane.b32.xlu0 %v2498, 16
    %v2564 = vpop.permute.xlu0 %2563
    %2565 = vrot.lane.b32.xlu0 %v2505, 16
    %v2566 = vpop.permute.xlu0 %2565
    %2567 = vrot.lane.b32.xlu0 %v2512, 16
    %v2568 = vpop.permute.xlu0 %2567
    %v2569 = vrot.slane %v2289, 1
    %v2570 = vrot.slane %v2290, 1
    %v2571 = vrot.slane %v2291, 1
    %v2572 = vrot.slane %v2292, 1
    %v2573 = vrot.slane %v2293, 1
    %v2574 = vrot.slane %v2294, 1
    %v2575 = vrot.slane %v2295, 1
    %v2576 = vrot.slane %v2296, 1
    %v2577 = vrot.slane %v2297, 1
    %v2578 = vrot.slane %v2298, 1
    %v2579 = vrot.slane %v2299, 1
    %v2580 = vrot.slane %v2300, 1
    %v2581 = vrot.slane %v2301, 1
    %v2582 = vrot.slane %v2302, 1
    %v2583 = vrot.slane %v2303, 1
    %v2584 = vrot.slane %v2304, 1
    %v2585 = vrot.slane %v2305, 1
    %v2586 = vrot.slane %v2306, 1
    %v2587 = vrot.slane %v2307, 1
    %v2588 = vrot.slane %v2308, 1
    %v2589 = vrot.slane %v2309, 1
    %v2590 = vrot.slane %v2310, 1
    %v2591 = vrot.slane %v2311, 1
    %v2592 = vrot.slane %v2312, 1
    %v2593 = vrot.slane %v2313, 1
    %v2594 = vrot.slane %v2314, 1
    %v2595 = vrot.slane %v2315, 1
    %v2596 = vrot.slane %v2316, 1
    %2597 = vrot.lane.b32.xlu0 %v2569, 32
    %v2598 = vpop.permute.xlu0 %2597
    %2599 = vrot.lane.b32.xlu0 %v2570, 32
    %v2600 = vpop.permute.xlu0 %2599
    %2601 = vrot.lane.b32.xlu0 %v2571, 32
    %v2602 = vpop.permute.xlu0 %2601
    %2603 = vrot.lane.b32.xlu0 %v2572, 32
    %v2604 = vpop.permute.xlu0 %2603
    %2605 = vrot.lane.b32.xlu0 %v2573, 32
    %v2606 = vpop.permute.xlu0 %2605
    %2607 = vrot.lane.b32.xlu0 %v2574, 32
    %v2608 = vpop.permute.xlu0 %2607
    %2609 = vrot.lane.b32.xlu0 %v2575, 32
    %v2610 = vpop.permute.xlu0 %2609
    %2611 = vrot.lane.b32.xlu0 %v2576, 32
    %v2612 = vpop.permute.xlu0 %2611
    %2613 = vrot.lane.b32.xlu0 %v2577, 32
    %v2614 = vpop.permute.xlu0 %2613
    %2615 = vrot.lane.b32.xlu0 %v2578, 32
    %v2616 = vpop.permute.xlu0 %2615
    %2617 = vrot.lane.b32.xlu0 %v2579, 32
    %v2618 = vpop.permute.xlu0 %2617
    %2619 = vrot.lane.b32.xlu0 %v2580, 32
    %v2620 = vpop.permute.xlu0 %2619
    %2621 = vrot.lane.b32.xlu0 %v2581, 32
    %v2622 = vpop.permute.xlu0 %2621
    %2623 = vrot.lane.b32.xlu0 %v2582, 32
    %v2624 = vpop.permute.xlu0 %2623
    %2625 = vrot.lane.b32.xlu0 %v2583, 32
    %v2626 = vpop.permute.xlu0 %2625
    %2627 = vrot.lane.b32.xlu0 %v2584, 32
    %v2628 = vpop.permute.xlu0 %2627
    %2629 = vrot.lane.b32.xlu0 %v2585, 32
    %v2630 = vpop.permute.xlu0 %2629
    %2631 = vrot.lane.b32.xlu0 %v2586, 32
    %v2632 = vpop.permute.xlu0 %2631
    %2633 = vrot.lane.b32.xlu0 %v2587, 32
    %v2634 = vpop.permute.xlu0 %2633
    %2635 = vrot.lane.b32.xlu0 %v2588, 32
    %v2636 = vpop.permute.xlu0 %2635
    %2637 = vrot.lane.b32.xlu0 %v2589, 32
    %v2638 = vpop.permute.xlu0 %2637
    %2639 = vrot.lane.b32.xlu0 %v2590, 32
    %v2640 = vpop.permute.xlu0 %2639
    %2641 = vrot.lane.b32.xlu0 %v2591, 32
    %v2642 = vpop.permute.xlu0 %2641
    %2643 = vrot.lane.b32.xlu0 %v2592, 32
    %v2644 = vpop.permute.xlu0 %2643
    %2645 = vrot.lane.b32.xlu0 %v2593, 32
    %v2646 = vpop.permute.xlu0 %2645
    %2647 = vrot.lane.b32.xlu0 %v2594, 32
    %v2648 = vpop.permute.xlu0 %2647
    %2649 = vrot.lane.b32.xlu0 %v2595, 32
    %v2650 = vpop.permute.xlu0 %2649
    %2651 = vrot.lane.b32.xlu0 %v2596, 32
    %v2652 = vpop.permute.xlu0 %2651
    %v2653 = vrot.slane %v2289, 4
    %v2654 = vrot.slane %v2290, 4
    %v2655 = vrot.slane %v2291, 4
    %v2656 = vrot.slane %v2292, 4
    %v2657 = vrot.slane %v2293, 4
    %v2658 = vrot.slane %v2294, 4
    %v2659 = vrot.slane %v2295, 4
    %v2660 = vrot.slane %v2296, 4
    %v2661 = vrot.slane %v2297, 4
    %v2662 = vrot.slane %v2298, 4
    %v2663 = vrot.slane %v2299, 4
    %v2664 = vrot.slane %v2300, 4
    %v2665 = vrot.slane %v2301, 4
    %v2666 = vrot.slane %v2302, 4
    %v2667 = vrot.slane %v2303, 4
    %v2668 = vrot.slane %v2304, 4
    %v2669 = vrot.slane %v2305, 4
    %v2670 = vrot.slane %v2306, 4
    %v2671 = vrot.slane %v2307, 4
    %v2672 = vrot.slane %v2308, 4
    %v2673 = vrot.slane %v2309, 4
    %v2674 = vrot.slane %v2310, 4
    %v2675 = vrot.slane %v2311, 4
    %v2676 = vrot.slane %v2312, 4
    %v2677 = vrot.slane %v2313, 4
    %v2678 = vrot.slane %v2314, 4
    %v2679 = vrot.slane %v2315, 4
    %v2680 = vrot.slane %v2316, 4
    %2681 = vrot.lane.b32.xlu0 %v2653, 48
    %v2682 = vpop.permute.xlu0 %2681
    %2683 = vrot.lane.b32.xlu0 %v2654, 48
    %v2684 = vpop.permute.xlu0 %2683
    %2685 = vrot.lane.b32.xlu0 %v2655, 48
    %v2686 = vpop.permute.xlu0 %2685
    %2687 = vrot.lane.b32.xlu0 %v2656, 48
    %v2688 = vpop.permute.xlu0 %2687
    %2689 = vrot.lane.b32.xlu0 %v2657, 48
    %v2690 = vpop.permute.xlu0 %2689
    %2691 = vrot.lane.b32.xlu0 %v2658, 48
    %v2692 = vpop.permute.xlu0 %2691
    %2693 = vrot.lane.b32.xlu0 %v2659, 48
    %v2694 = vpop.permute.xlu0 %2693
    %2695 = vrot.lane.b32.xlu0 %v2660, 48
    %v2696 = vpop.permute.xlu0 %2695
    %2697 = vrot.lane.b32.xlu0 %v2661, 48
    %v2698 = vpop.permute.xlu0 %2697
    %2699 = vrot.lane.b32.xlu0 %v2662, 48
    %v2700 = vpop.permute.xlu0 %2699
    %2701 = vrot.lane.b32.xlu0 %v2663, 48
    %v2702 = vpop.permute.xlu0 %2701
    %2703 = vrot.lane.b32.xlu0 %v2664, 48
    %v2704 = vpop.permute.xlu0 %2703
    %2705 = vrot.lane.b32.xlu0 %v2665, 48
    %v2706 = vpop.permute.xlu0 %2705
    %2707 = vrot.lane.b32.xlu0 %v2666, 48
    %v2708 = vpop.permute.xlu0 %2707
    %2709 = vrot.lane.b32.xlu0 %v2667, 48
    %v2710 = vpop.permute.xlu0 %2709
    %2711 = vrot.lane.b32.xlu0 %v2668, 48
    %v2712 = vpop.permute.xlu0 %2711
    %2713 = vrot.lane.b32.xlu0 %v2669, 48
    %v2714 = vpop.permute.xlu0 %2713
    %2715 = vrot.lane.b32.xlu0 %v2670, 48
    %v2716 = vpop.permute.xlu0 %2715
    %2717 = vrot.lane.b32.xlu0 %v2671, 48
    %v2718 = vpop.permute.xlu0 %2717
    %2719 = vrot.lane.b32.xlu0 %v2672, 48
    %v2720 = vpop.permute.xlu0 %2719
    %2721 = vrot.lane.b32.xlu0 %v2673, 48
    %v2722 = vpop.permute.xlu0 %2721
    %2723 = vrot.lane.b32.xlu0 %v2674, 48
    %v2724 = vpop.permute.xlu0 %2723
    %2725 = vrot.lane.b32.xlu0 %v2675, 48
    %v2726 = vpop.permute.xlu0 %2725
    %2727 = vrot.lane.b32.xlu0 %v2676, 48
    %v2728 = vpop.permute.xlu0 %2727
    %2729 = vrot.lane.b32.xlu0 %v2677, 48
    %v2730 = vpop.permute.xlu0 %2729
    %2731 = vrot.lane.b32.xlu0 %v2678, 48
    %v2732 = vpop.permute.xlu0 %2731
    %2733 = vrot.lane.b32.xlu0 %v2679, 48
    %v2734 = vpop.permute.xlu0 %2733
    %2735 = vrot.lane.b32.xlu0 %v2680, 48
    %v2736 = vpop.permute.xlu0 %2735
    %vm2737 = vsmask.f32 3328
    %v2738 = vrot.slane %v2318, 4
    %v2739 = vrot.slane %v2320, 5
    %v2740 = vor.u32 %v2738, %v2739
    %v2742 = vshll.u32 0, 16
    %v2744 = vrot.slane %v2742, 5
    %v2745 = vsel %vm2737, %v2740, %v2744
    %v2746 = vrot.slane %v2325, 4
    %v2747 = vrot.slane %v2327, 5
    %v2748 = vor.u32 %v2746, %v2747
    %v2749 = vsel %vm2737, %v2748, %v2744
    %v2750 = vrot.slane %v2332, 4
    %v2751 = vrot.slane %v2334, 5
    %v2752 = vor.u32 %v2750, %v2751
    %v2753 = vsel %vm2737, %v2752, %v2744
    %v2754 = vrot.slane %v2339, 4
    %v2755 = vrot.slane %v2341, 5
    %v2756 = vor.u32 %v2754, %v2755
    %v2757 = vsel %vm2737, %v2756, %v2744
    %v2758 = vrot.slane %v2346, 4
    %v2759 = vrot.slane %v2348, 5
    %v2760 = vor.u32 %v2758, %v2759
    %v2761 = vsel %vm2737, %v2760, %v2744
    %v2762 = vrot.slane %v2353, 4
    %v2763 = vrot.slane %v2355, 5
    %v2764 = vor.u32 %v2762, %v2763
    %v2765 = vsel %vm2737, %v2764, %v2744
    %v2766 = vrot.slane %v2360, 4
    %v2767 = vrot.slane %v2362, 5
    %v2768 = vor.u32 %v2766, %v2767
    %v2769 = vsel %vm2737, %v2768, %v2744
    %v2770 = vrot.slane %v2367, 4
    %v2771 = vrot.slane %v2369, 5
    %v2772 = vor.u32 %v2770, %v2771
    %v2773 = vsel %vm2737, %v2772, %v2744
    %v2774 = vrot.slane %v2374, 4
    %v2775 = vrot.slane %v2376, 5
    %v2776 = vor.u32 %v2774, %v2775
    %v2777 = vsel %vm2737, %v2776, %v2744
    %v2778 = vrot.slane %v2381, 4
    %v2779 = vrot.slane %v2383, 5
    %v2780 = vor.u32 %v2778, %v2779
    %v2781 = vsel %vm2737, %v2780, %v2744
    %v2782 = vrot.slane %v2388, 4
    %v2783 = vrot.slane %v2390, 5
    %v2784 = vor.u32 %v2782, %v2783
    %v2785 = vsel %vm2737, %v2784, %v2744
    %v2786 = vrot.slane %v2395, 4
    %v2787 = vrot.slane %v2397, 5
    %v2788 = vor.u32 %v2786, %v2787
    %v2789 = vsel %vm2737, %v2788, %v2744
    %v2790 = vrot.slane %v2402, 4
    %v2791 = vrot.slane %v2404, 5
    %v2792 = vor.u32 %v2790, %v2791
    %v2793 = vsel %vm2737, %v2792, %v2744
    %v2794 = vrot.slane %v2409, 4
    %v2795 = vrot.slane %v2411, 5
    %v2796 = vor.u32 %v2794, %v2795
    %v2797 = vsel %vm2737, %v2796, %v2744
    %v2798 = vrot.slane %v2416, 4
    %v2799 = vrot.slane %v2418, 5
    %v2800 = vor.u32 %v2798, %v2799
    %v2801 = vsel %vm2737, %v2800, %v2744
    %v2802 = vrot.slane %v2423, 4
    %v2803 = vrot.slane %v2425, 5
    %v2804 = vor.u32 %v2802, %v2803
    %v2805 = vsel %vm2737, %v2804, %v2744
    %v2806 = vrot.slane %v2430, 4
    %v2807 = vrot.slane %v2432, 5
    %v2808 = vor.u32 %v2806, %v2807
    %v2809 = vsel %vm2737, %v2808, %v2744
    %v2810 = vrot.slane %v2437, 4
    %v2811 = vrot.slane %v2439, 5
    %v2812 = vor.u32 %v2810, %v2811
    %v2813 = vsel %vm2737, %v2812, %v2744
    %v2814 = vrot.slane %v2444, 4
    %v2815 = vrot.slane %v2446, 5
    %v2816 = vor.u32 %v2814, %v2815
    %v2817 = vsel %vm2737, %v2816, %v2744
    %v2818 = vrot.slane %v2451, 4
    %v2819 = vrot.slane %v2453, 5
    %v2820 = vor.u32 %v2818, %v2819
    %v2821 = vsel %vm2737, %v2820, %v2744
    %v2822 = vrot.slane %v2458, 4
    %v2823 = vrot.slane %v2460, 5
    %v2824 = vor.u32 %v2822, %v2823
    %v2825 = vsel %vm2737, %v2824, %v2744
    %v2826 = vrot.slane %v2465, 4
    %v2827 = vrot.slane %v2467, 5
    %v2828 = vor.u32 %v2826, %v2827
    %v2829 = vsel %vm2737, %v2828, %v2744
    %v2830 = vrot.slane %v2472, 4
    %v2831 = vrot.slane %v2474, 5
    %v2832 = vor.u32 %v2830, %v2831
    %v2833 = vsel %vm2737, %v2832, %v2744
    %v2834 = vrot.slane %v2479, 4
    %v2835 = vrot.slane %v2481, 5
    %v2836 = vor.u32 %v2834, %v2835
    %v2837 = vsel %vm2737, %v2836, %v2744
    %v2838 = vrot.slane %v2486, 4
    %v2839 = vrot.slane %v2488, 5
    %v2840 = vor.u32 %v2838, %v2839
    %v2841 = vsel %vm2737, %v2840, %v2744
    %v2842 = vrot.slane %v2493, 4
    %v2843 = vrot.slane %v2495, 5
    %v2844 = vor.u32 %v2842, %v2843
    %v2845 = vsel %vm2737, %v2844, %v2744
    %v2846 = vrot.slane %v2500, 4
    %v2847 = vrot.slane %v2502, 5
    %v2848 = vor.u32 %v2846, %v2847
    %v2849 = vsel %vm2737, %v2848, %v2744
    %v2850 = vrot.slane %v2507, 4
    %v2851 = vrot.slane %v2509, 5
    %v2852 = vor.u32 %v2850, %v2851
    %v2853 = vsel %vm2737, %v2852, %v2744
    %2854 = vrot.lane.b32.xlu0 %v2745, 64
    %v2855 = vpop.permute.xlu0 %2854
    %2856 = vrot.lane.b32.xlu0 %v2749, 64
    %v2857 = vpop.permute.xlu0 %2856
    %2858 = vrot.lane.b32.xlu0 %v2753, 64
    %v2859 = vpop.permute.xlu0 %2858
    %2860 = vrot.lane.b32.xlu0 %v2757, 64
    %v2861 = vpop.permute.xlu0 %2860
    %2862 = vrot.lane.b32.xlu0 %v2761, 64
    %v2863 = vpop.permute.xlu0 %2862
    %2864 = vrot.lane.b32.xlu0 %v2765, 64
    %v2865 = vpop.permute.xlu0 %2864
    %2866 = vrot.lane.b32.xlu0 %v2769, 64
    %v2867 = vpop.permute.xlu0 %2866
    %2868 = vrot.lane.b32.xlu0 %v2773, 64
    %v2869 = vpop.permute.xlu0 %2868
    %2870 = vrot.lane.b32.xlu0 %v2777, 64
    %v2871 = vpop.permute.xlu0 %2870
    %2872 = vrot.lane.b32.xlu0 %v2781, 64
    %v2873 = vpop.permute.xlu0 %2872
    %2874 = vrot.lane.b32.xlu0 %v2785, 64
    %v2875 = vpop.permute.xlu0 %2874
    %2876 = vrot.lane.b32.xlu0 %v2789, 64
    %v2877 = vpop.permute.xlu0 %2876
    %2878 = vrot.lane.b32.xlu0 %v2793, 64
    %v2879 = vpop.permute.xlu0 %2878
    %2880 = vrot.lane.b32.xlu0 %v2797, 64
    %v2881 = vpop.permute.xlu0 %2880
    %2882 = vrot.lane.b32.xlu0 %v2801, 64
    %v2883 = vpop.permute.xlu0 %2882
    %2884 = vrot.lane.b32.xlu0 %v2805, 64
    %v2885 = vpop.permute.xlu0 %2884
    %2886 = vrot.lane.b32.xlu0 %v2809, 64
    %v2887 = vpop.permute.xlu0 %2886
    %2888 = vrot.lane.b32.xlu0 %v2813, 64
    %v2889 = vpop.permute.xlu0 %2888
    %2890 = vrot.lane.b32.xlu0 %v2817, 64
    %v2891 = vpop.permute.xlu0 %2890
    %2892 = vrot.lane.b32.xlu0 %v2821, 64
    %v2893 = vpop.permute.xlu0 %2892
    %2894 = vrot.lane.b32.xlu0 %v2825, 64
    %v2895 = vpop.permute.xlu0 %2894
    %2896 = vrot.lane.b32.xlu0 %v2829, 64
    %v2897 = vpop.permute.xlu0 %2896
    %2898 = vrot.lane.b32.xlu0 %v2833, 64
    %v2899 = vpop.permute.xlu0 %2898
    %2900 = vrot.lane.b32.xlu0 %v2837, 64
    %v2901 = vpop.permute.xlu0 %2900
    %2902 = vrot.lane.b32.xlu0 %v2841, 64
    %v2903 = vpop.permute.xlu0 %2902
    %2904 = vrot.lane.b32.xlu0 %v2845, 64
    %v2905 = vpop.permute.xlu0 %2904
    %2906 = vrot.lane.b32.xlu0 %v2849, 64
    %v2907 = vpop.permute.xlu0 %2906
    %2908 = vrot.lane.b32.xlu0 %v2853, 64
    %v2909 = vpop.permute.xlu0 %2908
    %vm2911 = vcmask 1042432
    %v2912 = vrot.slane %v2289, 5
    %v2913 = vrot.slane 0, 5
    %v2914 = vsel %vm2911, %v2912, %v2913
    %v2915 = vrot.slane %v2290, 5
    %v2916 = vsel %vm2911, %v2915, %v2913
    %v2917 = vrot.slane %v2291, 5
    %v2918 = vsel %vm2911, %v2917, %v2913
    %v2919 = vrot.slane %v2292, 5
    %v2920 = vsel %vm2911, %v2919, %v2913
    %v2921 = vrot.slane %v2293, 5
    %v2922 = vsel %vm2911, %v2921, %v2913
    %v2923 = vrot.slane %v2294, 5
    %v2924 = vsel %vm2911, %v2923, %v2913
    %v2925 = vrot.slane %v2295, 5
    %v2926 = vsel %vm2911, %v2925, %v2913
    %v2927 = vrot.slane %v2296, 5
    %v2928 = vsel %vm2911, %v2927, %v2913
    %v2929 = vrot.slane %v2297, 5
    %v2930 = vsel %vm2911, %v2929, %v2913
    %v2931 = vrot.slane %v2298, 5
    %v2932 = vsel %vm2911, %v2931, %v2913
    %v2933 = vrot.slane %v2299, 5
    %v2934 = vsel %vm2911, %v2933, %v2913
    %v2935 = vrot.slane %v2300, 5
    %v2936 = vsel %vm2911, %v2935, %v2913
    %v2937 = vrot.slane %v2301, 5
    %v2938 = vsel %vm2911, %v2937, %v2913
    %v2939 = vrot.slane %v2302, 5
    %v2940 = vsel %vm2911, %v2939, %v2913
    %v2941 = vrot.slane %v2303, 5
    %v2942 = vsel %vm2911, %v2941, %v2913
    %v2943 = vrot.slane %v2304, 5
    %v2944 = vsel %vm2911, %v2943, %v2913
    %v2945 = vrot.slane %v2305, 5
    %v2946 = vsel %vm2911, %v2945, %v2913
    %v2947 = vrot.slane %v2306, 5
    %v2948 = vsel %vm2911, %v2947, %v2913
    %v2949 = vrot.slane %v2307, 5
    %v2950 = vsel %vm2911, %v2949, %v2913
    %v2951 = vrot.slane %v2308, 5
    %v2952 = vsel %vm2911, %v2951, %v2913
    %v2953 = vrot.slane %v2309, 5
    %v2954 = vsel %vm2911, %v2953, %v2913
    %v2955 = vrot.slane %v2310, 5
    %v2956 = vsel %vm2911, %v2955, %v2913
    %v2957 = vrot.slane %v2311, 5
    %v2958 = vsel %vm2911, %v2957, %v2913
    %v2959 = vrot.slane %v2312, 5
    %v2960 = vsel %vm2911, %v2959, %v2913
    %v2961 = vrot.slane %v2313, 5
    %v2962 = vsel %vm2911, %v2961, %v2913
    %v2963 = vrot.slane %v2314, 5
    %v2964 = vsel %vm2911, %v2963, %v2913
    %v2965 = vrot.slane %v2315, 5
    %v2966 = vsel %vm2911, %v2965, %v2913
    %v2967 = vrot.slane %v2316, 5
    %v2968 = vsel %vm2911, %v2967, %v2913
    %2969 = vrot.lane.b32.xlu0 %v2914, 80
    %v2970 = vpop.permute.xlu0 %2969
    %2971 = vrot.lane.b32.xlu0 %v2916, 80
    %v2972 = vpop.permute.xlu0 %2971
    %2973 = vrot.lane.b32.xlu0 %v2918, 80
    %v2974 = vpop.permute.xlu0 %2973
    %2975 = vrot.lane.b32.xlu0 %v2920, 80
    %v2976 = vpop.permute.xlu0 %2975
    %2977 = vrot.lane.b32.xlu0 %v2922, 80
    %v2978 = vpop.permute.xlu0 %2977
    %2979 = vrot.lane.b32.xlu0 %v2924, 80
    %v2980 = vpop.permute.xlu0 %2979
    %2981 = vrot.lane.b32.xlu0 %v2926, 80
    %v2982 = vpop.permute.xlu0 %2981
    %2983 = vrot.lane.b32.xlu0 %v2928, 80
    %v2984 = vpop.permute.xlu0 %2983
    %2985 = vrot.lane.b32.xlu0 %v2930, 80
    %v2986 = vpop.permute.xlu0 %2985
    %2987 = vrot.lane.b32.xlu0 %v2932, 80
    %v2988 = vpop.permute.xlu0 %2987
    %2989 = vrot.lane.b32.xlu0 %v2934, 80
    %v2990 = vpop.permute.xlu0 %2989
    %2991 = vrot.lane.b32.xlu0 %v2936, 80
    %v2992 = vpop.permute.xlu0 %2991
    %2993 = vrot.lane.b32.xlu0 %v2938, 80
    %v2994 = vpop.permute.xlu0 %2993
    %2995 = vrot.lane.b32.xlu0 %v2940, 80
    %v2996 = vpop.permute.xlu0 %2995
    %2997 = vrot.lane.b32.xlu0 %v2942, 80
    %v2998 = vpop.permute.xlu0 %2997
    %2999 = vrot.lane.b32.xlu0 %v2944, 80
    %v3000 = vpop.permute.xlu0 %2999
    %3001 = vrot.lane.b32.xlu0 %v2946, 80
    %v3002 = vpop.permute.xlu0 %3001
    %3003 = vrot.lane.b32.xlu0 %v2948, 80
    %v3004 = vpop.permute.xlu0 %3003
    %3005 = vrot.lane.b32.xlu0 %v2950, 80
    %v3006 = vpop.permute.xlu0 %3005
    %3007 = vrot.lane.b32.xlu0 %v2952, 80
    %v3008 = vpop.permute.xlu0 %3007
    %3009 = vrot.lane.b32.xlu0 %v2954, 80
    %v3010 = vpop.permute.xlu0 %3009
    %3011 = vrot.lane.b32.xlu0 %v2956, 80
    %v3012 = vpop.permute.xlu0 %3011
    %3013 = vrot.lane.b32.xlu0 %v2958, 80
    %v3014 = vpop.permute.xlu0 %3013
    %3015 = vrot.lane.b32.xlu0 %v2960, 80
    %v3016 = vpop.permute.xlu0 %3015
    %3017 = vrot.lane.b32.xlu0 %v2962, 80
    %v3018 = vpop.permute.xlu0 %3017
    %3019 = vrot.lane.b32.xlu0 %v2964, 80
    %v3020 = vpop.permute.xlu0 %3019
    %3021 = vrot.lane.b32.xlu0 %v2966, 80
    %v3022 = vpop.permute.xlu0 %3021
    %3023 = vrot.lane.b32.xlu0 %v2968, 80
    %v3024 = vpop.permute.xlu0 %3023
    %vm3025 = vcmask 130048
    %v3027 = vsel %vm3025, %v2289, %v2514
    %v3029 = vsel %vm3025, %v2290, %v2516
    %v3031 = vsel %vm3025, %v2291, %v2518
    %v3033 = vsel %vm3025, %v2292, %v2520
    %v3035 = vsel %vm3025, %v2293, %v2522
    %v3037 = vsel %vm3025, %v2294, %v2524
    %v3039 = vsel %vm3025, %v2295, %v2526
    %v3041 = vsel %vm3025, %v2296, %v2528
    %v3043 = vsel %vm3025, %v2297, %v2530
    %v3045 = vsel %vm3025, %v2298, %v2532
    %v3047 = vsel %vm3025, %v2299, %v2534
    %v3049 = vsel %vm3025, %v2300, %v2536
    %v3051 = vsel %vm3025, %v2301, %v2538
    %v3053 = vsel %vm3025, %v2302, %v2540
    %v3055 = vsel %vm3025, %v2303, %v2542
    %v3057 = vsel %vm3025, %v2304, %v2544
    %v3059 = vsel %vm3025, %v2305, %v2546
    %v3061 = vsel %vm3025, %v2306, %v2548
    %v3063 = vsel %vm3025, %v2307, %v2550
    %v3065 = vsel %vm3025, %v2308, %v2552
    %v3067 = vsel %vm3025, %v2309, %v2554
    %v3069 = vsel %vm3025, %v2310, %v2556
    %v3071 = vsel %vm3025, %v2311, %v2558
    %v3073 = vsel %vm3025, %v2312, %v2560
    %v3075 = vsel %vm3025, %v2313, %v2562
    %v3077 = vsel %vm3025, %v2314, %v2564
    %v3079 = vsel %vm3025, %v2315, %v2566
    %v3081 = vsel %vm3025, %v2316, %v2568
    %vm3082 = vcmask 261120
    %v3084 = vsel %vm3082, %v3027, %v2598
    %v3086 = vsel %vm3082, %v3029, %v2600
    %v3088 = vsel %vm3082, %v3031, %v2602
    %v3090 = vsel %vm3082, %v3033, %v2604
    %v3092 = vsel %vm3082, %v3035, %v2606
    %v3094 = vsel %vm3082, %v3037, %v2608
    %v3096 = vsel %vm3082, %v3039, %v2610
    %v3098 = vsel %vm3082, %v3041, %v2612
    %v3100 = vsel %vm3082, %v3043, %v2614
    %v3102 = vsel %vm3082, %v3045, %v2616
    %v3104 = vsel %vm3082, %v3047, %v2618
    %v3106 = vsel %vm3082, %v3049, %v2620
    %v3108 = vsel %vm3082, %v3051, %v2622
    %v3110 = vsel %vm3082, %v3053, %v2624
    %v3112 = vsel %vm3082, %v3055, %v2626
    %v3114 = vsel %vm3082, %v3057, %v2628
    %v3116 = vsel %vm3082, %v3059, %v2630
    %v3118 = vsel %vm3082, %v3061, %v2632
    %v3120 = vsel %vm3082, %v3063, %v2634
    %v3122 = vsel %vm3082, %v3065, %v2636
    %v3124 = vsel %vm3082, %v3067, %v2638
    %v3126 = vsel %vm3082, %v3069, %v2640
    %v3128 = vsel %vm3082, %v3071, %v2642
    %v3130 = vsel %vm3082, %v3073, %v2644
    %v3132 = vsel %vm3082, %v3075, %v2646
    %v3134 = vsel %vm3082, %v3077, %v2648
    %v3136 = vsel %vm3082, %v3079, %v2650
    %v3138 = vsel %vm3082, %v3081, %v2652
    %vm3139 = vcmask 392192
    %v3141 = vsel %vm3139, %v3084, %v2682
    %v3143 = vsel %vm3139, %v3086, %v2684
    %v3145 = vsel %vm3139, %v3088, %v2686
    %v3147 = vsel %vm3139, %v3090, %v2688
    %v3149 = vsel %vm3139, %v3092, %v2690
    %v3151 = vsel %vm3139, %v3094, %v2692
    %v3153 = vsel %vm3139, %v3096, %v2694
    %v3155 = vsel %vm3139, %v3098, %v2696
    %v3157 = vsel %vm3139, %v3100, %v2698
    %v3159 = vsel %vm3139, %v3102, %v2700
    %v3161 = vsel %vm3139, %v3104, %v2702
    %v3163 = vsel %vm3139, %v3106, %v2704
    %v3165 = vsel %vm3139, %v3108, %v2706
    %v3167 = vsel %vm3139, %v3110, %v2708
    %v3169 = vsel %vm3139, %v3112, %v2710
    %v3171 = vsel %vm3139, %v3114, %v2712
    %v3173 = vsel %vm3139, %v3116, %v2714
    %v3175 = vsel %vm3139, %v3118, %v2716
    %v3177 = vsel %vm3139, %v3120, %v2718
    %v3179 = vsel %vm3139, %v3122, %v2720
    %v3181 = vsel %vm3139, %v3124, %v2722
    %v3183 = vsel %vm3139, %v3126, %v2724
    %v3185 = vsel %vm3139, %v3128, %v2726
    %v3187 = vsel %vm3139, %v3130, %v2728
    %v3189 = vsel %vm3139, %v3132, %v2730
    %v3191 = vsel %vm3139, %v3134, %v2732
    %v3193 = vsel %vm3139, %v3136, %v2734
    %v3195 = vsel %vm3139, %v3138, %v2736
    %vm3196 = vcmask 523264
    %v3198 = vsel %vm3196, %v3141, %v2855
    %v3200 = vsel %vm3196, %v3143, %v2857
    %v3202 = vsel %vm3196, %v3145, %v2859
    %v3204 = vsel %vm3196, %v3147, %v2861
    %v3206 = vsel %vm3196, %v3149, %v2863
    %v3208 = vsel %vm3196, %v3151, %v2865
    %v3210 = vsel %vm3196, %v3153, %v2867
    %v3212 = vsel %vm3196, %v3155, %v2869
    %v3214 = vsel %vm3196, %v3157, %v2871
    %v3216 = vsel %vm3196, %v3159, %v2873
    %v3218 = vsel %vm3196, %v3161, %v2875
    %v3220 = vsel %vm3196, %v3163, %v2877
    %v3222 = vsel %vm3196, %v3165, %v2879
    %v3224 = vsel %vm3196, %v3167, %v2881
    %v3226 = vsel %vm3196, %v3169, %v2883
    %v3228 = vsel %vm3196, %v3171, %v2885
    %v3230 = vsel %vm3196, %v3173, %v2887
    %v3232 = vsel %vm3196, %v3175, %v2889
    %v3234 = vsel %vm3196, %v3177, %v2891
    %v3236 = vsel %vm3196, %v3179, %v2893
    %v3238 = vsel %vm3196, %v3181, %v2895
    %v3240 = vsel %vm3196, %v3183, %v2897
    %v3242 = vsel %vm3196, %v3185, %v2899
    %v3244 = vsel %vm3196, %v3187, %v2901
    %v3246 = vsel %vm3196, %v3189, %v2903
    %v3248 = vsel %vm3196, %v3191, %v2905
    %v3250 = vsel %vm3196, %v3193, %v2907
    %v3252 = vsel %vm3196, %v3195, %v2909
    %vm3253 = vcmask 654336
    %v3255 = vsel %vm3253, %v3198, %v2970
    %v3257 = vsel %vm3253, %v3200, %v2972
    %v3259 = vsel %vm3253, %v3202, %v2974
    %v3261 = vsel %vm3253, %v3204, %v2976
    %v3263 = vsel %vm3253, %v3206, %v2978
    %v3265 = vsel %vm3253, %v3208, %v2980
    %v3267 = vsel %vm3253, %v3210, %v2982
    %v3269 = vsel %vm3253, %v3212, %v2984
    %v3271 = vsel %vm3253, %v3214, %v2986
    %v3273 = vsel %vm3253, %v3216, %v2988
    %v3275 = vsel %vm3253, %v3218, %v2990
    %v3277 = vsel %vm3253, %v3220, %v2992
    %v3279 = vsel %vm3253, %v3222, %v2994
    %v3281 = vsel %vm3253, %v3224, %v2996
    %v3283 = vsel %vm3253, %v3226, %v2998
    %v3285 = vsel %vm3253, %v3228, %v3000
    %v3287 = vsel %vm3253, %v3230, %v3002
    %v3289 = vsel %vm3253, %v3232, %v3004
    %v3291 = vsel %vm3253, %v3234, %v3006
    %v3293 = vsel %vm3253, %v3236, %v3008
    %v3295 = vsel %vm3253, %v3238, %v3010
    %v3297 = vsel %vm3253, %v3240, %v3012
    %v3299 = vsel %vm3253, %v3242, %v3014
    %v3301 = vsel %vm3253, %v3244, %v3016
    %v3303 = vsel %vm3253, %v3246, %v3018
    %v3305 = vsel %vm3253, %v3248, %v3020
    %v3307 = vsel %vm3253, %v3250, %v3022
    %v3309 = vsel %vm3253, %v3252, %v3024
    %v3310 = vld [vmem:[%s3] sm:$0xf]
    %v3311 = vld [vmem:[%s3 + $0x4] sm:$0xf]
    %v3312 = vld [vmem:[%s3 + $0x8] sm:$0xf]
    %v3313 = vld [vmem:[%s3 + $0xc] sm:$0xf]
    %v3314 = vld [vmem:[%s3 + $0x10] sm:$0xf]
    %v3315 = vld [vmem:[%s3 + $0x14] sm:$0xf]
    %v3316 = vld [vmem:[%s3 + $0x18] sm:$0xf]
    %v3317 = vld [vmem:[%s3 + $0x1c] sm:$0xf]
    %v3318 = vld [vmem:[%s3 + $0x20] sm:$0xf]
    %v3319 = vld [vmem:[%s3 + $0x24] sm:$0xf]
    %v3320 = vld [vmem:[%s3 + $0x28] sm:$0xf]
    %v3321 = vld [vmem:[%s3 + $0x2c] sm:$0xf]
    %s3322 = scalar_lea.vmem %s3, 48
    %v3323 = vld [vmem:[%s3322] sm:$0xf]
    %v3324 = vld [vmem:[%s3322 + $0x4] sm:$0xf]
    %v3325 = vld [vmem:[%s3322 + $0x8] sm:$0xf]
    %v3326 = vld [vmem:[%s3322 + $0xc] sm:$0xf]
    %v3327 = vld [vmem:[%s3322 + $0x10] sm:$0xf]
    %v3328 = vld [vmem:[%s3322 + $0x14] sm:$0xf]
    %v3329 = vld [vmem:[%s3322 + $0x18] sm:$0xf]
    %v3330 = vld [vmem:[%s3322 + $0x1c] sm:$0xf]
    %v3331 = vld [vmem:[%s3322 + $0x20] sm:$0xf]
    %v3332 = vld [vmem:[%s3322 + $0x24] sm:$0xf]
    %v3333 = vld [vmem:[%s3322 + $0x28] sm:$0xf]
    %v3334 = vld [vmem:[%s3322 + $0x2c] sm:$0xf]
    %v3355 = vunpack.c.l.b16 %v3257
    %v3356 = vunpack.c.l.b16 %v3259
    %v3357 = vunpack.c.l.b16 %v3261
    %v3358 = vunpack.c.l.b16 %v3263
    %v3359 = vunpack.c.l.b16 %v3265
    %v3360 = vunpack.c.l.b16 %v3267
    %v3361 = vunpack.c.l.b16 %v3269
    %v3362 = vunpack.c.l.b16 %v3271
    %v3363 = vunpack.c.l.b16 %v3273
    %v3364 = vunpack.c.l.b16 %v3275
    %v3365 = vunpack.c.l.b16 %v3285
    %v3366 = vunpack.c.l.b16 %v3287
    %v3367 = vunpack.c.l.b16 %v3289
    %v3368 = vunpack.c.l.b16 %v3291
    %v3369 = vunpack.c.l.b16 %v3293
    %v3370 = vunpack.c.l.b16 %v3295
    %v3371 = vunpack.c.l.b16 %v3297
    %v3372 = vunpack.c.l.b16 %v3299
    %v3373 = vunpack.c.l.b16 %v3301
    %v3374 = vunpack.c.l.b16 %v3303
    %v3375 = vpack.c.b16 %v3356, %v3355
    %v3376 = vpack.c.b16 %v3358, %v3357
    %v3377 = vpack.c.b16 %v3360, %v3359
    %v3378 = vpack.c.b16 %v3362, %v3361
    %v3379 = vpack.c.b16 %v3364, %v3363
    %v3380 = vpack.c.b16 %v3366, %v3365
    %v3381 = vpack.c.b16 %v3368, %v3367
    %v3382 = vpack.c.b16 %v3370, %v3369
    %v3383 = vpack.c.b16 %v3372, %v3371
    %v3384 = vpack.c.b16 %v3374, %v3373
    %v3397 = vunpack.c.l.b16 %v3323
    %v3398 = vunpack.c.l.b16 %v3324
    %v3399 = vunpack.c.l.b16 %v3325
    %v3400 = vunpack.c.l.b16 %v3326
    %v3401 = vunpack.c.l.b16 %v3327
    %v3402 = vunpack.c.l.b16 %v3328
    %v3403 = vunpack.c.l.b16 %v3329
    %v3404 = vunpack.c.l.b16 %v3330
    %v3405 = vunpack.c.l.b16 %v3331
    %v3406 = vunpack.c.l.b16 %v3332
    %v3407 = vunpack.c.l.b16 %v3333
    %v3408 = vunpack.c.l.b16 %v3334
    %v3409 = vpack.c.b16 %v3398, %v3397
    %v3410 = vpack.c.b16 %v3400, %v3399
    %v3411 = vpack.c.b16 %v3402, %v3401
    %v3412 = vpack.c.b16 %v3404, %v3403
    %v3413 = vpack.c.b16 %v3406, %v3405
    %v3414 = vpack.c.b16 %v3408, %v3407
    %vm3421 = vcmask 785408
    %v3423 = vsel %vm3421, %v3375, 0
    %v3426 = vsel %vm3421, %v3376, 0
    %v3429 = vsel %vm3421, %v3377, 0
    %v3432 = vsel %vm3421, %v3378, 0
    %v3435 = vsel %vm3421, %v3379, 0
    %v3438 = vsel %vm3421, %v3380, 0
    %v3441 = vsel %vm3421, %v3381, 0
    %v3444 = vsel %vm3421, %v3382, 0
    %v3447 = vsel %vm3421, %v3383, 0
    %v3450 = vsel %vm3421, %v3384, 0
    %3452 = vmatpush.bf16.msra.mxu0 0
    %3453 = vmatpush.bf16.msra.mxu0 0
    %3454 = vmatpush.bf16.msra.mxu0 %v3414
    %3455 = vmatpush.bf16.msra.mxu0 %v3413
    %3456 = vmatpush.bf16.msra.mxu0 %v3412
    %3457 = vmatpush.bf16.msra.mxu0 %v3411
    %3458 = vmatpush.bf16.msra.mxu0 %v3410
    %3459 = vmatpush.bf16.msra.mxu0 %v3409
    %3460 = vmatmul.bf16.gmra.mxu0 %v3423
    %v3461 = vpop.f32.mrf.mxu0
    %v3462 = vadd.f32 0.0, %v3461
    %v3463 = vpop.f32.mrf.mxu0
    %v3464 = vadd.f32 0.0, %v3463
    %3465 = vmatmul.bf16.gmra.mxu0 %v3426
    %v3466 = vpop.f32.mrf.mxu0
    %v3467 = vadd.f32 0.0, %v3466
    %v3468 = vpop.f32.mrf.mxu0
    %v3469 = vadd.f32 0.0, %v3468
    %3470 = vmatmul.bf16.gmra.mxu0 %v3429
    %v3471 = vpop.f32.mrf.mxu0
    %v3472 = vadd.f32 0.0, %v3471
    %v3473 = vpop.f32.mrf.mxu0
    %v3474 = vadd.f32 0.0, %v3473
    %3475 = vmatmul.bf16.gmra.mxu0 %v3432
    %v3476 = vpop.f32.mrf.mxu0
    %v3477 = vadd.f32 0.0, %v3476
    %v3478 = vpop.f32.mrf.mxu0
    %v3479 = vadd.f32 0.0, %v3478
    %3480 = vmatmul.bf16.gmra.mxu0 %v3435
    %v3481 = vpop.f32.mrf.mxu0
    %v3482 = vadd.f32 0.0, %v3481
    %v3483 = vpop.f32.mrf.mxu0
    %v3484 = vadd.f32 0.0, %v3483
    %3485 = vmatmul.bf16.gmra.mxu0 %v3438
    %v3486 = vpop.f32.mrf.mxu0
    %v3487 = vadd.f32 0.0, %v3486
    %v3488 = vpop.f32.mrf.mxu0
    %v3489 = vadd.f32 0.0, %v3488
    %3490 = vmatmul.bf16.gmra.mxu0 %v3441
    %v3491 = vpop.f32.mrf.mxu0
    %v3492 = vadd.f32 0.0, %v3491
    %v3493 = vpop.f32.mrf.mxu0
    %v3494 = vadd.f32 0.0, %v3493
    %3495 = vmatmul.bf16.gmra.mxu0 %v3444
    %v3496 = vpop.f32.mrf.mxu0
    %v3497 = vadd.f32 0.0, %v3496
    %v3498 = vpop.f32.mrf.mxu0
    %v3499 = vadd.f32 0.0, %v3498
    %3500 = vmatmul.bf16.gmra.mxu0 %v3447
    %v3501 = vpop.f32.mrf.mxu0
    %v3502 = vadd.f32 0.0, %v3501
    %v3503 = vpop.f32.mrf.mxu0
    %v3504 = vadd.f32 0.0, %v3503
    %3505 = vmatmul.bf16.gmra.mxu0 %v3450
    %v3506 = vpop.f32.mrf.mxu0
    %v3507 = vadd.f32 0.0, %v3506
    %v3508 = vpop.f32.mrf.mxu0
    %v3509 = vadd.f32 0.0, %v3508
    %3510 = vdwg.mxu0
    %v3513 = vunpack.c.l.b16 %v3255
    %v3514 = vunpack.c.l.b16 %v3283
    %v3515 = vpack.c.b16 %v3355, %v3513
    %v3516 = vpack.c.b16 %v3357, %v3356
    %v3517 = vpack.c.b16 %v3359, %v3358
    %v3518 = vpack.c.b16 %v3361, %v3360
    %v3519 = vpack.c.b16 %v3363, %v3362
    %v3520 = vpack.c.b16 %v3365, %v3514
    %v3521 = vpack.c.b16 %v3367, %v3366
    %v3522 = vpack.c.b16 %v3369, %v3368
    %v3523 = vpack.c.b16 %v3371, %v3370
    %v3524 = vpack.c.b16 %v3373, %v3372
    %v3537 = vunpack.c.l.b16 %v3310
    %v3538 = vunpack.c.l.b16 %v3311
    %v3539 = vunpack.c.l.b16 %v3312
    %v3540 = vunpack.c.l.b16 %v3313
    %v3541 = vunpack.c.l.b16 %v3314
    %v3542 = vunpack.c.l.b16 %v3315
    %v3543 = vunpack.c.l.b16 %v3316
    %v3544 = vunpack.c.l.b16 %v3317
    %v3545 = vunpack.c.l.b16 %v3318
    %v3546 = vunpack.c.l.b16 %v3319
    %v3547 = vunpack.c.l.b16 %v3320
    %v3548 = vunpack.c.l.b16 %v3321
    %v3549 = vpack.c.b16 %v3538, %v3537
    %v3550 = vpack.c.b16 %v3540, %v3539
    %v3551 = vpack.c.b16 %v3542, %v3541
    %v3552 = vpack.c.b16 %v3544, %v3543
    %v3553 = vpack.c.b16 %v3546, %v3545
    %v3554 = vpack.c.b16 %v3548, %v3547
    %v3562 = vsel %vm3421, %v3515, 0
    %v3565 = vsel %vm3421, %v3516, 0
    %v3568 = vsel %vm3421, %v3517, 0
    %v3571 = vsel %vm3421, %v3518, 0
    %v3574 = vsel %vm3421, %v3519, 0
    %v3577 = vsel %vm3421, %v3520, 0
    %v3580 = vsel %vm3421, %v3521, 0
    %v3583 = vsel %vm3421, %v3522, 0
    %v3586 = vsel %vm3421, %v3523, 0
    %v3589 = vsel %vm3421, %v3524, 0
    %3591 = vmatpush.bf16.msra.mxu0 0
    %3592 = vmatpush.bf16.msra.mxu0 0
    %3593 = vmatpush.bf16.msra.mxu0 %v3554
    %3594 = vmatpush.bf16.msra.mxu0 %v3553
    %3595 = vmatpush.bf16.msra.mxu0 %v3552
    %3596 = vmatpush.bf16.msra.mxu0 %v3551
    %3597 = vmatpush.bf16.msra.mxu0 %v3550
    %3598 = vmatpush.bf16.msra.mxu0 %v3549
    %3599 = vmatmul.bf16.gmra.mxu0 %v3562
    %v3600 = vpop.f32.mrf.mxu0
    %v3601 = vadd.f32 %v3462, %v3600
    %v3602 = vpop.f32.mrf.mxu0
    %v3603 = vadd.f32 %v3464, %v3602
    %3604 = vmatmul.bf16.gmra.mxu0 %v3565
    %v3605 = vpop.f32.mrf.mxu0
    %v3606 = vadd.f32 %v3467, %v3605
    %v3607 = vpop.f32.mrf.mxu0
    %v3608 = vadd.f32 %v3469, %v3607
    %3609 = vmatmul.bf16.gmra.mxu0 %v3568
    %v3610 = vpop.f32.mrf.mxu0
    %v3611 = vadd.f32 %v3472, %v3610
    %v3612 = vpop.f32.mrf.mxu0
    %v3613 = vadd.f32 %v3474, %v3612
    %3614 = vmatmul.bf16.gmra.mxu0 %v3571
    %v3615 = vpop.f32.mrf.mxu0
    %v3616 = vadd.f32 %v3477, %v3615
    %v3617 = vpop.f32.mrf.mxu0
    %v3618 = vadd.f32 %v3479, %v3617
    %3619 = vmatmul.bf16.gmra.mxu0 %v3574
    %v3620 = vpop.f32.mrf.mxu0
    %v3621 = vadd.f32 %v3482, %v3620
    %v3622 = vpop.f32.mrf.mxu0
    %v3623 = vadd.f32 %v3484, %v3622
    %3624 = vmatmul.bf16.gmra.mxu0 %v3577
    %v3625 = vpop.f32.mrf.mxu0
    %v3626 = vadd.f32 %v3487, %v3625
    %v3627 = vpop.f32.mrf.mxu0
    %v3628 = vadd.f32 %v3489, %v3627
    %3629 = vmatmul.bf16.gmra.mxu0 %v3580
    %v3630 = vpop.f32.mrf.mxu0
    %v3631 = vadd.f32 %v3492, %v3630
    %v3632 = vpop.f32.mrf.mxu0
    %v3633 = vadd.f32 %v3494, %v3632
    %3634 = vmatmul.bf16.gmra.mxu0 %v3583
    %v3635 = vpop.f32.mrf.mxu0
    %v3636 = vadd.f32 %v3497, %v3635
    %v3637 = vpop.f32.mrf.mxu0
    %v3638 = vadd.f32 %v3499, %v3637
    %3639 = vmatmul.bf16.gmra.mxu0 %v3586
    %v3640 = vpop.f32.mrf.mxu0
    %v3641 = vadd.f32 %v3502, %v3640
    %v3642 = vpop.f32.mrf.mxu0
    %v3643 = vadd.f32 %v3504, %v3642
    %3644 = vmatmul.bf16.gmra.mxu0 %v3589
    %v3645 = vpop.f32.mrf.mxu0
    %v3646 = vadd.f32 %v3507, %v3645
    %v3647 = vpop.f32.mrf.mxu0
    %v3648 = vadd.f32 %v3509, %v3647
    %3649 = vdwg.mxu0
    %s3650 = scalar_lea.vmem %s3, 96
    %v3651 = vld [vmem:[%s3650] sm:$0xf]
    %v3652 = vld [vmem:[%s3650 + $0x4] sm:$0xf]
    %v3653 = vld [vmem:[%s3650 + $0x8] sm:$0xf]
    %v3654 = vld [vmem:[%s3650 + $0xc] sm:$0xf]
    %v3655 = vld [vmem:[%s3650 + $0x10] sm:$0xf]
    %v3656 = vld [vmem:[%s3650 + $0x14] sm:$0xf]
    %v3657 = vld [vmem:[%s3650 + $0x18] sm:$0xf]
    %v3658 = vld [vmem:[%s3650 + $0x1c] sm:$0xf]
    %v3659 = vld [vmem:[%s3650 + $0x20] sm:$0xf]
    %v3660 = vld [vmem:[%s3650 + $0x24] sm:$0xf]
    %v3661 = vld [vmem:[%s3650 + $0x28] sm:$0xf]
    %v3662 = vld [vmem:[%s3650 + $0x2c] sm:$0xf]
    %v3665 = vunpack.c.l.b16 %v3277
    %v3666 = vunpack.c.l.b16 %v3305
    %v3667 = vpack.c.b16 %v3665, %v3364
    %v3668 = vpack.c.b16 %v3666, %v3374
    %v3681 = vunpack.c.l.b16 %v3651
    %v3682 = vunpack.c.l.b16 %v3652
    %v3683 = vunpack.c.l.b16 %v3653
    %v3684 = vunpack.c.l.b16 %v3654
    %v3685 = vunpack.c.l.b16 %v3655
    %v3686 = vunpack.c.l.b16 %v3656
    %v3687 = vunpack.c.l.b16 %v3657
    %v3688 = vunpack.c.l.b16 %v3658
    %v3689 = vunpack.c.l.b16 %v3659
    %v3690 = vunpack.c.l.b16 %v3660
    %v3691 = vunpack.c.l.b16 %v3661
    %v3692 = vunpack.c.l.b16 %v3662
    %v3693 = vpack.c.b16 %v3682, %v3681
    %v3694 = vpack.c.b16 %v3684, %v3683
    %v3695 = vpack.c.b16 %v3686, %v3685
    %v3696 = vpack.c.b16 %v3688, %v3687
    %v3697 = vpack.c.b16 %v3690, %v3689
    %v3698 = vpack.c.b16 %v3692, %v3691
    %v3706 = vsel %vm3421, %v3667, 0
    %v3709 = vsel %vm3421, %v3668, 0
    %3711 = vmatpush.bf16.msra.mxu0 0
    %3712 = vmatpush.bf16.msra.mxu0 0
    %3713 = vmatpush.bf16.msra.mxu0 %v3698
    %3714 = vmatpush.bf16.msra.mxu0 %v3697
    %3715 = vmatpush.bf16.msra.mxu0 %v3696
    %3716 = vmatpush.bf16.msra.mxu0 %v3695
    %3717 = vmatpush.bf16.msra.mxu0 %v3694
    %3718 = vmatpush.bf16.msra.mxu0 %v3693
    %3719 = vmatmul.bf16.gmra.mxu0 %v3565
    %v3720 = vpop.f32.mrf.mxu0
    %v3721 = vadd.f32 0.0, %v3720
    %v3722 = vpop.f32.mrf.mxu0
    %v3723 = vadd.f32 0.0, %v3722
    %3724 = vmatmul.bf16.gmra.mxu0 %v3568
    %v3725 = vpop.f32.mrf.mxu0
    %v3726 = vadd.f32 0.0, %v3725
    %v3727 = vpop.f32.mrf.mxu0
    %v3728 = vadd.f32 0.0, %v3727
    %3729 = vmatmul.bf16.gmra.mxu0 %v3571
    %v3730 = vpop.f32.mrf.mxu0
    %v3731 = vadd.f32 0.0, %v3730
    %v3732 = vpop.f32.mrf.mxu0
    %v3733 = vadd.f32 0.0, %v3732
    %3734 = vmatmul.bf16.gmra.mxu0 %v3574
    %v3735 = vpop.f32.mrf.mxu0
    %v3736 = vadd.f32 0.0, %v3735
    %v3737 = vpop.f32.mrf.mxu0
    %v3738 = vadd.f32 0.0, %v3737
    %3739 = vmatmul.bf16.gmra.mxu0 %v3706
    %v3740 = vpop.f32.mrf.mxu0
    %v3741 = vadd.f32 0.0, %v3740
    %v3742 = vpop.f32.mrf.mxu0
    %v3743 = vadd.f32 0.0, %v3742
    %3744 = vmatmul.bf16.gmra.mxu0 %v3580
    %v3745 = vpop.f32.mrf.mxu0
    %v3746 = vadd.f32 0.0, %v3745
    %v3747 = vpop.f32.mrf.mxu0
    %v3748 = vadd.f32 0.0, %v3747
    %3749 = vmatmul.bf16.gmra.mxu0 %v3583
    %v3750 = vpop.f32.mrf.mxu0
    %v3751 = vadd.f32 0.0, %v3750
    %v3752 = vpop.f32.mrf.mxu0
    %v3753 = vadd.f32 0.0, %v3752
    %3754 = vmatmul.bf16.gmra.mxu0 %v3586
    %v3755 = vpop.f32.mrf.mxu0
    %v3756 = vadd.f32 0.0, %v3755
    %v3757 = vpop.f32.mrf.mxu0
    %v3758 = vadd.f32 0.0, %v3757
    %3759 = vmatmul.bf16.gmra.mxu0 %v3589
    %v3760 = vpop.f32.mrf.mxu0
    %v3761 = vadd.f32 0.0, %v3760
    %v3762 = vpop.f32.mrf.mxu0
    %v3763 = vadd.f32 0.0, %v3762
    %3764 = vmatmul.bf16.gmra.mxu0 %v3709
    %v3765 = vpop.f32.mrf.mxu0
    %v3766 = vadd.f32 0.0, %v3765
    %v3767 = vpop.f32.mrf.mxu0
    %v3768 = vadd.f32 0.0, %v3767
    %3769 = vdwg.mxu0
    %v3770 = vadd.f32 %v3601, %v3721
    %v3771 = vadd.f32 %v3603, %v3723
    %v3772 = vadd.f32 %v3606, %v3726
    %v3773 = vadd.f32 %v3608, %v3728
    %v3774 = vadd.f32 %v3611, %v3731
    %v3775 = vadd.f32 %v3613, %v3733
    %v3776 = vadd.f32 %v3616, %v3736
    %v3777 = vadd.f32 %v3618, %v3738
    %v3778 = vadd.f32 %v3621, %v3741
    %v3779 = vadd.f32 %v3623, %v3743
    %v3780 = vadd.f32 %v3626, %v3746
    %v3781 = vadd.f32 %v3628, %v3748
    %v3782 = vadd.f32 %v3631, %v3751
    %v3783 = vadd.f32 %v3633, %v3753
    %v3784 = vadd.f32 %v3636, %v3756
    %v3785 = vadd.f32 %v3638, %v3758
    %v3786 = vadd.f32 %v3641, %v3761
    %v3787 = vadd.f32 %v3643, %v3763
    %v3788 = vadd.f32 %v3646, %v3766
    %v3789 = vadd.f32 %v3648, %v3768
    %s3790 = scalar_lea.vmem %s3, 144
    %v3791 = vld [vmem:[%s3790] sm:$0xf]
    %v3792 = vld [vmem:[%s3790 + $0x4] sm:$0xf]
    %v3793 = vld [vmem:[%s3790 + $0x8] sm:$0xf]
    %v3794 = vld [vmem:[%s3790 + $0xc] sm:$0xf]
    %v3795 = vld [vmem:[%s3790 + $0x10] sm:$0xf]
    %v3796 = vld [vmem:[%s3790 + $0x14] sm:$0xf]
    %v3797 = vld [vmem:[%s3790 + $0x18] sm:$0xf]
    %v3798 = vld [vmem:[%s3790 + $0x1c] sm:$0xf]
    %v3799 = vld [vmem:[%s3790 + $0x20] sm:$0xf]
    %v3800 = vld [vmem:[%s3790 + $0x24] sm:$0xf]
    %v3801 = vld [vmem:[%s3790 + $0x28] sm:$0xf]
    %v3802 = vld [vmem:[%s3790 + $0x2c] sm:$0xf]
    %v3805 = vunpack.c.l.b16 %v3279
    %v3806 = vunpack.c.l.b16 %v3307
    %v3807 = vpack.c.b16 %v3805, %v3665
    %v3808 = vpack.c.b16 %v3806, %v3666
    %v3821 = vunpack.c.l.b16 %v3791
    %v3822 = vunpack.c.l.b16 %v3792
    %v3823 = vunpack.c.l.b16 %v3793
    %v3824 = vunpack.c.l.b16 %v3794
    %v3825 = vunpack.c.l.b16 %v3795
    %v3826 = vunpack.c.l.b16 %v3796
    %v3827 = vunpack.c.l.b16 %v3797
    %v3828 = vunpack.c.l.b16 %v3798
    %v3829 = vunpack.c.l.b16 %v3799
    %v3830 = vunpack.c.l.b16 %v3800
    %v3831 = vunpack.c.l.b16 %v3801
    %v3832 = vunpack.c.l.b16 %v3802
    %v3833 = vpack.c.b16 %v3822, %v3821
    %v3834 = vpack.c.b16 %v3824, %v3823
    %v3835 = vpack.c.b16 %v3826, %v3825
    %v3836 = vpack.c.b16 %v3828, %v3827
    %v3837 = vpack.c.b16 %v3830, %v3829
    %v3838 = vpack.c.b16 %v3832, %v3831
    %v3846 = vsel %vm3421, %v3807, 0
    %v3849 = vsel %vm3421, %v3808, 0
    %3851 = vmatpush.bf16.msra.mxu0 0
    %3852 = vmatpush.bf16.msra.mxu0 0
    %3853 = vmatpush.bf16.msra.mxu0 %v3838
    %3854 = vmatpush.bf16.msra.mxu0 %v3837
    %3855 = vmatpush.bf16.msra.mxu0 %v3836
    %3856 = vmatpush.bf16.msra.mxu0 %v3835
    %3857 = vmatpush.bf16.msra.mxu0 %v3834
    %3858 = vmatpush.bf16.msra.mxu0 %v3833
    %3859 = vmatmul.bf16.gmra.mxu0 %v3426
    %v3860 = vpop.f32.mrf.mxu0
    %v3861 = vadd.f32 0.0, %v3860
    %v3862 = vpop.f32.mrf.mxu0
    %v3863 = vadd.f32 0.0, %v3862
    %3864 = vmatmul.bf16.gmra.mxu0 %v3429
    %v3865 = vpop.f32.mrf.mxu0
    %v3866 = vadd.f32 0.0, %v3865
    %v3867 = vpop.f32.mrf.mxu0
    %v3868 = vadd.f32 0.0, %v3867
    %3869 = vmatmul.bf16.gmra.mxu0 %v3432
    %v3870 = vpop.f32.mrf.mxu0
    %v3871 = vadd.f32 0.0, %v3870
    %v3872 = vpop.f32.mrf.mxu0
    %v3873 = vadd.f32 0.0, %v3872
    %3874 = vmatmul.bf16.gmra.mxu0 %v3435
    %v3875 = vpop.f32.mrf.mxu0
    %v3876 = vadd.f32 0.0, %v3875
    %v3877 = vpop.f32.mrf.mxu0
    %v3878 = vadd.f32 0.0, %v3877
    %3879 = vmatmul.bf16.gmra.mxu0 %v3846
    %v3880 = vpop.f32.mrf.mxu0
    %v3881 = vadd.f32 0.0, %v3880
    %v3882 = vpop.f32.mrf.mxu0
    %v3883 = vadd.f32 0.0, %v3882
    %3884 = vmatmul.bf16.gmra.mxu0 %v3441
    %v3885 = vpop.f32.mrf.mxu0
    %v3886 = vadd.f32 0.0, %v3885
    %v3887 = vpop.f32.mrf.mxu0
    %v3888 = vadd.f32 0.0, %v3887
    %3889 = vmatmul.bf16.gmra.mxu0 %v3444
    %v3890 = vpop.f32.mrf.mxu0
    %v3891 = vadd.f32 0.0, %v3890
    %v3892 = vpop.f32.mrf.mxu0
    %v3893 = vadd.f32 0.0, %v3892
    %3894 = vmatmul.bf16.gmra.mxu0 %v3447
    %v3895 = vpop.f32.mrf.mxu0
    %v3896 = vadd.f32 0.0, %v3895
    %v3897 = vpop.f32.mrf.mxu0
    %v3898 = vadd.f32 0.0, %v3897
    %3899 = vmatmul.bf16.gmra.mxu0 %v3450
    %v3900 = vpop.f32.mrf.mxu0
    %v3901 = vadd.f32 0.0, %v3900
    %v3902 = vpop.f32.mrf.mxu0
    %v3903 = vadd.f32 0.0, %v3902
    %3904 = vmatmul.bf16.gmra.mxu0 %v3849
    %v3905 = vpop.f32.mrf.mxu0
    %v3906 = vadd.f32 0.0, %v3905
    %v3907 = vpop.f32.mrf.mxu0
    %v3908 = vadd.f32 0.0, %v3907
    %3909 = vdwg.mxu0
    %v3910 = vadd.f32 %v3770, %v3861
    %v3911 = vadd.f32 %v3771, %v3863
    %v3912 = vadd.f32 %v3772, %v3866
    %v3913 = vadd.f32 %v3773, %v3868
    %v3914 = vadd.f32 %v3774, %v3871
    %v3915 = vadd.f32 %v3775, %v3873
    %v3916 = vadd.f32 %v3776, %v3876
    %v3917 = vadd.f32 %v3777, %v3878
    %v3918 = vadd.f32 %v3778, %v3881
    %v3919 = vadd.f32 %v3779, %v3883
    %v3920 = vadd.f32 %v3780, %v3886
    %v3921 = vadd.f32 %v3781, %v3888
    %v3922 = vadd.f32 %v3782, %v3891
    %v3923 = vadd.f32 %v3783, %v3893
    %v3924 = vadd.f32 %v3784, %v3896
    %v3925 = vadd.f32 %v3785, %v3898
    %v3926 = vadd.f32 %v3786, %v3901
    %v3927 = vadd.f32 %v3787, %v3903
    %v3928 = vadd.f32 %v3788, %v3906
    %v3929 = vadd.f32 %v3789, %v3908
    %s3930 = scalar_lea.vmem %s3, 192
    %v3931 = vld [vmem:[%s3930] sm:$0xf]
    %v3932 = vld [vmem:[%s3930 + $0x4] sm:$0xf]
    %v3933 = vld [vmem:[%s3930 + $0x8] sm:$0xf]
    %v3934 = vld [vmem:[%s3930 + $0xc] sm:$0xf]
    %v3935 = vld [vmem:[%s3930 + $0x10] sm:$0xf]
    %v3936 = vld [vmem:[%s3930 + $0x14] sm:$0xf]
    %v3937 = vld [vmem:[%s3930 + $0x18] sm:$0xf]
    %v3938 = vld [vmem:[%s3930 + $0x1c] sm:$0xf]
    %v3939 = vld [vmem:[%s3930 + $0x20] sm:$0xf]
    %v3940 = vld [vmem:[%s3930 + $0x24] sm:$0xf]
    %v3941 = vld [vmem:[%s3930 + $0x28] sm:$0xf]
    %v3942 = vld [vmem:[%s3930 + $0x2c] sm:$0xf]
    %v3945 = vunpack.c.l.b16 %v3281
    %v3946 = vunpack.c.l.b16 %v3309
    %v3947 = vpack.c.b16 %v3945, %v3805
    %v3948 = vpack.c.b16 %v3946, %v3806
    %v3961 = vunpack.c.l.b16 %v3931
    %v3962 = vunpack.c.l.b16 %v3932
    %v3963 = vunpack.c.l.b16 %v3933
    %v3964 = vunpack.c.l.b16 %v3934
    %v3965 = vunpack.c.l.b16 %v3935
    %v3966 = vunpack.c.l.b16 %v3936
    %v3967 = vunpack.c.l.b16 %v3937
    %v3968 = vunpack.c.l.b16 %v3938
    %v3969 = vunpack.c.l.b16 %v3939
    %v3970 = vunpack.c.l.b16 %v3940
    %v3971 = vunpack.c.l.b16 %v3941
    %v3972 = vunpack.c.l.b16 %v3942
    %v3973 = vpack.c.b16 %v3962, %v3961
    %v3974 = vpack.c.b16 %v3964, %v3963
    %v3975 = vpack.c.b16 %v3966, %v3965
    %v3976 = vpack.c.b16 %v3968, %v3967
    %v3977 = vpack.c.b16 %v3970, %v3969
    %v3978 = vpack.c.b16 %v3972, %v3971
    %v3986 = vsel %vm3421, %v3947, 0
    %v3989 = vsel %vm3421, %v3948, 0
    %3991 = vmatpush.bf16.msra.mxu0 0
    %3992 = vmatpush.bf16.msra.mxu0 0
    %3993 = vmatpush.bf16.msra.mxu0 %v3978
    %3994 = vmatpush.bf16.msra.mxu0 %v3977
    %3995 = vmatpush.bf16.msra.mxu0 %v3976
    %3996 = vmatpush.bf16.msra.mxu0 %v3975
    %3997 = vmatpush.bf16.msra.mxu0 %v3974
    %3998 = vmatpush.bf16.msra.mxu0 %v3973
    %3999 = vmatmul.bf16.gmra.mxu0 %v3568
    %v4000 = vpop.f32.mrf.mxu0
    %v4001 = vadd.f32 0.0, %v4000
    %v4002 = vpop.f32.mrf.mxu0
    %v4003 = vadd.f32 0.0, %v4002
    %4004 = vmatmul.bf16.gmra.mxu0 %v3571
    %v4005 = vpop.f32.mrf.mxu0
    %v4006 = vadd.f32 0.0, %v4005
    %v4007 = vpop.f32.mrf.mxu0
    %v4008 = vadd.f32 0.0, %v4007
    %4009 = vmatmul.bf16.gmra.mxu0 %v3574
    %v4010 = vpop.f32.mrf.mxu0
    %v4011 = vadd.f32 0.0, %v4010
    %v4012 = vpop.f32.mrf.mxu0
    %v4013 = vadd.f32 0.0, %v4012
    %4014 = vmatmul.bf16.gmra.mxu0 %v3706
    %v4015 = vpop.f32.mrf.mxu0
    %v4016 = vadd.f32 0.0, %v4015
    %v4017 = vpop.f32.mrf.mxu0
    %v4018 = vadd.f32 0.0, %v4017
    %4019 = vmatmul.bf16.gmra.mxu0 %v3986
    %v4020 = vpop.f32.mrf.mxu0
    %v4021 = vadd.f32 0.0, %v4020
    %v4022 = vpop.f32.mrf.mxu0
    %v4023 = vadd.f32 0.0, %v4022
    %4024 = vmatmul.bf16.gmra.mxu0 %v3583
    %v4025 = vpop.f32.mrf.mxu0
    %v4026 = vadd.f32 0.0, %v4025
    %v4027 = vpop.f32.mrf.mxu0
    %v4028 = vadd.f32 0.0, %v4027
    %4029 = vmatmul.bf16.gmra.mxu0 %v3586
    %v4030 = vpop.f32.mrf.mxu0
    %v4031 = vadd.f32 0.0, %v4030
    %v4032 = vpop.f32.mrf.mxu0
    %v4033 = vadd.f32 0.0, %v4032
    %4034 = vmatmul.bf16.gmra.mxu0 %v3589
    %v4035 = vpop.f32.mrf.mxu0
    %v4036 = vadd.f32 0.0, %v4035
    %v4037 = vpop.f32.mrf.mxu0
    %v4038 = vadd.f32 0.0, %v4037
    %4039 = vmatmul.bf16.gmra.mxu0 %v3709
    %v4040 = vpop.f32.mrf.mxu0
    %v4041 = vadd.f32 0.0, %v4040
    %v4042 = vpop.f32.mrf.mxu0
    %v4043 = vadd.f32 0.0, %v4042
    %4044 = vmatmul.bf16.gmra.mxu0 %v3989
    %v4045 = vpop.f32.mrf.mxu0
    %v4046 = vadd.f32 0.0, %v4045
    %v4047 = vpop.f32.mrf.mxu0
    %v4048 = vadd.f32 0.0, %v4047
    %4049 = vdwg.mxu0
    %v4050 = vadd.f32 %v3910, %v4001
    %v4051 = vadd.f32 %v3911, %v4003
    %v4052 = vadd.f32 %v3912, %v4006
    %v4053 = vadd.f32 %v3913, %v4008
    %v4054 = vadd.f32 %v3914, %v4011
    %v4055 = vadd.f32 %v3915, %v4013
    %v4056 = vadd.f32 %v3916, %v4016
    %v4057 = vadd.f32 %v3917, %v4018
    %v4058 = vadd.f32 %v3918, %v4021
    %v4059 = vadd.f32 %v3919, %v4023
    %v4060 = vadd.f32 %v3920, %v4026
    %v4061 = vadd.f32 %v3921, %v4028
    %v4062 = vadd.f32 %v3922, %v4031
    %v4063 = vadd.f32 %v3923, %v4033
    %v4064 = vadd.f32 %v3924, %v4036
    %v4065 = vadd.f32 %v3925, %v4038
    %v4066 = vadd.f32 %v3926, %v4041
    %v4067 = vadd.f32 %v3927, %v4043
    %v4068 = vadd.f32 %v3928, %v4046
    %v4069 = vadd.f32 %v3929, %v4048
    %v4070 = vld [vmem:[%s4] sm:$0x1]
    %v4072 = vperm.slane %v4070, 0
    %v4074 = vadd.f32 %v4050, %v4072
    %v4075 = vadd.f32 %v4051, %v4072
    %v4076 = vadd.f32 %v4052, %v4072
    %v4077 = vadd.f32 %v4053, %v4072
    %v4078 = vadd.f32 %v4054, %v4072
    %v4079 = vadd.f32 %v4055, %v4072
    %v4080 = vadd.f32 %v4056, %v4072
    %v4081 = vadd.f32 %v4057, %v4072
    %v4082 = vadd.f32 %v4058, %v4072
    %v4083 = vadd.f32 %v4059, %v4072
    %v4084 = vadd.f32 %v4060, %v4072
    %v4085 = vadd.f32 %v4061, %v4072
    %v4086 = vadd.f32 %v4062, %v4072
    %v4087 = vadd.f32 %v4063, %v4072
    %v4088 = vadd.f32 %v4064, %v4072
    %v4089 = vadd.f32 %v4065, %v4072
    %v4090 = vadd.f32 %v4066, %v4072
    %v4091 = vadd.f32 %v4067, %v4072
    %v4092 = vadd.f32 %v4068, %v4072
    %v4093 = vadd.f32 %v4069, %v4072
    %v4094 = vmax.f32 %v4074, 0.0
    %v4095 = vmax.f32 %v4075, 0.0
    %v4096 = vmax.f32 %v4076, 0.0
    %v4097 = vmax.f32 %v4077, 0.0
    %v4098 = vmax.f32 %v4078, 0.0
    %v4099 = vmax.f32 %v4079, 0.0
    %v4100 = vmax.f32 %v4080, 0.0
    %v4101 = vmax.f32 %v4081, 0.0
    %v4102 = vmax.f32 %v4082, 0.0
    %v4103 = vmax.f32 %v4083, 0.0
    %v4104 = vmax.f32 %v4084, 0.0
    %v4105 = vmax.f32 %v4085, 0.0
    %v4106 = vmax.f32 %v4086, 0.0
    %v4107 = vmax.f32 %v4087, 0.0
    %v4108 = vmax.f32 %v4088, 0.0
    %v4109 = vmax.f32 %v4089, 0.0
    %v4110 = vmax.f32 %v4090, 0.0
    %v4111 = vmax.f32 %v4091, 0.0
    %v4112 = vmax.f32 %v4092, 0.0
    %v4113 = vmax.f32 %v4093, 0.0
    %v4114 = vpack.c.bf16 %v4094, %v4094
    %v4115 = vpack.c.bf16 %v4095, %v4095
    %v4116 = vpack.c.bf16 %v4096, %v4096
    %v4117 = vpack.c.bf16 %v4097, %v4097
    %v4118 = vpack.c.bf16 %v4098, %v4098
    %v4119 = vpack.c.bf16 %v4099, %v4099
    %v4120 = vpack.c.bf16 %v4100, %v4100
    %v4121 = vpack.c.bf16 %v4101, %v4101
    %v4122 = vpack.c.bf16 %v4102, %v4102
    %v4123 = vpack.c.bf16 %v4103, %v4103
    %v4124 = vpack.c.bf16 %v4104, %v4104
    %v4125 = vpack.c.bf16 %v4105, %v4105
    %v4126 = vpack.c.bf16 %v4106, %v4106
    %v4127 = vpack.c.bf16 %v4107, %v4107
    %v4128 = vpack.c.bf16 %v4108, %v4108
    %v4129 = vpack.c.bf16 %v4109, %v4109
    %v4130 = vpack.c.bf16 %v4110, %v4110
    %v4131 = vpack.c.bf16 %v4111, %v4111
    %v4132 = vpack.c.bf16 %v4112, %v4112
    %v4133 = vpack.c.bf16 %v4113, %v4113
    %v4134 = vunpack.c.l.bf16 %v4114
    %v4135 = vunpack.c.l.bf16 %v4115
    %v4136 = vunpack.c.l.bf16 %v4116
    %v4137 = vunpack.c.l.bf16 %v4117
    %v4138 = vunpack.c.l.bf16 %v4118
    %v4139 = vunpack.c.l.bf16 %v4119
    %v4140 = vunpack.c.l.bf16 %v4120
    %v4141 = vunpack.c.l.bf16 %v4121
    %v4142 = vunpack.c.l.bf16 %v4122
    %v4143 = vunpack.c.l.bf16 %v4123
    %v4144 = vunpack.c.l.bf16 %v4124
    %v4145 = vunpack.c.l.bf16 %v4125
    %v4146 = vunpack.c.l.bf16 %v4126
    %v4147 = vunpack.c.l.bf16 %v4127
    %v4148 = vunpack.c.l.bf16 %v4128
    %v4149 = vunpack.c.l.bf16 %v4129
    %v4150 = vunpack.c.l.bf16 %v4130
    %v4151 = vunpack.c.l.bf16 %v4131
    %v4152 = vunpack.c.l.bf16 %v4132
    %v4153 = vunpack.c.l.bf16 %v4133
    %4174 = vrot.lane.b32.xlu0 %v4134, 96
    %v4175 = vpop.permute.xlu0 %4174
    %4176 = vrot.lane.b32.xlu0 %v4135, 96
    %v4177 = vpop.permute.xlu0 %4176
    %4178 = vrot.lane.b32.xlu0 %v4136, 96
    %v4179 = vpop.permute.xlu0 %4178
    %4180 = vrot.lane.b32.xlu0 %v4137, 96
    %v4181 = vpop.permute.xlu0 %4180
    %4182 = vrot.lane.b32.xlu0 %v4138, 96
    %v4183 = vpop.permute.xlu0 %4182
    %4184 = vrot.lane.b32.xlu0 %v4139, 96
    %v4185 = vpop.permute.xlu0 %4184
    %4186 = vrot.lane.b32.xlu0 %v4140, 96
    %v4187 = vpop.permute.xlu0 %4186
    %4188 = vrot.lane.b32.xlu0 %v4141, 96
    %v4189 = vpop.permute.xlu0 %4188
    %4190 = vrot.lane.b32.xlu0 %v4142, 96
    %v4191 = vpop.permute.xlu0 %4190
    %4192 = vrot.lane.b32.xlu0 %v4143, 96
    %v4193 = vpop.permute.xlu0 %4192
    %4194 = vrot.lane.b32.xlu0 %v4144, 96
    %v4195 = vpop.permute.xlu0 %4194
    %4196 = vrot.lane.b32.xlu0 %v4145, 96
    %v4197 = vpop.permute.xlu0 %4196
    %4198 = vrot.lane.b32.xlu0 %v4146, 96
    %v4199 = vpop.permute.xlu0 %4198
    %4200 = vrot.lane.b32.xlu0 %v4147, 96
    %v4201 = vpop.permute.xlu0 %4200
    %4202 = vrot.lane.b32.xlu0 %v4148, 96
    %v4203 = vpop.permute.xlu0 %4202
    %4204 = vrot.lane.b32.xlu0 %v4149, 96
    %v4205 = vpop.permute.xlu0 %4204
    %4206 = vrot.lane.b32.xlu0 %v4150, 96
    %v4207 = vpop.permute.xlu0 %4206
    %4208 = vrot.lane.b32.xlu0 %v4151, 96
    %v4209 = vpop.permute.xlu0 %4208
    %4210 = vrot.lane.b32.xlu0 %v4152, 96
    %v4211 = vpop.permute.xlu0 %4210
    %4212 = vrot.lane.b32.xlu0 %v4153, 96
    %v4213 = vpop.permute.xlu0 %4212
    %v4234 = vmax.f32 %v4134, %v4175
    %v4235 = vmax.f32 %v4135, %v4177
    %v4236 = vmax.f32 %v4136, %v4179
    %v4237 = vmax.f32 %v4137, %v4181
    %v4238 = vmax.f32 %v4138, %v4183
    %v4239 = vmax.f32 %v4139, %v4185
    %v4240 = vmax.f32 %v4140, %v4187
    %v4241 = vmax.f32 %v4141, %v4189
    %v4242 = vmax.f32 %v4142, %v4191
    %v4243 = vmax.f32 %v4143, %v4193
    %v4244 = vmax.f32 %v4144, %v4195
    %v4245 = vmax.f32 %v4145, %v4197
    %v4246 = vmax.f32 %v4146, %v4199
    %v4247 = vmax.f32 %v4147, %v4201
    %v4248 = vmax.f32 %v4148, %v4203
    %v4249 = vmax.f32 %v4149, %v4205
    %v4250 = vmax.f32 %v4150, %v4207
    %v4251 = vmax.f32 %v4151, %v4209
    %v4252 = vmax.f32 %v4152, %v4211
    %v4253 = vmax.f32 %v4153, %v4213
    %v4254 = vpack.c.bf16 %v4234, %v4234
    %v4255 = vpack.c.bf16 %v4235, %v4235
    %v4256 = vpack.c.bf16 %v4236, %v4236
    %v4257 = vpack.c.bf16 %v4237, %v4237
    %v4258 = vpack.c.bf16 %v4238, %v4238
    %v4259 = vpack.c.bf16 %v4239, %v4239
    %v4260 = vpack.c.bf16 %v4240, %v4240
    %v4261 = vpack.c.bf16 %v4241, %v4241
    %v4262 = vpack.c.bf16 %v4242, %v4242
    %v4263 = vpack.c.bf16 %v4243, %v4243
    %v4264 = vpack.c.bf16 %v4244, %v4244
    %v4265 = vpack.c.bf16 %v4245, %v4245
    %v4266 = vpack.c.bf16 %v4246, %v4246
    %v4267 = vpack.c.bf16 %v4247, %v4247
    %v4268 = vpack.c.bf16 %v4248, %v4248
    %v4269 = vpack.c.bf16 %v4249, %v4249
    %v4270 = vpack.c.bf16 %v4250, %v4250
    %v4271 = vpack.c.bf16 %v4251, %v4251
    %v4272 = vpack.c.bf16 %v4252, %v4252
    %v4273 = vpack.c.bf16 %v4253, %v4253
    %v4274 = vunpack.c.l.bf16 %v4254
    %v4275 = vunpack.c.l.bf16 %v4256
    %v4276 = vunpack.c.l.bf16 %v4258
    %v4277 = vunpack.c.l.bf16 %v4260
    %v4278 = vunpack.c.l.bf16 %v4262
    %v4279 = vunpack.c.l.bf16 %v4264
    %v4280 = vunpack.c.l.bf16 %v4266
    %v4281 = vunpack.c.l.bf16 %v4268
    %v4282 = vunpack.c.l.bf16 %v4270
    %v4283 = vunpack.c.l.bf16 %v4272
    %v4284 = vunpack.c.l.bf16 %v4255
    %v4285 = vunpack.c.l.bf16 %v4257
    %v4286 = vunpack.c.l.bf16 %v4259
    %v4287 = vunpack.c.l.bf16 %v4261
    %v4288 = vunpack.c.l.bf16 %v4263
    %v4289 = vunpack.c.l.bf16 %v4265
    %v4290 = vunpack.c.l.bf16 %v4267
    %v4291 = vunpack.c.l.bf16 %v4269
    %v4292 = vunpack.c.l.bf16 %v4271
    %v4293 = vunpack.c.l.bf16 %v4273
    %v4294 = vmax.f32 %v4274, %v4284
    %v4295 = vmax.f32 %v4275, %v4285
    %v4296 = vmax.f32 %v4276, %v4286
    %v4297 = vmax.f32 %v4277, %v4287
    %v4298 = vmax.f32 %v4278, %v4288
    %v4299 = vmax.f32 %v4279, %v4289
    %v4300 = vmax.f32 %v4280, %v4290
    %v4301 = vmax.f32 %v4281, %v4291
    %v4302 = vmax.f32 %v4282, %v4292
    %v4303 = vmax.f32 %v4283, %v4293
    %v4304 = vpack.c.bf16 %v4294, %v4294
    %v4305 = vpack.c.bf16 %v4295, %v4295
    %v4306 = vpack.c.bf16 %v4296, %v4296
    %v4307 = vpack.c.bf16 %v4297, %v4297
    %v4308 = vpack.c.bf16 %v4298, %v4298
    %v4309 = vpack.c.bf16 %v4299, %v4299
    %v4310 = vpack.c.bf16 %v4300, %v4300
    %v4311 = vpack.c.bf16 %v4301, %v4301
    %v4312 = vpack.c.bf16 %v4302, %v4302
    %v4313 = vpack.c.bf16 %v4303, %v4303
    %v4316 = vunpack.c.l.b16 %v4304
    %v4317 = vunpack.c.l.b16 %v4309
    %v4318 = vpack.c.b16 %v4316, %v4316
    %v4319 = vpack.c.b16 %v4317, %v4317
    %v4320 = vunpack.c.l.b16 %v4318
    %v4321 = vunpack.c.l.b16 %v4319
    %v4322 = vrot.slane %v4321, 7
    %vm4323 = vcmask 1041409
    %v4324 = vsel %vm4323, %v4322, %v4320
    %v4325 = vpack.c.b16 %v4324, %v4324
    %v4326 = vrot.slane %v4320, 1
    %v4327 = vsel %vm4323, %v4321, %v4326
    %v4328 = vpack.c.b16 %v4327, %v4327
    %4329 = vrot.lane.b32.xlu0 %v4328, 32
    %v4330 = vpop.permute.xlu0 %4329
    %v4331 = vrot.slane %v4320, 2
    %v4332 = vrot.slane %v4321, 1
    %v4333 = vsel %vm4323, %v4332, %v4331
    %v4334 = vpack.c.b16 %v4333, %v4333
    %4335 = vrot.lane.b32.xlu0 %v4334, 64
    %v4336 = vpop.permute.xlu0 %4335
    %v4337 = vrot.slane %v4320, 3
    %v4338 = vrot.slane %v4321, 2
    %v4339 = vsel %vm4323, %v4338, %v4337
    %v4340 = vpack.c.b16 %v4339, %v4339
    %4341 = vrot.lane.b32.xlu0 %v4340, 96
    %v4342 = vpop.permute.xlu0 %4341
    %v4343 = vrot.slane %v4320, 4
    %v4344 = vrot.slane %v4321, 3
    %v4345 = vsel %vm4323, %v4344, %v4343
    %v4346 = vpack.c.b16 %v4345, %v4345
    %v4349 = vunpack.c.l.b16 %v4305
    %v4350 = vunpack.c.l.b16 %v4310
    %v4351 = vpack.c.b16 %v4349, %v4349
    %v4352 = vpack.c.b16 %v4350, %v4350
    %v4353 = vunpack.c.l.b16 %v4351
    %v4354 = vunpack.c.l.b16 %v4352
    %v4355 = vrot.slane %v4354, 7
    %v4356 = vsel %vm4323, %v4355, %v4353
    %v4357 = vpack.c.b16 %v4356, %v4356
    %4358 = vrot.lane.b32.xlu0 %v4357, 32
    %v4359 = vpop.permute.xlu0 %4358
    %v4360 = vrot.slane %v4353, 1
    %v4361 = vsel %vm4323, %v4354, %v4360
    %v4362 = vpack.c.b16 %v4361, %v4361
    %4363 = vrot.lane.b32.xlu0 %v4362, 64
    %v4364 = vpop.permute.xlu0 %4363
    %v4365 = vrot.slane %v4353, 2
    %v4366 = vrot.slane %v4354, 1
    %v4367 = vsel %vm4323, %v4366, %v4365
    %v4368 = vpack.c.b16 %v4367, %v4367
    %4369 = vrot.lane.b32.xlu0 %v4368, 96
    %v4370 = vpop.permute.xlu0 %4369
    %v4371 = vrot.slane %v4353, 3
    %v4372 = vrot.slane %v4354, 2
    %v4373 = vsel %vm4323, %v4372, %v4371
    %v4374 = vpack.c.b16 %v4373, %v4373
    %v4375 = vrot.slane %v4353, 4
    %v4376 = vrot.slane %v4354, 3
    %v4377 = vsel %vm4323, %v4376, %v4375
    %v4378 = vpack.c.b16 %v4377, %v4377
    %4379 = vrot.lane.b32.xlu0 %v4378, 32
    %v4380 = vpop.permute.xlu0 %4379
    %v4383 = vunpack.c.l.b16 %v4306
    %v4384 = vunpack.c.l.b16 %v4311
    %v4385 = vpack.c.b16 %v4383, %v4383
    %v4386 = vpack.c.b16 %v4384, %v4384
    %v4387 = vunpack.c.l.b16 %v4385
    %v4388 = vunpack.c.l.b16 %v4386
    %v4389 = vrot.slane %v4388, 7
    %v4390 = vsel %vm4323, %v4389, %v4387
    %v4391 = vpack.c.b16 %v4390, %v4390
    %4392 = vrot.lane.b32.xlu0 %v4391, 64
    %v4393 = vpop.permute.xlu0 %4392
    %v4394 = vrot.slane %v4387, 1
    %v4395 = vsel %vm4323, %v4388, %v4394
    %v4396 = vpack.c.b16 %v4395, %v4395
    %4397 = vrot.lane.b32.xlu0 %v4396, 96
    %v4398 = vpop.permute.xlu0 %4397
    %v4399 = vrot.slane %v4387, 2
    %v4400 = vrot.slane %v4388, 1
    %v4401 = vsel %vm4323, %v4400, %v4399
    %v4402 = vpack.c.b16 %v4401, %v4401
    %v4403 = vrot.slane %v4387, 3
    %v4404 = vrot.slane %v4388, 2
    %v4405 = vsel %vm4323, %v4404, %v4403
    %v4406 = vpack.c.b16 %v4405, %v4405
    %4407 = vrot.lane.b32.xlu0 %v4406, 32
    %v4408 = vpop.permute.xlu0 %4407
    %v4409 = vrot.slane %v4387, 4
    %v4410 = vrot.slane %v4388, 3
    %v4411 = vsel %vm4323, %v4410, %v4409
    %v4412 = vpack.c.b16 %v4411, %v4411
    %4413 = vrot.lane.b32.xlu0 %v4412, 64
    %v4414 = vpop.permute.xlu0 %4413
    %v4417 = vunpack.c.l.b16 %v4307
    %v4418 = vunpack.c.l.b16 %v4312
    %v4419 = vpack.c.b16 %v4417, %v4417
    %v4420 = vpack.c.b16 %v4418, %v4418
    %v4421 = vunpack.c.l.b16 %v4419
    %v4422 = vunpack.c.l.b16 %v4420
    %v4423 = vrot.slane %v4422, 7
    %v4424 = vsel %vm4323, %v4423, %v4421
    %v4425 = vpack.c.b16 %v4424, %v4424
    %4426 = vrot.lane.b32.xlu0 %v4425, 96
    %v4427 = vpop.permute.xlu0 %4426
    %v4430 = vsel %vm3082, %v4325, %v4330
    %v4432 = vsel %vm3196, %v4430, %v4336
    %v4434 = vsel %vm3421, %v4432, %v4342
    %v4438 = vsel %vm3082, %v4346, %v4359
    %v4440 = vsel %vm3196, %v4438, %v4364
    %v4442 = vsel %vm3421, %v4440, %v4370
    %v4446 = vsel %vm3082, %v4374, %v4380
    %v4448 = vsel %vm3196, %v4446, %v4393
    %v4450 = vsel %vm3421, %v4448, %v4398
    %v4454 = vsel %vm3082, %v4402, %v4408
    %v4456 = vsel %vm3196, %v4454, %v4414
    %v4458 = vsel %vm3421, %v4456, %v4427
    %vm4460 = vcmask 1042434
    %v4461 = vsel %vm4460, %v4423, %v4421
    %v4462 = vpack.c.b16 %v4461, %v4461
    %v4463 = vrot.slane %v4421, 1
    %v4464 = vsel %vm4460, %v4422, %v4463
    %v4465 = vpack.c.b16 %v4464, %v4464
    %4466 = vrot.lane.b32.xlu0 %v4465, 32
    %v4467 = vpop.permute.xlu0 %4466
    %v4468 = vrot.slane %v4421, 2
    %v4469 = vrot.slane %v4422, 1
    %v4470 = vsel %vm4460, %v4469, %v4468
    %v4471 = vpack.c.b16 %v4470, %v4470
    %4472 = vrot.lane.b32.xlu0 %v4471, 64
    %v4473 = vpop.permute.xlu0 %4472
    %v4474 = vrot.slane %v4421, 3
    %v4475 = vrot.slane %v4422, 2
    %v4476 = vsel %vm4460, %v4475, %v4474
    %v4477 = vpack.c.b16 %v4476, %v4476
    %4478 = vrot.lane.b32.xlu0 %v4477, 96
    %v4479 = vpop.permute.xlu0 %4478
    %v4482 = vunpack.c.l.b16 %v4308
    %v4483 = vunpack.c.l.b16 %v4313
    %v4484 = vpack.c.b16 %v4482, %v4482
    %v4485 = vpack.c.b16 %v4483, %v4483
    %v4486 = vunpack.c.l.b16 %v4484
    %v4487 = vunpack.c.l.b16 %v4485
    %v4488 = vrot.slane %v4486, 7
    %v4489 = vrot.slane %v4487, 6
    %v4490 = vsel %vm4460, %v4489, %v4488
    %v4491 = vpack.c.b16 %v4490, %v4490
    %v4492 = vrot.slane %v4487, 7
    %v4493 = vsel %vm4460, %v4492, %v4486
    %v4494 = vpack.c.b16 %v4493, %v4493
    %4495 = vrot.lane.b32.xlu0 %v4494, 32
    %v4496 = vpop.permute.xlu0 %4495
    %v4497 = vrot.slane %v4486, 1
    %v4498 = vsel %vm4460, %v4487, %v4497
    %v4499 = vpack.c.b16 %v4498, %v4498
    %4500 = vrot.lane.b32.xlu0 %v4499, 64
    %v4501 = vpop.permute.xlu0 %4500
    %v4502 = vrot.slane %v4486, 2
    %v4503 = vrot.slane %v4487, 1
    %v4504 = vsel %vm4460, %v4503, %v4502
    %v4505 = vpack.c.b16 %v4504, %v4504
    %4506 = vrot.lane.b32.xlu0 %v4505, 96
    %v4507 = vpop.permute.xlu0 %4506
    %v4508 = vrot.slane %v4486, 3
    %v4509 = vrot.slane %v4487, 2
    %v4510 = vsel %vm4460, %v4509, %v4508
    %v4511 = vpack.c.b16 %v4510, %v4510
    %v4514 = vsel %vm3082, %v4462, %v4467
    %v4516 = vsel %vm3196, %v4514, %v4473
    %v4518 = vsel %vm3421, %v4516, %v4479
    %v4521 = vsel %vm3082, %v4491, %v4496
    %v4523 = vsel %vm3196, %v4521, %v4501
    %v4525 = vsel %vm3421, %v4523, %v4507
    %v4526 = vshrl.u32 %v4518, 16
    %v4528 = vshll.u32 %v4518, 16
    %v4530 = vrot.slane %v4528, 1
    %v4531 = vor.u32 %v4526, %v4530
    %v4532 = vshrl.u32 %v4525, 16
    %v4534 = vshll.u32 %v4525, 16
    %v4536 = vrot.slane %v4534, 1
    %v4537 = vor.u32 %v4532, %v4536
    %v4539 = vshrl.u32 %v4511, 16
    %v4541 = vshll.u32 %v4511, 16
    %v4543 = vrot.slane %v4541, 1
    %v4544 = vor.u32 %v4539, %v4543
    %v4547 = vld [vmem:[%s5] sm:$0xf]
    %v4548 = vld [vmem:[%s5 + $0x4] sm:$0xf]
    %v4549 = vld [vmem:[%s5 + $0x8] sm:$0xf]
    %v4550 = vld [vmem:[%s5 + $0xc] sm:$0xf]
    %v4551 = vld [vmem:[%s5 + $0x10] sm:$0xf]
    %v4552 = vld [vmem:[%s5 + $0x14] sm:$0xf]
    %v4553 = vld [vmem:[%s5 + $0x18] sm:$0xf]
    %v4554 = vld [vmem:[%s5 + $0x1c] sm:$0xf]
    %v4555 = vld [vmem:[%s5 + $0x20] sm:$0xf]
    %v4556 = vld [vmem:[%s5 + $0x24] sm:$0xf]
    %v4557 = vld [vmem:[%s5 + $0x28] sm:$0xf]
    %v4558 = vld [vmem:[%s5 + $0x2c] sm:$0xf]
    %v4559 = vld [vmem:[%s5 + $0x30] sm:$0xf]
    %v4560 = vld [vmem:[%s5 + $0x34] sm:$0xf]
    %v4561 = vld [vmem:[%s5 + $0x38] sm:$0xf]
    %v4562 = vld [vmem:[%s5 + $0x3c] sm:$0xf]
    %v4563 = vld [vmem:[%s5 + $0x40] sm:$0xf]
    %v4564 = vld [vmem:[%s5 + $0x44] sm:$0xf]
    %v4565 = vld [vmem:[%s5 + $0x48] sm:$0xf]
    %v4566 = vld [vmem:[%s5 + $0x4c] sm:$0xf]
    %v4567 = vld [vmem:[%s5 + $0x50] sm:$0xf]
    %v4568 = vld [vmem:[%s5 + $0x54] sm:$0xf]
    %v4569 = vld [vmem:[%s5 + $0x58] sm:$0xf]
    %v4570 = vld [vmem:[%s5 + $0x5c] sm:$0xf]
    %v4571 = vld [vmem:[%s5 + $0x60] sm:$0xf]
    %v4572 = vld [vmem:[%s5 + $0x64] sm:$0xf]
    %v4573 = vld [vmem:[%s5 + $0x68] sm:$0xf]
    %v4574 = vld [vmem:[%s5 + $0x6c] sm:$0xf]
    %v4575 = vld [vmem:[%s5 + $0x70] sm:$0xf]
    %v4576 = vld [vmem:[%s5 + $0x74] sm:$0xf]
    %v4577 = vld [vmem:[%s5 + $0x78] sm:$0xf]
    %v4578 = vld [vmem:[%s5 + $0x7c] sm:$0xf]
    %v4579 = vld [vmem:[%s5 + $0x80] sm:$0xf]
    %v4580 = vld [vmem:[%s5 + $0x84] sm:$0xf]
    %v4581 = vld [vmem:[%s5 + $0x88] sm:$0xf]
    %v4582 = vld [vmem:[%s5 + $0x8c] sm:$0xf]
    %v4583 = vld [vmem:[%s5 + $0x90] sm:$0xf]
    %v4584 = vld [vmem:[%s5 + $0x94] sm:$0xf]
    %v4585 = vld [vmem:[%s5 + $0x98] sm:$0xf]
    %v4586 = vld [vmem:[%s5 + $0x9c] sm:$0xf]
    %v4587 = vld [vmem:[%s5 + $0xa0] sm:$0xf]
    %v4588 = vld [vmem:[%s5 + $0xa4] sm:$0xf]
    %v4589 = vld [vmem:[%s5 + $0xa8] sm:$0xf]
    %v4590 = vld [vmem:[%s5 + $0xac] sm:$0xf]
    %v4591 = vld [vmem:[%s5 + $0xb0] sm:$0xf]
    %v4592 = vld [vmem:[%s5 + $0xb4] sm:$0xf]
    %v4593 = vld [vmem:[%s5 + $0xb8] sm:$0xf]
    %v4594 = vld [vmem:[%s5 + $0xbc] sm:$0xf]
    %v4595 = vld [vmem:[%s5 + $0xc0] sm:$0xf]
    %v4596 = vld [vmem:[%s5 + $0xc4] sm:$0xf]
    %v4597 = vld [vmem:[%s5 + $0xc8] sm:$0xf]
    %v4598 = vld [vmem:[%s5 + $0xcc] sm:$0xf]
    %v4599 = vld [vmem:[%s5 + $0xd0] sm:$0xf]
    %v4600 = vld [vmem:[%s5 + $0xd4] sm:$0xf]
    %v4601 = vld [vmem:[%s5 + $0xd8] sm:$0xf]
    %v4602 = vld [vmem:[%s5 + $0xdc] sm:$0xf]
    %v4603 = vld [vmem:[%s5 + $0xe0] sm:$0xf]
    %v4604 = vld [vmem:[%s5 + $0xe4] sm:$0xf]
    %v4605 = vld [vmem:[%s5 + $0xe8] sm:$0xf]
    %v4606 = vld [vmem:[%s5 + $0xec] sm:$0xf]
    %v4607 = vld [vmem:[%s5 + $0xf0] sm:$0xf]
    %v4608 = vld [vmem:[%s5 + $0xf4] sm:$0xf]
    %v4609 = vld [vmem:[%s5 + $0xf8] sm:$0xf]
    %v4610 = vld [vmem:[%s5 + $0xfc] sm:$0xf]
    %v4611 = vld [vmem:[%s5 + $0x100] sm:$0xf]
    %v4612 = vld [vmem:[%s5 + $0x104] sm:$0xf]
    %v4613 = vld [vmem:[%s5 + $0x108] sm:$0xf]
    %v4614 = vld [vmem:[%s5 + $0x10c] sm:$0xf]
    %v4615 = vld [vmem:[%s5 + $0x110] sm:$0xf]
    %v4616 = vld [vmem:[%s5 + $0x114] sm:$0xf]
    %v4617 = vld [vmem:[%s5 + $0x118] sm:$0xf]
    %v4618 = vld [vmem:[%s5 + $0x11c] sm:$0xf]
    %v4619 = vld [vmem:[%s5 + $0x120] sm:$0xf]
    %v4620 = vld [vmem:[%s5 + $0x124] sm:$0xf]
    %v4621 = vld [vmem:[%s5 + $0x128] sm:$0xf]
    %v4622 = vld [vmem:[%s5 + $0x12c] sm:$0xf]
    %v4623 = vld [vmem:[%s5 + $0x130] sm:$0xf]
    %v4624 = vld [vmem:[%s5 + $0x134] sm:$0xf]
    %v4625 = vld [vmem:[%s5 + $0x138] sm:$0xf]
    %v4626 = vld [vmem:[%s5 + $0x13c] sm:$0xf]
    %v4627 = vld [vmem:[%s5 + $0x140] sm:$0xf]
    %v4628 = vld [vmem:[%s5 + $0x144] sm:$0xf]
    %v4629 = vld [vmem:[%s5 + $0x148] sm:$0xf]
    %v4630 = vld [vmem:[%s5 + $0x14c] sm:$0xf]
    %v4631 = vld [vmem:[%s5 + $0x150] sm:$0xf]
    %v4632 = vld [vmem:[%s5 + $0x154] sm:$0xf]
    %v4633 = vld [vmem:[%s5 + $0x158] sm:$0xf]
    %v4634 = vld [vmem:[%s5 + $0x15c] sm:$0xf]
    %v4635 = vld [vmem:[%s5 + $0x160] sm:$0xf]
    %v4636 = vld [vmem:[%s5 + $0x164] sm:$0xf]
    %v4637 = vld [vmem:[%s5 + $0x168] sm:$0xf]
    %v4638 = vld [vmem:[%s5 + $0x16c] sm:$0xf]
    %v4639 = vld [vmem:[%s5 + $0x170] sm:$0xf]
    %v4640 = vld [vmem:[%s5 + $0x174] sm:$0xf]
    %v4641 = vld [vmem:[%s5 + $0x178] sm:$0xf]
    %v4642 = vld [vmem:[%s5 + $0x17c] sm:$0xf]
    %v4643 = vld [vmem:[%s5 + $0x180] sm:$0xf]
    %v4644 = vld [vmem:[%s5 + $0x184] sm:$0xf]
    %v4645 = vld [vmem:[%s5 + $0x188] sm:$0xf]
    %v4646 = vld [vmem:[%s5 + $0x18c] sm:$0xf]
    %v4647 = vld [vmem:[%s6] sm:$0x1]
    %v4649 = vperm.slane %v4647, 0
    %v4751 = vunpack.c.l.b16 %v4547
    %v4752 = vunpack.c.l.b16 %v4548
    %v4753 = vunpack.c.l.b16 %v4549
    %v4754 = vunpack.c.l.b16 %v4550
    %v4755 = vunpack.c.l.b16 %v4551
    %v4756 = vunpack.c.l.b16 %v4552
    %v4757 = vunpack.c.l.b16 %v4553
    %v4758 = vunpack.c.l.b16 %v4554
    %v4759 = vunpack.c.l.b16 %v4555
    %v4760 = vunpack.c.l.b16 %v4556
    %v4761 = vunpack.c.l.b16 %v4557
    %v4762 = vunpack.c.l.b16 %v4558
    %v4763 = vunpack.c.l.b16 %v4559
    %v4764 = vunpack.c.l.b16 %v4560
    %v4765 = vunpack.c.l.b16 %v4561
    %v4766 = vunpack.c.l.b16 %v4562
    %v4767 = vunpack.c.l.b16 %v4563
    %v4768 = vunpack.c.l.b16 %v4564
    %v4769 = vunpack.c.l.b16 %v4565
    %v4770 = vunpack.c.l.b16 %v4566
    %v4771 = vunpack.c.l.b16 %v4567
    %v4772 = vunpack.c.l.b16 %v4568
    %v4773 = vunpack.c.l.b16 %v4569
    %v4774 = vunpack.c.l.b16 %v4570
    %v4775 = vunpack.c.l.b16 %v4571
    %v4776 = vunpack.c.l.b16 %v4572
    %v4777 = vunpack.c.l.b16 %v4573
    %v4778 = vunpack.c.l.b16 %v4574
    %v4779 = vunpack.c.l.b16 %v4575
    %v4780 = vunpack.c.l.b16 %v4576
    %v4781 = vunpack.c.l.b16 %v4577
    %v4782 = vunpack.c.l.b16 %v4578
    %v4783 = vunpack.c.l.b16 %v4579
    %v4784 = vunpack.c.l.b16 %v4580
    %v4785 = vunpack.c.l.b16 %v4581
    %v4786 = vunpack.c.l.b16 %v4582
    %v4787 = vunpack.c.l.b16 %v4583
    %v4788 = vunpack.c.l.b16 %v4584
    %v4789 = vunpack.c.l.b16 %v4585
    %v4790 = vunpack.c.l.b16 %v4586
    %v4791 = vunpack.c.l.b16 %v4587
    %v4792 = vunpack.c.l.b16 %v4588
    %v4793 = vunpack.c.l.b16 %v4589
    %v4794 = vunpack.c.l.b16 %v4590
    %v4795 = vunpack.c.l.b16 %v4591
    %v4796 = vunpack.c.l.b16 %v4592
    %v4797 = vunpack.c.l.b16 %v4593
    %v4798 = vunpack.c.l.b16 %v4594
    %v4799 = vunpack.c.l.b16 %v4595
    %v4800 = vunpack.c.l.b16 %v4596
    %v4801 = vunpack.c.l.b16 %v4597
    %v4802 = vunpack.c.l.b16 %v4598
    %v4803 = vunpack.c.l.b16 %v4599
    %v4804 = vunpack.c.l.b16 %v4600
    %v4805 = vunpack.c.l.b16 %v4601
    %v4806 = vunpack.c.l.b16 %v4602
    %v4807 = vunpack.c.l.b16 %v4603
    %v4808 = vunpack.c.l.b16 %v4604
    %v4809 = vunpack.c.l.b16 %v4605
    %v4810 = vunpack.c.l.b16 %v4606
    %v4811 = vunpack.c.l.b16 %v4607
    %v4812 = vunpack.c.l.b16 %v4608
    %v4813 = vunpack.c.l.b16 %v4609
    %v4814 = vunpack.c.l.b16 %v4610
    %v4815 = vunpack.c.l.b16 %v4611
    %v4816 = vunpack.c.l.b16 %v4612
    %v4817 = vunpack.c.l.b16 %v4613
    %v4818 = vunpack.c.l.b16 %v4614
    %v4819 = vunpack.c.l.b16 %v4615
    %v4820 = vunpack.c.l.b16 %v4616
    %v4821 = vunpack.c.l.b16 %v4617
    %v4822 = vunpack.c.l.b16 %v4618
    %v4823 = vunpack.c.l.b16 %v4619
    %v4824 = vunpack.c.l.b16 %v4620
    %v4825 = vunpack.c.l.b16 %v4621
    %v4826 = vunpack.c.l.b16 %v4622
    %v4827 = vunpack.c.l.b16 %v4623
    %v4828 = vunpack.c.l.b16 %v4624
    %v4829 = vunpack.c.l.b16 %v4625
    %v4830 = vunpack.c.l.b16 %v4626
    %v4831 = vunpack.c.l.b16 %v4627
    %v4832 = vunpack.c.l.b16 %v4628
    %v4833 = vunpack.c.l.b16 %v4629
    %v4834 = vunpack.c.l.b16 %v4630
    %v4835 = vunpack.c.l.b16 %v4631
    %v4836 = vunpack.c.l.b16 %v4632
    %v4837 = vunpack.c.l.b16 %v4633
    %v4838 = vunpack.c.l.b16 %v4634
    %v4839 = vunpack.c.l.b16 %v4635
    %v4840 = vunpack.c.l.b16 %v4636
    %v4841 = vunpack.c.l.b16 %v4637
    %v4842 = vunpack.c.l.b16 %v4638
    %v4843 = vunpack.c.l.b16 %v4639
    %v4844 = vunpack.c.l.b16 %v4640
    %v4845 = vunpack.c.l.b16 %v4641
    %v4846 = vunpack.c.l.b16 %v4642
    %v4847 = vunpack.c.l.b16 %v4643
    %v4848 = vunpack.c.l.b16 %v4644
    %v4849 = vunpack.c.l.b16 %v4645
    %v4850 = vunpack.c.l.b16 %v4646
    %v4851 = vpack.c.b16 %v4752, %v4751
    %v4852 = vpack.c.b16 %v4754, %v4753
    %v4853 = vpack.c.b16 %v4756, %v4755
    %v4854 = vpack.c.b16 %v4758, %v4757
    %v4855 = vpack.c.b16 %v4760, %v4759
    %v4856 = vpack.c.b16 %v4762, %v4761
    %v4857 = vpack.c.b16 %v4764, %v4763
    %v4858 = vpack.c.b16 %v4766, %v4765
    %v4859 = vpack.c.b16 %v4768, %v4767
    %v4860 = vpack.c.b16 %v4770, %v4769
    %v4861 = vpack.c.b16 %v4772, %v4771
    %v4862 = vpack.c.b16 %v4774, %v4773
    %v4863 = vpack.c.b16 %v4776, %v4775
    %v4864 = vpack.c.b16 %v4778, %v4777
    %v4865 = vpack.c.b16 %v4780, %v4779
    %v4866 = vpack.c.b16 %v4782, %v4781
    %v4867 = vpack.c.b16 %v4784, %v4783
    %v4868 = vpack.c.b16 %v4786, %v4785
    %v4869 = vpack.c.b16 %v4788, %v4787
    %v4870 = vpack.c.b16 %v4790, %v4789
    %v4871 = vpack.c.b16 %v4792, %v4791
    %v4872 = vpack.c.b16 %v4794, %v4793
    %v4873 = vpack.c.b16 %v4796, %v4795
    %v4874 = vpack.c.b16 %v4798, %v4797
    %v4875 = vpack.c.b16 %v4800, %v4799
    %v4876 = vpack.c.b16 %v4802, %v4801
    %v4877 = vpack.c.b16 %v4804, %v4803
    %v4878 = vpack.c.b16 %v4806, %v4805
    %v4879 = vpack.c.b16 %v4808, %v4807
    %v4880 = vpack.c.b16 %v4810, %v4809
    %v4881 = vpack.c.b16 %v4812, %v4811
    %v4882 = vpack.c.b16 %v4814, %v4813
    %v4883 = vpack.c.b16 %v4816, %v4815
    %v4884 = vpack.c.b16 %v4818, %v4817
    %v4885 = vpack.c.b16 %v4820, %v4819
    %v4886 = vpack.c.b16 %v4822, %v4821
    %v4887 = vpack.c.b16 %v4824, %v4823
    %v4888 = vpack.c.b16 %v4826, %v4825
    %v4889 = vpack.c.b16 %v4828, %v4827
    %v4890 = vpack.c.b16 %v4830, %v4829
    %v4891 = vpack.c.b16 %v4832, %v4831
    %v4892 = vpack.c.b16 %v4834, %v4833
    %v4893 = vpack.c.b16 %v4836, %v4835
    %v4894 = vpack.c.b16 %v4838, %v4837
    %v4895 = vpack.c.b16 %v4840, %v4839
    %v4896 = vpack.c.b16 %v4842, %v4841
    %v4897 = vpack.c.b16 %v4844, %v4843
    %v4898 = vpack.c.b16 %v4846, %v4845
    %v4899 = vpack.c.b16 %v4848, %v4847
    %v4900 = vpack.c.b16 %v4850, %v4849
    %v4952 = vsel %vm3082, %v4544, 0
    %4954 = vmatpush.bf16.msra.mxu0 %v4858
    %4955 = vmatpush.bf16.msra.mxu0 %v4857
    %4956 = vmatpush.bf16.msra.mxu0 %v4856
    %4957 = vmatpush.bf16.msra.mxu0 %v4855
    %4958 = vmatpush.bf16.msra.mxu0 %v4854
    %4959 = vmatpush.bf16.msra.mxu0 %v4853
    %4960 = vmatpush.bf16.msra.mxu0 %v4852
    %4961 = vmatpush.bf16.msra.mxu0 %v4851
    %4962 = vmatmul.bf16.gmra.mxu0 %v4434
    %v4963 = vpop.f32.mrf.mxu0
    %v4964 = vadd.f32 %v4649, %v4963
    %v4965 = vpop.f32.mrf.mxu0
    %4966 = vdwg.mxu0
    %4967 = vmatpush.bf16.msra.mxu0 %v4866
    %4968 = vmatpush.bf16.msra.mxu0 %v4865
    %4969 = vmatpush.bf16.msra.mxu0 %v4864
    %4970 = vmatpush.bf16.msra.mxu0 %v4863
    %4971 = vmatpush.bf16.msra.mxu0 %v4862
    %4972 = vmatpush.bf16.msra.mxu0 %v4861
    %4973 = vmatpush.bf16.msra.mxu0 %v4860
    %4974 = vmatpush.bf16.msra.mxu0 %v4859
    %4975 = vmatmul.bf16.gmra.mxu0 %v4442
    %v4976 = vpop.f32.mrf.mxu0
    %v4977 = vadd.f32 %v4964, %v4976
    %v4978 = vpop.f32.mrf.mxu0
    %4979 = vdwg.mxu0
    %4980 = vmatpush.bf16.msra.mxu0 %v4874
    %4981 = vmatpush.bf16.msra.mxu0 %v4873
    %4982 = vmatpush.bf16.msra.mxu0 %v4872
    %4983 = vmatpush.bf16.msra.mxu0 %v4871
    %4984 = vmatpush.bf16.msra.mxu0 %v4870
    %4985 = vmatpush.bf16.msra.mxu0 %v4869
    %4986 = vmatpush.bf16.msra.mxu0 %v4868
    %4987 = vmatpush.bf16.msra.mxu0 %v4867
    %4988 = vmatmul.bf16.gmra.mxu0 %v4450
    %v4989 = vpop.f32.mrf.mxu0
    %v4990 = vadd.f32 %v4977, %v4989
    %v4991 = vpop.f32.mrf.mxu0
    %4992 = vdwg.mxu0
    %4993 = vmatpush.bf16.msra.mxu0 %v4882
    %4994 = vmatpush.bf16.msra.mxu0 %v4881
    %4995 = vmatpush.bf16.msra.mxu0 %v4880
    %4996 = vmatpush.bf16.msra.mxu0 %v4879
    %4997 = vmatpush.bf16.msra.mxu0 %v4878
    %4998 = vmatpush.bf16.msra.mxu0 %v4877
    %4999 = vmatpush.bf16.msra.mxu0 %v4876
    %5000 = vmatpush.bf16.msra.mxu0 %v4875
    %5001 = vmatmul.bf16.gmra.mxu0 %v4458
    %v5002 = vpop.f32.mrf.mxu0
    %v5003 = vadd.f32 %v4990, %v5002
    %v5004 = vpop.f32.mrf.mxu0
    %5005 = vdwg.mxu0
    %5006 = vmatpush.bf16.msra.mxu0 %v4890
    %5007 = vmatpush.bf16.msra.mxu0 %v4889
    %5008 = vmatpush.bf16.msra.mxu0 %v4888
    %5009 = vmatpush.bf16.msra.mxu0 %v4887
    %5010 = vmatpush.bf16.msra.mxu0 %v4886
    %5011 = vmatpush.bf16.msra.mxu0 %v4885
    %5012 = vmatpush.bf16.msra.mxu0 %v4884
    %5013 = vmatpush.bf16.msra.mxu0 %v4883
    %5014 = vmatmul.bf16.gmra.mxu0 %v4531
    %v5015 = vpop.f32.mrf.mxu0
    %v5016 = vadd.f32 %v5003, %v5015
    %v5017 = vpop.f32.mrf.mxu0
    %5018 = vdwg.mxu0
    %5019 = vmatpush.bf16.msra.mxu0 %v4898
    %5020 = vmatpush.bf16.msra.mxu0 %v4897
    %5021 = vmatpush.bf16.msra.mxu0 %v4896
    %5022 = vmatpush.bf16.msra.mxu0 %v4895
    %5023 = vmatpush.bf16.msra.mxu0 %v4894
    %5024 = vmatpush.bf16.msra.mxu0 %v4893
    %5025 = vmatpush.bf16.msra.mxu0 %v4892
    %5026 = vmatpush.bf16.msra.mxu0 %v4891
    %5027 = vmatmul.bf16.gmra.mxu0 %v4537
    %v5028 = vpop.f32.mrf.mxu0
    %v5029 = vadd.f32 %v5016, %v5028
    %v5030 = vpop.f32.mrf.mxu0
    %5031 = vdwg.mxu0
    %5032 = vmatpush.bf16.msra.mxu0 0
    %5033 = vmatpush.bf16.msra.mxu0 0
    %5034 = vmatpush.bf16.msra.mxu0 0
    %5035 = vmatpush.bf16.msra.mxu0 0
    %5036 = vmatpush.bf16.msra.mxu0 0
    %5037 = vmatpush.bf16.msra.mxu0 0
    %5038 = vmatpush.bf16.msra.mxu0 %v4900
    %5039 = vmatpush.bf16.msra.mxu0 %v4899
    %5040 = vmatmul.bf16.gmra.mxu0 %v4952
    %v5041 = vpop.f32.mrf.mxu0
    %v5042 = vadd.f32 %v5029, %v5041
    %v5043 = vpop.f32.mrf.mxu0
    %5044 = vdwg.mxu0
    %v5045 = vmax.f32 %v5042, 0.0
    %v5046 = vpack.c.bf16 %v5045, %v5045
    %v5047 = vld [vmem:[%s7] sm:$0xf]
    %v5048 = vld [vmem:[%s7 + $0x4] sm:$0xf]
    %v5049 = vld [vmem:[%s7 + $0x8] sm:$0xf]
    %v5050 = vld [vmem:[%s7 + $0xc] sm:$0xf]
    %v5051 = vld [vmem:[%s7 + $0x10] sm:$0xf]
    %v5052 = vld [vmem:[%s7 + $0x14] sm:$0xf]
    %v5053 = vld [vmem:[%s7 + $0x18] sm:$0xf]
    %v5054 = vld [vmem:[%s7 + $0x1c] sm:$0xf]
    %v5055 = vld [vmem:[%s7 + $0x20] sm:$0xf]
    %v5056 = vld [vmem:[%s7 + $0x24] sm:$0xf]
    %v5057 = vld [vmem:[%s7 + $0x28] sm:$0xf]
    %v5058 = vld [vmem:[%s7 + $0x2c] sm:$0xf]
    %v5059 = vld [vmem:[%s7 + $0x30] sm:$0xf]
    %v5060 = vld [vmem:[%s7 + $0x34] sm:$0xf]
    %v5061 = vld [vmem:[%s7 + $0x38] sm:$0xf]
    %v5062 = vld [vmem:[%s7 + $0x3c] sm:$0xf]
    %v5063 = vld [vmem:[%s8] sm:$0x1]
    %v5065 = vperm.slane %v5063, 0
    %v5083 = vunpack.c.l.b16 %v5047
    %v5084 = vunpack.c.l.b16 %v5048
    %v5085 = vunpack.c.l.b16 %v5049
    %v5086 = vunpack.c.l.b16 %v5050
    %v5087 = vunpack.c.l.b16 %v5051
    %v5088 = vunpack.c.l.b16 %v5052
    %v5089 = vunpack.c.l.b16 %v5053
    %v5090 = vunpack.c.l.b16 %v5054
    %v5091 = vunpack.c.l.b16 %v5055
    %v5092 = vunpack.c.l.b16 %v5056
    %v5093 = vunpack.c.l.b16 %v5057
    %v5094 = vunpack.c.l.b16 %v5058
    %v5095 = vunpack.c.l.b16 %v5059
    %v5096 = vunpack.c.l.b16 %v5060
    %v5097 = vunpack.c.l.b16 %v5061
    %v5098 = vunpack.c.l.b16 %v5062
    %v5099 = vpack.c.b16 %v5084, %v5083
    %v5100 = vpack.c.b16 %v5086, %v5085
    %v5101 = vpack.c.b16 %v5088, %v5087
    %v5102 = vpack.c.b16 %v5090, %v5089
    %v5103 = vpack.c.b16 %v5092, %v5091
    %v5104 = vpack.c.b16 %v5094, %v5093
    %v5105 = vpack.c.b16 %v5096, %v5095
    %v5106 = vpack.c.b16 %v5098, %v5097
    %5115 = vmatpush.bf16.msra.mxu0 %v5106
    %5116 = vmatpush.bf16.msra.mxu0 %v5105
    %5117 = vmatpush.bf16.msra.mxu0 %v5104
    %5118 = vmatpush.bf16.msra.mxu0 %v5103
    %5119 = vmatpush.bf16.msra.mxu0 %v5102
    %5120 = vmatpush.bf16.msra.mxu0 %v5101
    %5121 = vmatpush.bf16.msra.mxu0 %v5100
    %5122 = vmatpush.bf16.msra.mxu0 %v5099
    %5123 = vmatmul.bf16.gmra.mxu0 %v5046
    %v5124 = vpop.f32.mrf.mxu0
    %v5125 = vadd.f32 %v5065, %v5124
    %v5126 = vpop.f32.mrf.mxu0
    %5127 = vdwg.mxu0
    %v5128 = vmax.f32 %v5125, 0.0
    %v5129 = vpack.c.bf16 %v5128, %v5128
    %v5130 = vld [vmem:[%s9] sm:$0xf]
    %v5131 = vld [vmem:[%s9 + $0x4] sm:$0xf]
    %v5132 = vld [vmem:[%s9 + $0x8] sm:$0xf]
    %v5133 = vld [vmem:[%s9 + $0xc] sm:$0xf]
    %v5134 = vld [vmem:[%s9 + $0x10] sm:$0xf]
    %v5135 = vld [vmem:[%s9 + $0x14] sm:$0xf]
    %v5136 = vld [vmem:[%s9 + $0x18] sm:$0xf]
    %v5137 = vld [vmem:[%s9 + $0x1c] sm:$0xf]
    %v5138 = vld [vmem:[%s9 + $0x20] sm:$0xf]
    %v5139 = vld [vmem:[%s9 + $0x24] sm:$0xf]
    %v5140 = vld [vmem:[%s9 + $0x28] sm:$0xf]
    %v5141 = vld [vmem:[%s9 + $0x2c] sm:$0xf]
    %v5142 = vld [vmem:[%s9 + $0x30] sm:$0xf]
    %v5143 = vld [vmem:[%s9 + $0x34] sm:$0xf]
    %v5144 = vld [vmem:[%s9 + $0x38] sm:$0xf]
    %v5145 = vld [vmem:[%s9 + $0x3c] sm:$0xf]
    %v5146 = vld [vmem:[%s10] sm:$0x1]
    %v5148 = vperm.slane %v5146, 0
    %v5166 = vunpack.c.l.b16 %v5130
    %v5167 = vunpack.c.l.b16 %v5131
    %v5168 = vunpack.c.l.b16 %v5132
    %v5169 = vunpack.c.l.b16 %v5133
    %v5170 = vunpack.c.l.b16 %v5134
    %v5171 = vunpack.c.l.b16 %v5135
    %v5172 = vunpack.c.l.b16 %v5136
    %v5173 = vunpack.c.l.b16 %v5137
    %v5174 = vunpack.c.l.b16 %v5138
    %v5175 = vunpack.c.l.b16 %v5139
    %v5176 = vunpack.c.l.b16 %v5140
    %v5177 = vunpack.c.l.b16 %v5141
    %v5178 = vunpack.c.l.b16 %v5142
    %v5179 = vunpack.c.l.b16 %v5143
    %v5180 = vunpack.c.l.b16 %v5144
    %v5181 = vunpack.c.l.b16 %v5145
    %v5182 = vpack.c.b16 %v5167, %v5166
    %v5183 = vpack.c.b16 %v5169, %v5168
    %v5184 = vpack.c.b16 %v5171, %v5170
    %v5185 = vpack.c.b16 %v5173, %v5172
    %v5186 = vpack.c.b16 %v5175, %v5174
    %v5187 = vpack.c.b16 %v5177, %v5176
    %v5188 = vpack.c.b16 %v5179, %v5178
    %v5189 = vpack.c.b16 %v5181, %v5180
    %5198 = vmatpush.bf16.msra.mxu0 %v5189
    %5199 = vmatpush.bf16.msra.mxu0 %v5188
    %5200 = vmatpush.bf16.msra.mxu0 %v5187
    %5201 = vmatpush.bf16.msra.mxu0 %v5186
    %5202 = vmatpush.bf16.msra.mxu0 %v5185
    %5203 = vmatpush.bf16.msra.mxu0 %v5184
    %5204 = vmatpush.bf16.msra.mxu0 %v5183
    %5205 = vmatpush.bf16.msra.mxu0 %v5182
    %5206 = vmatmul.bf16.gmra.mxu0 %v5129
    %v5207 = vpop.f32.mrf.mxu0
    %v5208 = vadd.f32 %v5148, %v5207
    %v5209 = vpop.f32.mrf.mxu0
    %5210 = vdwg.mxu0
    %5211 = vst [vmem:[#allocation2] sm:$0x3] %v5208
    // Predicated region
    $region46: #{net_forward.1} parent=1 // pred_check
      _
    $region47: #{net_forward.1} parent=1 // pred_check_branch
      %5213 = sbr.rel (0) target = $region49
    $region48: #{net_forward.1} parent=1 // pred_region
      %5215 = vsyncadd [#allocation3], 0
      %s5217 = sshll.u32 [#allocation2], 4
      %s5218 = int_to_ptr.vmem [resolvable:$true] %s5217
      %s5219 = sshll.u32 %s11, 4
      %s5220 = int_to_ptr.hbm [resolvable:$true] %s5219
      %5222 = dma.vmem_to_hbm [thread:$0]  %s5218, 32, %s5220, [#allocation3]
    $region49: #{net_forward.1} parent=1 // pred_fallthru
      _
    // Predicated region
    $region50: #{net_forward.1} parent=1 // pred_check
      _
    $region51: #{net_forward.1} parent=1 // pred_check_branch
      %5224 = sbr.rel (0) target = $region53
    $region52: #{net_forward.1} parent=1 // pred_region
      %5226 = dma.done [#allocation3], 32
    $region53: #{net_forward.1} parent=1 // pred_fallthru
      _
    %5227 = vsyncpa [#allocation3], 1

</llo_original>
